<compile_context>
chip_gen: v7x
topology: tpu7x:2x2x1
jax: 0.10.0
libtpu: 0.0.40
codegen_flags: <defaults>
</compile_context>

<pallas_src>
import functools

import jax
import jax.numpy as jnp
from jax import lax
from jax.experimental import pallas as pl
from jax.experimental.pallas import tpu as pltpu

GP = 128           # per-gate lane block (r/z/n each padded to 128 lanes)
G3 = 3 * GP        # packed gate width
HP = 128           # padded (lane-dense) hidden width
VP = 128           # padded output-vocab width
_NEG = -1e30       # effectively -inf for padded vocab lanes


# ----------------------------- fused kernel ---------------------------------

def _seq2seq_kernel(gx_enc_ref, tok0_ref,
                    wh_enc_ref, bh_enc_ref,
                    gx_dec_ref, wh_dec_ref, bh_dec_ref,
                    wo_ref, bo_ref,
                    out_ref,
                    *, enc_len, dec_len):
    """Whole Seq2Seq forward in one invocation (grid=(1,)).

    gx_enc_ref : (T, N, 3*128) precomputed encoder input-side gate pre-acts
    tok0_ref   : (N, 1) int32  initial decoder token (source[:, 0])
    wh_*_ref   : (128, 3*128)  packed hidden-side gate weights (r|z|n blocks)
    bh_*_ref   : (1, 3*128)    packed hidden-side gate biases
    gx_dec_ref : (V, 3*128)    decoder per-token gate table (emb @ W_i + b_i)
    wo_ref     : (128, 128)    padded output projection
    bo_ref     : (1, 128)      padded output bias (-1e30 on padded lanes)
    out_ref    : (N, dec_len*128) per-step log-probs, lane-concatenated
    """
    N = tok0_ref.shape[0]
    vocab_dec = gx_dec_ref.shape[0]

    def gru_step(h, gx, wh, bh):
        # PyTorch nn.GRU semantics: n = tanh(x_n + r * (W_hn h + b_hn)).
        # Single packed matmul for all three hidden-side gates.
        gh = jnp.dot(h, wh, preferred_element_type=jnp.float32) + bh   # (N, 3*128)
        rz = jax.nn.sigmoid(gx[:, :2 * GP] + gh[:, :2 * GP])
        r = rz[:, :GP]
        z = rz[:, GP:]
        n = jnp.tanh(gx[:, 2 * GP:] + r * gh[:, 2 * GP:])
        return (1.0 - z) * n + z * h

    # -------- encoder: statically unrolled recurrence, h stays on-chip ------
    wh_e = wh_enc_ref[...]
    bh_e = bh_enc_ref[...]
    h = jnp.zeros((N, HP), jnp.float32)          # padded lanes stay exactly 0
    for t in range(enc_len):
        h = gru_step(h, gx_enc_ref[t], wh_e, bh_e)

    # -------- greedy decoder: statically unrolled, all state on-chip --------
    gx_tab = gx_dec_ref[...]
    wh_d = wh_dec_ref[...]
    bh_d = bh_dec_ref[...]
    wo = wo_ref[...]
    bo = bo_ref[...]

    tok = tok0_ref[...]                                          # (N, 1) int32
    vocab_iota = lax.broadcasted_iota(jnp.int32, (N, vocab_dec), 1)
    lane_iota = lax.broadcasted_iota(jnp.int32, (N, VP), 1)

    logps = []
    for _ in range(dec_len):
        # Embedding + input-side projections fused into one table lookup
        # (one-hot matmul: tiny vocab, keeps the serial path to 3 MXU ops).
        onehot = (vocab_iota == tok).astype(jnp.float32)          # (N, V)
        gx = jnp.dot(onehot, gx_tab, preferred_element_type=jnp.float32)
        h = gru_step(h, gx, wh_d, bh_d)

        # Padded output projection + stable log_softmax (padded lanes ~ -1e30).
        logits = jnp.dot(h, wo, preferred_element_type=jnp.float32) + bo
        m = jnp.max(logits, axis=-1, keepdims=True)
        lse = jnp.log(jnp.sum(jnp.exp(logits - m), axis=-1, keepdims=True)) + m
        logps.append(logits - lse)

        # Greedy next token = first index attaining the max (torch.argmax).
        tok = jnp.min(jnp.where(logits == m, lane_iota, VP),
                      axis=-1, keepdims=True)

    # Single large lane-dense store of the whole decode slab.
    out_ref[...] = jnp.concatenate(logps, axis=-1)


def _seq2seq_pallas(packed, gx_enc, tok0, out_seq_len):
    T, N, _ = gx_enc.shape

    def full(shape):
        return pl.BlockSpec(shape, lambda i: (0,) * len(shape))

    kernel = functools.partial(_seq2seq_kernel, enc_len=T, dec_len=out_seq_len)
    return pl.pallas_call(
        kernel,
        grid=(1,),
        in_specs=[full(gx_enc.shape),                       # encoder gx stream
                  full((N, 1)),                             # tok0
                  full((HP, G3)), full((1, G3)),            # enc W_h / b_h
                  full(packed["dec_gx_table"].shape),       # dec gate table
                  full((HP, G3)), full((1, G3)),            # dec W_h / b_h
                  full((HP, VP)), full((1, VP))],           # W_o / b_o
        out_specs=pl.BlockSpec((N, out_seq_len * VP), lambda i: (0, 0)),
        out_shape=jax.ShapeDtypeStruct((N, out_seq_len * VP), jnp.float32),
        compiler_params=pltpu.CompilerParams(
            dimension_semantics=("arbitrary",),
            vmem_limit_bytes=32 * 1024 * 1024),
    )(gx_enc, tok0,
      packed["enc_wh"], packed["enc_bh"],
      packed["dec_gx_table"], packed["dec_wh"], packed["dec_bh"],
      packed["dec_wo"], packed["dec_bo"])


# --------------------------- params & packing -------------------------------

def make_params(key, vocab_size, emb_size, hidden_size, output_size):
    """Raw parameters mirroring the PyTorch Embedding/GRU/Linear modules."""
    E, H = emb_size, hidden_size
    shapes = {
        "enc_emb": (vocab_size, E),
        "enc_w_ir": (E, H), "enc_w_iz": (E, H), "enc_w_in": (E, H),
        "enc_w_hr": (H, H), "enc_w_hz": (H, H), "enc_w_hn": (H, H),
        "enc_b_ir": (1, H), "enc_b_iz": (1, H), "enc_b_in": (1, H),
        "enc_b_hr": (1, H), "enc_b_hz": (1, H), "enc_b_hn": (1, H),
        "dec_emb": (output_size, E),
        "dec_w_ir": (E, H), "dec_w_iz": (E, H), "dec_w_in": (E, H),
        "dec_w_hr": (H, H), "dec_w_hz": (H, H), "dec_w_hn": (H, H),
        "dec_b_ir": (1, H), "dec_b_iz": (1, H), "dec_b_in": (1, H),
        "dec_b_hr": (1, H), "dec_b_hz": (1, H), "dec_b_hn": (1, H),
        "dec_wo": (H, output_size), "dec_bo": (1, output_size),
    }
    keys = jax.random.split(key, len(shapes))
    return {name: 0.1 * jax.random.normal(k, shape, jnp.float32)
            for (name, shape), k in zip(shapes.items(), keys)}


def pack_params(p):
    """One-time packing/fusion (hoisted out of the jitted forward)."""
    H = p["enc_w_hr"].shape[0]
    E = p["enc_emb"].shape[1]
    V_out = p["dec_wo"].shape[1]

    def pack_gate_cols(w_r, w_z, w_n, rows):
        w = jnp.zeros((rows, G3), jnp.float32)
        return (w.at[:, 0:H].set(w_r)
                 .at[:, GP:GP + H].set(w_z)
                 .at[:, 2 * GP:2 * GP + H].set(w_n))

    def pack_gate_bias(b_r, b_z, b_n):
        b = jnp.zeros((1, G3), jnp.float32)
        return (b.at[:, 0:H].set(b_r)
                 .at[:, GP:GP + H].set(b_z)
                 .at[:, 2 * GP:2 * GP + H].set(b_n))

    # Encoder: fuse embedding + input-side projections + bias into a table.
    wi_e = pack_gate_cols(p["enc_w_ir"], p["enc_w_iz"], p["enc_w_in"], E)
    bi_e = pack_gate_bias(p["enc_b_ir"], p["enc_b_iz"], p["enc_b_in"])
    enc_gx_table = p["enc_emb"] @ wi_e + bi_e                     # (V_enc, 3*128)

    wh_e = jnp.zeros((HP, G3), jnp.float32).at[:H, :].set(
        pack_gate_cols(p["enc_w_hr"], p["enc_w_hz"], p["enc_w_hn"], H))
    bh_e = pack_gate_bias(p["enc_b_hr"], p["enc_b_hz"], p["enc_b_hn"])

    # Decoder: same fusion for embedding + input-side projections.
    wi_d = pack_gate_cols(p["dec_w_ir"], p["dec_w_iz"], p["dec_w_in"], E)
    bi_d = pack_gate_bias(p["dec_b_ir"], p["dec_b_iz"], p["dec_b_in"])
    dec_gx_table = p["dec_emb"] @ wi_d + bi_d                     # (V_dec, 3*128)

    wh_d = jnp.zeros((HP, G3), jnp.float32).at[:H, :].set(
        pack_gate_cols(p["dec_w_hr"], p["dec_w_hz"], p["dec_w_hn"], H))
    bh_d = pack_gate_bias(p["dec_b_hr"], p["dec_b_hz"], p["dec_b_hn"])

    # Padded, lane-dense output projection; padded lanes get a -1e30 bias so
    # they never affect max / logsumexp / argmax.
    wo = jnp.zeros((HP, VP), jnp.float32).at[:H, :V_out].set(p["dec_wo"])
    bo = jnp.full((1, VP), _NEG, jnp.float32).at[:, :V_out].set(p["dec_bo"])

    return {"enc_gx_table": enc_gx_table, "enc_wh": wh_e, "enc_bh": bh_e,
            "dec_gx_table": dec_gx_table, "dec_wh": wh_d, "dec_bh": bh_d,
            "dec_wo": wo, "dec_bo": bo}


# ------------------------------ forward pass --------------------------------

@functools.partial(jax.jit, static_argnames=("out_seq_len", "attention"))
def seq2seq_forward(packed, source, out_seq_len=None, attention=False):
    """Mirrors Seq2Seq.forward: greedy decode; outputs[n, i, :] = log-probs."""
    N, T = source.shape
    if out_seq_len is None:
        out_seq_len = T
    # TODO(synk): attention=True decoder path is unspecified in the reference
    # module (decoder internals not provided); only attention=False is implemented.
    del attention

    V_out = packed["dec_gx_table"].shape[0]
    # Only XLA glue around the single fused kernel: one gather of the
    # precomputed per-token encoder gate table -> (T, N, 3*128) stream.
    gx_enc = jnp.take(packed["enc_gx_table"], source.T.astype(jnp.int32), axis=0)
    tok0 = source[:, 0:1].astype(jnp.int32)

    out_flat = _seq2seq_pallas(packed, gx_enc, tok0, out_seq_len)
    # (N, S*128) -> (N, S, 128) is a free reshape; slice off padded vocab lanes.
    return out_flat.reshape(N, out_seq_len, VP)[:, :, :V_out]


# --------------------------- pure-JAX reference -----------------------------

def _reference_forward(p, source, out_seq_len):
    """Non-Pallas mirror of the PyTorch module, for correctness checking."""
    N, T = source.shape
    H = p["enc_w_hr"].shape[0]

    def gru_cell(x, h, pre):
        r = jax.nn.sigmoid(x @ p[pre + "w_ir"] + p[pre + "b_ir"]
                           + h @ p[pre + "w_hr"] + p[pre + "b_hr"])
        z = jax.nn.sigmoid(x @ p[pre + "w_iz"] + p[pre + "b_iz"]
                           + h @ p[pre + "w_hz"] + p[pre + "b_hz"])
        n = jnp.tanh(x @ p[pre + "w_in"] + p[pre + "b_in"]
                     + r * (h @ p[pre + "w_hn"] + p[pre + "b_hn"]))
        return (1.0 - z) * n + z * h

    h = jnp.zeros((N, H), jnp.float32)
    for t in range(T):
        h = gru_cell(p["enc_emb"][source[:, t]], h, "enc_")

    tok = source[:, 0]
    outs = []
    for _ in range(out_seq_len):
        h = gru_cell(p["dec_emb"][tok], h, "dec_")
        logits = h @ p["dec_wo"] + p["dec_bo"]
        outs.append(jax.nn.log_softmax(logits, axis=-1))
        tok = jnp.argmax(logits, axis=-1)
    return jnp.stack(outs, axis=1)                 # (N, out_seq_len, V)


# ----------------------------------- main ------------------------------------

if __name__ == "__main__":
    key = jax.random.PRNGKey(0)
    N, T = 2, 8
    emb_size = 32
    hidden_size = 32
    vocab_size = 16
    output_size = 16   # == vocab so source[:, 0] is a valid decoder token

    pkey, skey = jax.random.split(key)
    params = make_params(pkey, vocab_size, emb_size, hidden_size, output_size)
    packed = pack_params(params)   # one-time weight packing / fusion
    source = jax.random.randint(skey, (N, T), 0, vocab_size, dtype=jnp.int32)

    out = seq2seq_forward(packed, source, out_seq_len=T, attention=False)
    out = jax.block_until_ready(out)

    assert out.shape == (N, T, output_size) and out.dtype == jnp.float32
    assert bool(jnp.isfinite(out).all())
    # log_softmax rows must exponentiate to ~1
    assert bool(jnp.allclose(jnp.sum(jnp.exp(out), axis=-1), 1.0, atol=1e-3))

    ref = _reference_forward(params, source, T)
    assert bool(jnp.allclose(out, ref, atol=1e-3, rtol=1e-3))

    print("KERNEL_OK")
</pallas_src>

<mosaic_0001>
module attributes {stable_mosaic.version = 11 : i64} {
  func.func @_seq2seq_kernel(%arg0: i32, %arg1: memref<8x2x384xf32, #tpu.memory_space<vmem>>, %arg2: memref<2x1xi32, #tpu.memory_space<vmem>>, %arg3: memref<128x384xf32, #tpu.memory_space<vmem>>, %arg4: memref<1x384xf32, #tpu.memory_space<vmem>>, %arg5: memref<16x384xf32, #tpu.memory_space<vmem>>, %arg6: memref<128x384xf32, #tpu.memory_space<vmem>>, %arg7: memref<1x384xf32, #tpu.memory_space<vmem>>, %arg8: memref<128x128xf32, #tpu.memory_space<vmem>>, %arg9: memref<1x128xf32, #tpu.memory_space<vmem>>, %arg10: memref<2x1024xf32, #tpu.memory_space<vmem>>) attributes {dimension_semantics = [#tpu.dimension_semantics<arbitrary>], iteration_bounds = array<i64: 1>, scalar_prefetch = 0 : i64, scratch_operands = 0 : i64, tpu.core_type = #tpu.core_type<tc>, window_params = [{pipeline_mode = #tpu.pipeline_mode<synchronous>, transform_indices = @transform_0, window_bounds = array<i64: 8, 2, 384>}, {pipeline_mode = #tpu.pipeline_mode<synchronous>, transform_indices = @transform_1, window_bounds = array<i64: 2, 1>}, {pipeline_mode = #tpu.pipeline_mode<synchronous>, transform_indices = @transform_2, window_bounds = array<i64: 128, 384>}, {pipeline_mode = #tpu.pipeline_mode<synchronous>, transform_indices = @transform_3, window_bounds = array<i64: 1, 384>}, {pipeline_mode = #tpu.pipeline_mode<synchronous>, transform_indices = @transform_4, window_bounds = array<i64: 16, 384>}, {pipeline_mode = #tpu.pipeline_mode<synchronous>, transform_indices = @transform_5, window_bounds = array<i64: 128, 384>}, {pipeline_mode = #tpu.pipeline_mode<synchronous>, transform_indices = @transform_6, window_bounds = array<i64: 1, 384>}, {pipeline_mode = #tpu.pipeline_mode<synchronous>, transform_indices = @transform_7, window_bounds = array<i64: 128, 128>}, {pipeline_mode = #tpu.pipeline_mode<synchronous>, transform_indices = @transform_8, window_bounds = array<i64: 1, 128>}, {pipeline_mode = #tpu.pipeline_mode<synchronous>, transform_indices = @transform_9, window_bounds = array<i64: 2, 1024>}]} {
    %c0 = arith.constant 0 : index
    %c0_0 = arith.constant 0 : index
    %0 = vector.load %arg3[%c0, %c0_0] : memref<128x384xf32, #tpu.memory_space<vmem>>, vector<128x384xf32>
    %c0_1 = arith.constant 0 : index
    %c0_2 = arith.constant 0 : index
    %1 = vector.load %arg4[%c0_1, %c0_2] : memref<1x384xf32, #tpu.memory_space<vmem>>, vector<1x384xf32>
    %cst = arith.constant 0.000000e+00 : f32
    %2 = vector.broadcast %cst : f32 to vector<2x128xf32>
    %c0_3 = arith.constant 0 : index
    %c0_4 = arith.constant 0 : index
    %c0_5 = arith.constant 0 : index
    %3 = vector.load %arg1[%c0_3, %c0_4, %c0_5] : memref<8x2x384xf32, #tpu.memory_space<vmem>>, vector<1x2x384xf32>
    %4 = vector.shape_cast %3 : vector<1x2x384xf32> to vector<2x384xf32>
    %cst_6 = arith.constant dense<0.000000e+00> : vector<2x384xf32>
    %5 = tpu.matmul %2, %0, %cst_6 {dimension_numbers = #tpu.dot_dimension_numbers<[1], [0], [0], [1], [0, 0, 1, 1], [], []>} : vector<2x128xf32>, vector<128x384xf32>, vector<2x384xf32> -> vector<2x384xf32>
    %6 = vector.broadcast %1 : vector<1x384xf32> to vector<2x384xf32>
    %7 = arith.addf %5, %6 : vector<2x384xf32>
    %8 = vector.extract_strided_slice %4 {offsets = [0, 0], sizes = [2, 256], strides = [1, 1]} : vector<2x384xf32> to vector<2x256xf32>
    %9 = vector.extract_strided_slice %7 {offsets = [0, 0], sizes = [2, 256], strides = [1, 1]} : vector<2x384xf32> to vector<2x256xf32>
    %10 = arith.addf %8, %9 : vector<2x256xf32>
    %11 = arith.negf %10 : vector<2x256xf32>
    %12 = math.exp %11 : vector<2x256xf32>
    %cst_7 = arith.constant 1.000000e+00 : f32
    %13 = vector.broadcast %cst_7 : f32 to vector<2x256xf32>
    %14 = arith.addf %13, %12 : vector<2x256xf32>
    %15 = arith.divf %13, %14 : vector<2x256xf32>
    %16 = vector.extract_strided_slice %15 {offsets = [0, 0], sizes = [2, 128], strides = [1, 1]} : vector<2x256xf32> to vector<2x128xf32>
    %17 = vector.extract_strided_slice %15 {offsets = [0, 128], sizes = [2, 128], strides = [1, 1]} : vector<2x256xf32> to vector<2x128xf32>
    %18 = vector.extract_strided_slice %4 {offsets = [0, 256], sizes = [2, 128], strides = [1, 1]} : vector<2x384xf32> to vector<2x128xf32>
    %19 = vector.extract_strided_slice %7 {offsets = [0, 256], sizes = [2, 128], strides = [1, 1]} : vector<2x384xf32> to vector<2x128xf32>
    %20 = arith.mulf %16, %19 : vector<2x128xf32>
    %21 = arith.addf %18, %20 : vector<2x128xf32>
    %22 = math.tanh %21 : vector<2x128xf32>
    %cst_8 = arith.constant 1.000000e+00 : f32
    %23 = vector.broadcast %cst_8 : f32 to vector<2x128xf32>
    %24 = arith.subf %23, %17 : vector<2x128xf32>
    %25 = arith.mulf %24, %22 : vector<2x128xf32>
    %26 = arith.mulf %17, %2 : vector<2x128xf32>
    %27 = arith.addf %25, %26 : vector<2x128xf32>
    %c1 = arith.constant 1 : index
    %c0_9 = arith.constant 0 : index
    %c0_10 = arith.constant 0 : index
    %28 = vector.load %arg1[%c1, %c0_9, %c0_10] : memref<8x2x384xf32, #tpu.memory_space<vmem>>, vector<1x2x384xf32>
    %29 = vector.shape_cast %28 : vector<1x2x384xf32> to vector<2x384xf32>
    %cst_11 = arith.constant dense<0.000000e+00> : vector<2x384xf32>
    %30 = tpu.matmul %27, %0, %cst_11 {dimension_numbers = #tpu.dot_dimension_numbers<[1], [0], [0], [1], [0, 0, 1, 1], [], []>} : vector<2x128xf32>, vector<128x384xf32>, vector<2x384xf32> -> vector<2x384xf32>
    %31 = vector.broadcast %1 : vector<1x384xf32> to vector<2x384xf32>
    %32 = arith.addf %30, %31 : vector<2x384xf32>
    %33 = vector.extract_strided_slice %29 {offsets = [0, 0], sizes = [2, 256], strides = [1, 1]} : vector<2x384xf32> to vector<2x256xf32>
    %34 = vector.extract_strided_slice %32 {offsets = [0, 0], sizes = [2, 256], strides = [1, 1]} : vector<2x384xf32> to vector<2x256xf32>
    %35 = arith.addf %33, %34 : vector<2x256xf32>
    %36 = arith.negf %35 : vector<2x256xf32>
    %37 = math.exp %36 : vector<2x256xf32>
    %cst_12 = arith.constant 1.000000e+00 : f32
    %38 = vector.broadcast %cst_12 : f32 to vector<2x256xf32>
    %39 = arith.addf %38, %37 : vector<2x256xf32>
    %40 = arith.divf %38, %39 : vector<2x256xf32>
    %41 = vector.extract_strided_slice %40 {offsets = [0, 0], sizes = [2, 128], strides = [1, 1]} : vector<2x256xf32> to vector<2x128xf32>
    %42 = vector.extract_strided_slice %40 {offsets = [0, 128], sizes = [2, 128], strides = [1, 1]} : vector<2x256xf32> to vector<2x128xf32>
    %43 = vector.extract_strided_slice %29 {offsets = [0, 256], sizes = [2, 128], strides = [1, 1]} : vector<2x384xf32> to vector<2x128xf32>
    %44 = vector.extract_strided_slice %32 {offsets = [0, 256], sizes = [2, 128], strides = [1, 1]} : vector<2x384xf32> to vector<2x128xf32>
    %45 = arith.mulf %41, %44 : vector<2x128xf32>
    %46 = arith.addf %43, %45 : vector<2x128xf32>
    %47 = math.tanh %46 : vector<2x128xf32>
    %cst_13 = arith.constant 1.000000e+00 : f32
    %48 = vector.broadcast %cst_13 : f32 to vector<2x128xf32>
    %49 = arith.subf %48, %42 : vector<2x128xf32>
    %50 = arith.mulf %49, %47 : vector<2x128xf32>
    %51 = arith.mulf %42, %27 : vector<2x128xf32>
    %52 = arith.addf %50, %51 : vector<2x128xf32>
    %c2 = arith.constant 2 : index
    %c0_14 = arith.constant 0 : index
    %c0_15 = arith.constant 0 : index
    %53 = vector.load %arg1[%c2, %c0_14, %c0_15] : memref<8x2x384xf32, #tpu.memory_space<vmem>>, vector<1x2x384xf32>
    %54 = vector.shape_cast %53 : vector<1x2x384xf32> to vector<2x384xf32>
    %cst_16 = arith.constant dense<0.000000e+00> : vector<2x384xf32>
    %55 = tpu.matmul %52, %0, %cst_16 {dimension_numbers = #tpu.dot_dimension_numbers<[1], [0], [0], [1], [0, 0, 1, 1], [], []>} : vector<2x128xf32>, vector<128x384xf32>, vector<2x384xf32> -> vector<2x384xf32>
    %56 = vector.broadcast %1 : vector<1x384xf32> to vector<2x384xf32>
    %57 = arith.addf %55, %56 : vector<2x384xf32>
    %58 = vector.extract_strided_slice %54 {offsets = [0, 0], sizes = [2, 256], strides = [1, 1]} : vector<2x384xf32> to vector<2x256xf32>
    %59 = vector.extract_strided_slice %57 {offsets = [0, 0], sizes = [2, 256], strides = [1, 1]} : vector<2x384xf32> to vector<2x256xf32>
    %60 = arith.addf %58, %59 : vector<2x256xf32>
    %61 = arith.negf %60 : vector<2x256xf32>
    %62 = math.exp %61 : vector<2x256xf32>
    %cst_17 = arith.constant 1.000000e+00 : f32
    %63 = vector.broadcast %cst_17 : f32 to vector<2x256xf32>
    %64 = arith.addf %63, %62 : vector<2x256xf32>
    %65 = arith.divf %63, %64 : vector<2x256xf32>
    %66 = vector.extract_strided_slice %65 {offsets = [0, 0], sizes = [2, 128], strides = [1, 1]} : vector<2x256xf32> to vector<2x128xf32>
    %67 = vector.extract_strided_slice %65 {offsets = [0, 128], sizes = [2, 128], strides = [1, 1]} : vector<2x256xf32> to vector<2x128xf32>
    %68 = vector.extract_strided_slice %54 {offsets = [0, 256], sizes = [2, 128], strides = [1, 1]} : vector<2x384xf32> to vector<2x128xf32>
    %69 = vector.extract_strided_slice %57 {offsets = [0, 256], sizes = [2, 128], strides = [1, 1]} : vector<2x384xf32> to vector<2x128xf32>
    %70 = arith.mulf %66, %69 : vector<2x128xf32>
    %71 = arith.addf %68, %70 : vector<2x128xf32>
    %72 = math.tanh %71 : vector<2x128xf32>
    %cst_18 = arith.constant 1.000000e+00 : f32
    %73 = vector.broadcast %cst_18 : f32 to vector<2x128xf32>
    %74 = arith.subf %73, %67 : vector<2x128xf32>
    %75 = arith.mulf %74, %72 : vector<2x128xf32>
    %76 = arith.mulf %67, %52 : vector<2x128xf32>
    %77 = arith.addf %75, %76 : vector<2x128xf32>
    %c3 = arith.constant 3 : index
    %c0_19 = arith.constant 0 : index
    %c0_20 = arith.constant 0 : index
    %78 = vector.load %arg1[%c3, %c0_19, %c0_20] : memref<8x2x384xf32, #tpu.memory_space<vmem>>, vector<1x2x384xf32>
    %79 = vector.shape_cast %78 : vector<1x2x384xf32> to vector<2x384xf32>
    %cst_21 = arith.constant dense<0.000000e+00> : vector<2x384xf32>
    %80 = tpu.matmul %77, %0, %cst_21 {dimension_numbers = #tpu.dot_dimension_numbers<[1], [0], [0], [1], [0, 0, 1, 1], [], []>} : vector<2x128xf32>, vector<128x384xf32>, vector<2x384xf32> -> vector<2x384xf32>
    %81 = vector.broadcast %1 : vector<1x384xf32> to vector<2x384xf32>
    %82 = arith.addf %80, %81 : vector<2x384xf32>
    %83 = vector.extract_strided_slice %79 {offsets = [0, 0], sizes = [2, 256], strides = [1, 1]} : vector<2x384xf32> to vector<2x256xf32>
    %84 = vector.extract_strided_slice %82 {offsets = [0, 0], sizes = [2, 256], strides = [1, 1]} : vector<2x384xf32> to vector<2x256xf32>
    %85 = arith.addf %83, %84 : vector<2x256xf32>
    %86 = arith.negf %85 : vector<2x256xf32>
    %87 = math.exp %86 : vector<2x256xf32>
    %cst_22 = arith.constant 1.000000e+00 : f32
    %88 = vector.broadcast %cst_22 : f32 to vector<2x256xf32>
    %89 = arith.addf %88, %87 : vector<2x256xf32>
    %90 = arith.divf %88, %89 : vector<2x256xf32>
    %91 = vector.extract_strided_slice %90 {offsets = [0, 0], sizes = [2, 128], strides = [1, 1]} : vector<2x256xf32> to vector<2x128xf32>
    %92 = vector.extract_strided_slice %90 {offsets = [0, 128], sizes = [2, 128], strides = [1, 1]} : vector<2x256xf32> to vector<2x128xf32>
    %93 = vector.extract_strided_slice %79 {offsets = [0, 256], sizes = [2, 128], strides = [1, 1]} : vector<2x384xf32> to vector<2x128xf32>
    %94 = vector.extract_strided_slice %82 {offsets = [0, 256], sizes = [2, 128], strides = [1, 1]} : vector<2x384xf32> to vector<2x128xf32>
    %95 = arith.mulf %91, %94 : vector<2x128xf32>
    %96 = arith.addf %93, %95 : vector<2x128xf32>
    %97 = math.tanh %96 : vector<2x128xf32>
    %cst_23 = arith.constant 1.000000e+00 : f32
    %98 = vector.broadcast %cst_23 : f32 to vector<2x128xf32>
    %99 = arith.subf %98, %92 : vector<2x128xf32>
    %100 = arith.mulf %99, %97 : vector<2x128xf32>
    %101 = arith.mulf %92, %77 : vector<2x128xf32>
    %102 = arith.addf %100, %101 : vector<2x128xf32>
    %c4 = arith.constant 4 : index
    %c0_24 = arith.constant 0 : index
    %c0_25 = arith.constant 0 : index
    %103 = vector.load %arg1[%c4, %c0_24, %c0_25] : memref<8x2x384xf32, #tpu.memory_space<vmem>>, vector<1x2x384xf32>
    %104 = vector.shape_cast %103 : vector<1x2x384xf32> to vector<2x384xf32>
    %cst_26 = arith.constant dense<0.000000e+00> : vector<2x384xf32>
    %105 = tpu.matmul %102, %0, %cst_26 {dimension_numbers = #tpu.dot_dimension_numbers<[1], [0], [0], [1], [0, 0, 1, 1], [], []>} : vector<2x128xf32>, vector<128x384xf32>, vector<2x384xf32> -> vector<2x384xf32>
    %106 = vector.broadcast %1 : vector<1x384xf32> to vector<2x384xf32>
    %107 = arith.addf %105, %106 : vector<2x384xf32>
    %108 = vector.extract_strided_slice %104 {offsets = [0, 0], sizes = [2, 256], strides = [1, 1]} : vector<2x384xf32> to vector<2x256xf32>
    %109 = vector.extract_strided_slice %107 {offsets = [0, 0], sizes = [2, 256], strides = [1, 1]} : vector<2x384xf32> to vector<2x256xf32>
    %110 = arith.addf %108, %109 : vector<2x256xf32>
    %111 = arith.negf %110 : vector<2x256xf32>
    %112 = math.exp %111 : vector<2x256xf32>
    %cst_27 = arith.constant 1.000000e+00 : f32
    %113 = vector.broadcast %cst_27 : f32 to vector<2x256xf32>
    %114 = arith.addf %113, %112 : vector<2x256xf32>
    %115 = arith.divf %113, %114 : vector<2x256xf32>
    %116 = vector.extract_strided_slice %115 {offsets = [0, 0], sizes = [2, 128], strides = [1, 1]} : vector<2x256xf32> to vector<2x128xf32>
    %117 = vector.extract_strided_slice %115 {offsets = [0, 128], sizes = [2, 128], strides = [1, 1]} : vector<2x256xf32> to vector<2x128xf32>
    %118 = vector.extract_strided_slice %104 {offsets = [0, 256], sizes = [2, 128], strides = [1, 1]} : vector<2x384xf32> to vector<2x128xf32>
    %119 = vector.extract_strided_slice %107 {offsets = [0, 256], sizes = [2, 128], strides = [1, 1]} : vector<2x384xf32> to vector<2x128xf32>
    %120 = arith.mulf %116, %119 : vector<2x128xf32>
    %121 = arith.addf %118, %120 : vector<2x128xf32>
    %122 = math.tanh %121 : vector<2x128xf32>
    %cst_28 = arith.constant 1.000000e+00 : f32
    %123 = vector.broadcast %cst_28 : f32 to vector<2x128xf32>
    %124 = arith.subf %123, %117 : vector<2x128xf32>
    %125 = arith.mulf %124, %122 : vector<2x128xf32>
    %126 = arith.mulf %117, %102 : vector<2x128xf32>
    %127 = arith.addf %125, %126 : vector<2x128xf32>
    %c5 = arith.constant 5 : index
    %c0_29 = arith.constant 0 : index
    %c0_30 = arith.constant 0 : index
    %128 = vector.load %arg1[%c5, %c0_29, %c0_30] : memref<8x2x384xf32, #tpu.memory_space<vmem>>, vector<1x2x384xf32>
    %129 = vector.shape_cast %128 : vector<1x2x384xf32> to vector<2x384xf32>
    %cst_31 = arith.constant dense<0.000000e+00> : vector<2x384xf32>
    %130 = tpu.matmul %127, %0, %cst_31 {dimension_numbers = #tpu.dot_dimension_numbers<[1], [0], [0], [1], [0, 0, 1, 1], [], []>} : vector<2x128xf32>, vector<128x384xf32>, vector<2x384xf32> -> vector<2x384xf32>
    %131 = vector.broadcast %1 : vector<1x384xf32> to vector<2x384xf32>
    %132 = arith.addf %130, %131 : vector<2x384xf32>
    %133 = vector.extract_strided_slice %129 {offsets = [0, 0], sizes = [2, 256], strides = [1, 1]} : vector<2x384xf32> to vector<2x256xf32>
    %134 = vector.extract_strided_slice %132 {offsets = [0, 0], sizes = [2, 256], strides = [1, 1]} : vector<2x384xf32> to vector<2x256xf32>
    %135 = arith.addf %133, %134 : vector<2x256xf32>
    %136 = arith.negf %135 : vector<2x256xf32>
    %137 = math.exp %136 : vector<2x256xf32>
    %cst_32 = arith.constant 1.000000e+00 : f32
    %138 = vector.broadcast %cst_32 : f32 to vector<2x256xf32>
    %139 = arith.addf %138, %137 : vector<2x256xf32>
    %140 = arith.divf %138, %139 : vector<2x256xf32>
    %141 = vector.extract_strided_slice %140 {offsets = [0, 0], sizes = [2, 128], strides = [1, 1]} : vector<2x256xf32> to vector<2x128xf32>
    %142 = vector.extract_strided_slice %140 {offsets = [0, 128], sizes = [2, 128], strides = [1, 1]} : vector<2x256xf32> to vector<2x128xf32>
    %143 = vector.extract_strided_slice %129 {offsets = [0, 256], sizes = [2, 128], strides = [1, 1]} : vector<2x384xf32> to vector<2x128xf32>
    %144 = vector.extract_strided_slice %132 {offsets = [0, 256], sizes = [2, 128], strides = [1, 1]} : vector<2x384xf32> to vector<2x128xf32>
    %145 = arith.mulf %141, %144 : vector<2x128xf32>
    %146 = arith.addf %143, %145 : vector<2x128xf32>
    %147 = math.tanh %146 : vector<2x128xf32>
    %cst_33 = arith.constant 1.000000e+00 : f32
    %148 = vector.broadcast %cst_33 : f32 to vector<2x128xf32>
    %149 = arith.subf %148, %142 : vector<2x128xf32>
    %150 = arith.mulf %149, %147 : vector<2x128xf32>
    %151 = arith.mulf %142, %127 : vector<2x128xf32>
    %152 = arith.addf %150, %151 : vector<2x128xf32>
    %c6 = arith.constant 6 : index
    %c0_34 = arith.constant 0 : index
    %c0_35 = arith.constant 0 : index
    %153 = vector.load %arg1[%c6, %c0_34, %c0_35] : memref<8x2x384xf32, #tpu.memory_space<vmem>>, vector<1x2x384xf32>
    %154 = vector.shape_cast %153 : vector<1x2x384xf32> to vector<2x384xf32>
    %cst_36 = arith.constant dense<0.000000e+00> : vector<2x384xf32>
    %155 = tpu.matmul %152, %0, %cst_36 {dimension_numbers = #tpu.dot_dimension_numbers<[1], [0], [0], [1], [0, 0, 1, 1], [], []>} : vector<2x128xf32>, vector<128x384xf32>, vector<2x384xf32> -> vector<2x384xf32>
    %156 = vector.broadcast %1 : vector<1x384xf32> to vector<2x384xf32>
    %157 = arith.addf %155, %156 : vector<2x384xf32>
    %158 = vector.extract_strided_slice %154 {offsets = [0, 0], sizes = [2, 256], strides = [1, 1]} : vector<2x384xf32> to vector<2x256xf32>
    %159 = vector.extract_strided_slice %157 {offsets = [0, 0], sizes = [2, 256], strides = [1, 1]} : vector<2x384xf32> to vector<2x256xf32>
    %160 = arith.addf %158, %159 : vector<2x256xf32>
    %161 = arith.negf %160 : vector<2x256xf32>
    %162 = math.exp %161 : vector<2x256xf32>
    %cst_37 = arith.constant 1.000000e+00 : f32
    %163 = vector.broadcast %cst_37 : f32 to vector<2x256xf32>
    %164 = arith.addf %163, %162 : vector<2x256xf32>
    %165 = arith.divf %163, %164 : vector<2x256xf32>
    %166 = vector.extract_strided_slice %165 {offsets = [0, 0], sizes = [2, 128], strides = [1, 1]} : vector<2x256xf32> to vector<2x128xf32>
    %167 = vector.extract_strided_slice %165 {offsets = [0, 128], sizes = [2, 128], strides = [1, 1]} : vector<2x256xf32> to vector<2x128xf32>
    %168 = vector.extract_strided_slice %154 {offsets = [0, 256], sizes = [2, 128], strides = [1, 1]} : vector<2x384xf32> to vector<2x128xf32>
    %169 = vector.extract_strided_slice %157 {offsets = [0, 256], sizes = [2, 128], strides = [1, 1]} : vector<2x384xf32> to vector<2x128xf32>
    %170 = arith.mulf %166, %169 : vector<2x128xf32>
    %171 = arith.addf %168, %170 : vector<2x128xf32>
    %172 = math.tanh %171 : vector<2x128xf32>
    %cst_38 = arith.constant 1.000000e+00 : f32
    %173 = vector.broadcast %cst_38 : f32 to vector<2x128xf32>
    %174 = arith.subf %173, %167 : vector<2x128xf32>
    %175 = arith.mulf %174, %172 : vector<2x128xf32>
    %176 = arith.mulf %167, %152 : vector<2x128xf32>
    %177 = arith.addf %175, %176 : vector<2x128xf32>
    %c7 = arith.constant 7 : index
    %c0_39 = arith.constant 0 : index
    %c0_40 = arith.constant 0 : index
    %178 = vector.load %arg1[%c7, %c0_39, %c0_40] : memref<8x2x384xf32, #tpu.memory_space<vmem>>, vector<1x2x384xf32>
    %179 = vector.shape_cast %178 : vector<1x2x384xf32> to vector<2x384xf32>
    %cst_41 = arith.constant dense<0.000000e+00> : vector<2x384xf32>
    %180 = tpu.matmul %177, %0, %cst_41 {dimension_numbers = #tpu.dot_dimension_numbers<[1], [0], [0], [1], [0, 0, 1, 1], [], []>} : vector<2x128xf32>, vector<128x384xf32>, vector<2x384xf32> -> vector<2x384xf32>
    %181 = vector.broadcast %1 : vector<1x384xf32> to vector<2x384xf32>
    %182 = arith.addf %180, %181 : vector<2x384xf32>
    %183 = vector.extract_strided_slice %179 {offsets = [0, 0], sizes = [2, 256], strides = [1, 1]} : vector<2x384xf32> to vector<2x256xf32>
    %184 = vector.extract_strided_slice %182 {offsets = [0, 0], sizes = [2, 256], strides = [1, 1]} : vector<2x384xf32> to vector<2x256xf32>
    %185 = arith.addf %183, %184 : vector<2x256xf32>
    %186 = arith.negf %185 : vector<2x256xf32>
    %187 = math.exp %186 : vector<2x256xf32>
    %cst_42 = arith.constant 1.000000e+00 : f32
    %188 = vector.broadcast %cst_42 : f32 to vector<2x256xf32>
    %189 = arith.addf %188, %187 : vector<2x256xf32>
    %190 = arith.divf %188, %189 : vector<2x256xf32>
    %191 = vector.extract_strided_slice %190 {offsets = [0, 0], sizes = [2, 128], strides = [1, 1]} : vector<2x256xf32> to vector<2x128xf32>
    %192 = vector.extract_strided_slice %190 {offsets = [0, 128], sizes = [2, 128], strides = [1, 1]} : vector<2x256xf32> to vector<2x128xf32>
    %193 = vector.extract_strided_slice %179 {offsets = [0, 256], sizes = [2, 128], strides = [1, 1]} : vector<2x384xf32> to vector<2x128xf32>
    %194 = vector.extract_strided_slice %182 {offsets = [0, 256], sizes = [2, 128], strides = [1, 1]} : vector<2x384xf32> to vector<2x128xf32>
    %195 = arith.mulf %191, %194 : vector<2x128xf32>
    %196 = arith.addf %193, %195 : vector<2x128xf32>
    %197 = math.tanh %196 : vector<2x128xf32>
    %cst_43 = arith.constant 1.000000e+00 : f32
    %198 = vector.broadcast %cst_43 : f32 to vector<2x128xf32>
    %199 = arith.subf %198, %192 : vector<2x128xf32>
    %200 = arith.mulf %199, %197 : vector<2x128xf32>
    %201 = arith.mulf %192, %177 : vector<2x128xf32>
    %202 = arith.addf %200, %201 : vector<2x128xf32>
    %c0_44 = arith.constant 0 : index
    %c0_45 = arith.constant 0 : index
    %203 = vector.load %arg5[%c0_44, %c0_45] : memref<16x384xf32, #tpu.memory_space<vmem>>, vector<16x384xf32>
    %c0_46 = arith.constant 0 : index
    %c0_47 = arith.constant 0 : index
    %204 = vector.load %arg6[%c0_46, %c0_47] : memref<128x384xf32, #tpu.memory_space<vmem>>, vector<128x384xf32>
    %c0_48 = arith.constant 0 : index
    %c0_49 = arith.constant 0 : index
    %205 = vector.load %arg7[%c0_48, %c0_49] : memref<1x384xf32, #tpu.memory_space<vmem>>, vector<1x384xf32>
    %c0_50 = arith.constant 0 : index
    %c0_51 = arith.constant 0 : index
    %206 = vector.load %arg8[%c0_50, %c0_51] : memref<128x128xf32, #tpu.memory_space<vmem>>, vector<128x128xf32>
    %c0_52 = arith.constant 0 : index
    %c0_53 = arith.constant 0 : index
    %207 = vector.load %arg9[%c0_52, %c0_53] : memref<1x128xf32, #tpu.memory_space<vmem>>, vector<1x128xf32>
    %c0_54 = arith.constant 0 : index
    %c0_55 = arith.constant 0 : index
    %208 = vector.load %arg2[%c0_54, %c0_55] : memref<2x1xi32, #tpu.memory_space<vmem>>, vector<2x1xi32>
    %209 = tpu.iota {dimensions = array<i32: 1>} : vector<2x16xi32>
    %210 = tpu.iota {dimensions = array<i32: 1>} : vector<2x128xi32>
    %211 = vector.broadcast %208 : vector<2x1xi32> to vector<2x16xi32>
    %212 = arith.cmpi eq, %209, %211 : vector<2x16xi32>
    %213 = arith.extui %212 : vector<2x16xi1> to vector<2x16xi32>
    %214 = arith.sitofp %213 : vector<2x16xi32> to vector<2x16xf32>
    %cst_56 = arith.constant dense<0.000000e+00> : vector<2x384xf32>
    %215 = tpu.matmul %214, %203, %cst_56 {dimension_numbers = #tpu.dot_dimension_numbers<[1], [0], [0], [1], [0, 0, 1, 1], [], []>} : vector<2x16xf32>, vector<16x384xf32>, vector<2x384xf32> -> vector<2x384xf32>
    %cst_57 = arith.constant dense<0.000000e+00> : vector<2x384xf32>
    %216 = tpu.matmul %202, %204, %cst_57 {dimension_numbers = #tpu.dot_dimension_numbers<[1], [0], [0], [1], [0, 0, 1, 1], [], []>} : vector<2x128xf32>, vector<128x384xf32>, vector<2x384xf32> -> vector<2x384xf32>
    %217 = vector.broadcast %205 : vector<1x384xf32> to vector<2x384xf32>
    %218 = arith.addf %216, %217 : vector<2x384xf32>
    %219 = vector.extract_strided_slice %215 {offsets = [0, 0], sizes = [2, 256], strides = [1, 1]} : vector<2x384xf32> to vector<2x256xf32>
    %220 = vector.extract_strided_slice %218 {offsets = [0, 0], sizes = [2, 256], strides = [1, 1]} : vector<2x384xf32> to vector<2x256xf32>
    %221 = arith.addf %219, %220 : vector<2x256xf32>
    %222 = arith.negf %221 : vector<2x256xf32>
    %223 = math.exp %222 : vector<2x256xf32>
    %cst_58 = arith.constant 1.000000e+00 : f32
    %224 = vector.broadcast %cst_58 : f32 to vector<2x256xf32>
    %225 = arith.addf %224, %223 : vector<2x256xf32>
    %226 = arith.divf %224, %225 : vector<2x256xf32>
    %227 = vector.extract_strided_slice %226 {offsets = [0, 0], sizes = [2, 128], strides = [1, 1]} : vector<2x256xf32> to vector<2x128xf32>
    %228 = vector.extract_strided_slice %226 {offsets = [0, 128], sizes = [2, 128], strides = [1, 1]} : vector<2x256xf32> to vector<2x128xf32>
    %229 = vector.extract_strided_slice %215 {offsets = [0, 256], sizes = [2, 128], strides = [1, 1]} : vector<2x384xf32> to vector<2x128xf32>
    %230 = vector.extract_strided_slice %218 {offsets = [0, 256], sizes = [2, 128], strides = [1, 1]} : vector<2x384xf32> to vector<2x128xf32>
    %231 = arith.mulf %227, %230 : vector<2x128xf32>
    %232 = arith.addf %229, %231 : vector<2x128xf32>
    %233 = math.tanh %232 : vector<2x128xf32>
    %cst_59 = arith.constant 1.000000e+00 : f32
    %234 = vector.broadcast %cst_59 : f32 to vector<2x128xf32>
    %235 = arith.subf %234, %228 : vector<2x128xf32>
    %236 = arith.mulf %235, %233 : vector<2x128xf32>
    %237 = arith.mulf %228, %202 : vector<2x128xf32>
    %238 = arith.addf %236, %237 : vector<2x128xf32>
    %cst_60 = arith.constant dense<0.000000e+00> : vector<2x128xf32>
    %239 = tpu.matmul %238, %206, %cst_60 {dimension_numbers = #tpu.dot_dimension_numbers<[1], [0], [0], [1], [0, 0, 1, 1], [], []>} : vector<2x128xf32>, vector<128x128xf32>, vector<2x128xf32> -> vector<2x128xf32>
    %240 = vector.broadcast %207 : vector<1x128xf32> to vector<2x128xf32>
    %241 = arith.addf %239, %240 : vector<2x128xf32>
    %cst_61 = arith.constant dense<0xFF800000> : vector<2xf32>
    %242 = vector.multi_reduction <maximumf>, %241, %cst_61 [1] : vector<2x128xf32> to vector<2xf32>
    %243 = vector.shape_cast %242 : vector<2xf32> to vector<2x1xf32>
    %244 = vector.broadcast %243 : vector<2x1xf32> to vector<2x128xf32>
    %245 = arith.subf %241, %244 : vector<2x128xf32>
    %246 = math.exp %245 : vector<2x128xf32>
    %cst_62 = arith.constant dense<0.000000e+00> : vector<2xf32>
    %247 = vector.multi_reduction <add>, %246, %cst_62 [1] : vector<2x128xf32> to vector<2xf32>
    %248 = vector.shape_cast %247 : vector<2xf32> to vector<2x1xf32>
    %249 = math.log %248 : vector<2x1xf32>
    %250 = arith.addf %249, %243 : vector<2x1xf32>
    %251 = vector.broadcast %250 : vector<2x1xf32> to vector<2x128xf32>
    %252 = arith.subf %241, %251 : vector<2x128xf32>
    %253 = vector.broadcast %243 : vector<2x1xf32> to vector<2x128xf32>
    %254 = arith.cmpf oeq, %241, %253 : vector<2x128xf32>
    %c128_i32 = arith.constant 128 : i32
    %255 = vector.broadcast %c128_i32 : i32 to vector<2x128xi32>
    %256 = arith.select %254, %210, %255 : vector<2x128xi1>, vector<2x128xi32>
    %cst_63 = arith.constant dense<2147483647> : vector<2xi32>
    %257 = vector.multi_reduction <minsi>, %256, %cst_63 [1] : vector<2x128xi32> to vector<2xi32>
    %258 = vector.shape_cast %257 : vector<2xi32> to vector<2x1xi32>
    %259 = vector.broadcast %258 : vector<2x1xi32> to vector<2x16xi32>
    %260 = arith.cmpi eq, %209, %259 : vector<2x16xi32>
    %261 = arith.extui %260 : vector<2x16xi1> to vector<2x16xi32>
    %262 = arith.sitofp %261 : vector<2x16xi32> to vector<2x16xf32>
    %cst_64 = arith.constant dense<0.000000e+00> : vector<2x384xf32>
    %263 = tpu.matmul %262, %203, %cst_64 {dimension_numbers = #tpu.dot_dimension_numbers<[1], [0], [0], [1], [0, 0, 1, 1], [], []>} : vector<2x16xf32>, vector<16x384xf32>, vector<2x384xf32> -> vector<2x384xf32>
    %cst_65 = arith.constant dense<0.000000e+00> : vector<2x384xf32>
    %264 = tpu.matmul %238, %204, %cst_65 {dimension_numbers = #tpu.dot_dimension_numbers<[1], [0], [0], [1], [0, 0, 1, 1], [], []>} : vector<2x128xf32>, vector<128x384xf32>, vector<2x384xf32> -> vector<2x384xf32>
    %265 = vector.broadcast %205 : vector<1x384xf32> to vector<2x384xf32>
    %266 = arith.addf %264, %265 : vector<2x384xf32>
    %267 = vector.extract_strided_slice %263 {offsets = [0, 0], sizes = [2, 256], strides = [1, 1]} : vector<2x384xf32> to vector<2x256xf32>
    %268 = vector.extract_strided_slice %266 {offsets = [0, 0], sizes = [2, 256], strides = [1, 1]} : vector<2x384xf32> to vector<2x256xf32>
    %269 = arith.addf %267, %268 : vector<2x256xf32>
    %270 = arith.negf %269 : vector<2x256xf32>
    %271 = math.exp %270 : vector<2x256xf32>
    %cst_66 = arith.constant 1.000000e+00 : f32
    %272 = vector.broadcast %cst_66 : f32 to vector<2x256xf32>
    %273 = arith.addf %272, %271 : vector<2x256xf32>
    %274 = arith.divf %272, %273 : vector<2x256xf32>
    %275 = vector.extract_strided_slice %274 {offsets = [0, 0], sizes = [2, 128], strides = [1, 1]} : vector<2x256xf32> to vector<2x128xf32>
    %276 = vector.extract_strided_slice %274 {offsets = [0, 128], sizes = [2, 128], strides = [1, 1]} : vector<2x256xf32> to vector<2x128xf32>
    %277 = vector.extract_strided_slice %263 {offsets = [0, 256], sizes = [2, 128], strides = [1, 1]} : vector<2x384xf32> to vector<2x128xf32>
    %278 = vector.extract_strided_slice %266 {offsets = [0, 256], sizes = [2, 128], strides = [1, 1]} : vector<2x384xf32> to vector<2x128xf32>
    %279 = arith.mulf %275, %278 : vector<2x128xf32>
    %280 = arith.addf %277, %279 : vector<2x128xf32>
    %281 = math.tanh %280 : vector<2x128xf32>
    %cst_67 = arith.constant 1.000000e+00 : f32
    %282 = vector.broadcast %cst_67 : f32 to vector<2x128xf32>
    %283 = arith.subf %282, %276 : vector<2x128xf32>
    %284 = arith.mulf %283, %281 : vector<2x128xf32>
    %285 = arith.mulf %276, %238 : vector<2x128xf32>
    %286 = arith.addf %284, %285 : vector<2x128xf32>
    %cst_68 = arith.constant dense<0.000000e+00> : vector<2x128xf32>
    %287 = tpu.matmul %286, %206, %cst_68 {dimension_numbers = #tpu.dot_dimension_numbers<[1], [0], [0], [1], [0, 0, 1, 1], [], []>} : vector<2x128xf32>, vector<128x128xf32>, vector<2x128xf32> -> vector<2x128xf32>
    %288 = vector.broadcast %207 : vector<1x128xf32> to vector<2x128xf32>
    %289 = arith.addf %287, %288 : vector<2x128xf32>
    %cst_69 = arith.constant dense<0xFF800000> : vector<2xf32>
    %290 = vector.multi_reduction <maximumf>, %289, %cst_69 [1] : vector<2x128xf32> to vector<2xf32>
    %291 = vector.shape_cast %290 : vector<2xf32> to vector<2x1xf32>
    %292 = vector.broadcast %291 : vector<2x1xf32> to vector<2x128xf32>
    %293 = arith.subf %289, %292 : vector<2x128xf32>
    %294 = math.exp %293 : vector<2x128xf32>
    %cst_70 = arith.constant dense<0.000000e+00> : vector<2xf32>
    %295 = vector.multi_reduction <add>, %294, %cst_70 [1] : vector<2x128xf32> to vector<2xf32>
    %296 = vector.shape_cast %295 : vector<2xf32> to vector<2x1xf32>
    %297 = math.log %296 : vector<2x1xf32>
    %298 = arith.addf %297, %291 : vector<2x1xf32>
    %299 = vector.broadcast %298 : vector<2x1xf32> to vector<2x128xf32>
    %300 = arith.subf %289, %299 : vector<2x128xf32>
    %301 = vector.broadcast %291 : vector<2x1xf32> to vector<2x128xf32>
    %302 = arith.cmpf oeq, %289, %301 : vector<2x128xf32>
    %c128_i32_71 = arith.constant 128 : i32
    %303 = vector.broadcast %c128_i32_71 : i32 to vector<2x128xi32>
    %304 = arith.select %302, %210, %303 : vector<2x128xi1>, vector<2x128xi32>
    %cst_72 = arith.constant dense<2147483647> : vector<2xi32>
    %305 = vector.multi_reduction <minsi>, %304, %cst_72 [1] : vector<2x128xi32> to vector<2xi32>
    %306 = vector.shape_cast %305 : vector<2xi32> to vector<2x1xi32>
    %307 = vector.broadcast %306 : vector<2x1xi32> to vector<2x16xi32>
    %308 = arith.cmpi eq, %209, %307 : vector<2x16xi32>
    %309 = arith.extui %308 : vector<2x16xi1> to vector<2x16xi32>
    %310 = arith.sitofp %309 : vector<2x16xi32> to vector<2x16xf32>
    %cst_73 = arith.constant dense<0.000000e+00> : vector<2x384xf32>
    %311 = tpu.matmul %310, %203, %cst_73 {dimension_numbers = #tpu.dot_dimension_numbers<[1], [0], [0], [1], [0, 0, 1, 1], [], []>} : vector<2x16xf32>, vector<16x384xf32>, vector<2x384xf32> -> vector<2x384xf32>
    %cst_74 = arith.constant dense<0.000000e+00> : vector<2x384xf32>
    %312 = tpu.matmul %286, %204, %cst_74 {dimension_numbers = #tpu.dot_dimension_numbers<[1], [0], [0], [1], [0, 0, 1, 1], [], []>} : vector<2x128xf32>, vector<128x384xf32>, vector<2x384xf32> -> vector<2x384xf32>
    %313 = vector.broadcast %205 : vector<1x384xf32> to vector<2x384xf32>
    %314 = arith.addf %312, %313 : vector<2x384xf32>
    %315 = vector.extract_strided_slice %311 {offsets = [0, 0], sizes = [2, 256], strides = [1, 1]} : vector<2x384xf32> to vector<2x256xf32>
    %316 = vector.extract_strided_slice %314 {offsets = [0, 0], sizes = [2, 256], strides = [1, 1]} : vector<2x384xf32> to vector<2x256xf32>
    %317 = arith.addf %315, %316 : vector<2x256xf32>
    %318 = arith.negf %317 : vector<2x256xf32>
    %319 = math.exp %318 : vector<2x256xf32>
    %cst_75 = arith.constant 1.000000e+00 : f32
    %320 = vector.broadcast %cst_75 : f32 to vector<2x256xf32>
    %321 = arith.addf %320, %319 : vector<2x256xf32>
    %322 = arith.divf %320, %321 : vector<2x256xf32>
    %323 = vector.extract_strided_slice %322 {offsets = [0, 0], sizes = [2, 128], strides = [1, 1]} : vector<2x256xf32> to vector<2x128xf32>
    %324 = vector.extract_strided_slice %322 {offsets = [0, 128], sizes = [2, 128], strides = [1, 1]} : vector<2x256xf32> to vector<2x128xf32>
    %325 = vector.extract_strided_slice %311 {offsets = [0, 256], sizes = [2, 128], strides = [1, 1]} : vector<2x384xf32> to vector<2x128xf32>
    %326 = vector.extract_strided_slice %314 {offsets = [0, 256], sizes = [2, 128], strides = [1, 1]} : vector<2x384xf32> to vector<2x128xf32>
    %327 = arith.mulf %323, %326 : vector<2x128xf32>
    %328 = arith.addf %325, %327 : vector<2x128xf32>
    %329 = math.tanh %328 : vector<2x128xf32>
    %cst_76 = arith.constant 1.000000e+00 : f32
    %330 = vector.broadcast %cst_76 : f32 to vector<2x128xf32>
    %331 = arith.subf %330, %324 : vector<2x128xf32>
    %332 = arith.mulf %331, %329 : vector<2x128xf32>
    %333 = arith.mulf %324, %286 : vector<2x128xf32>
    %334 = arith.addf %332, %333 : vector<2x128xf32>
    %cst_77 = arith.constant dense<0.000000e+00> : vector<2x128xf32>
    %335 = tpu.matmul %334, %206, %cst_77 {dimension_numbers = #tpu.dot_dimension_numbers<[1], [0], [0], [1], [0, 0, 1, 1], [], []>} : vector<2x128xf32>, vector<128x128xf32>, vector<2x128xf32> -> vector<2x128xf32>
    %336 = vector.broadcast %207 : vector<1x128xf32> to vector<2x128xf32>
    %337 = arith.addf %335, %336 : vector<2x128xf32>
    %cst_78 = arith.constant dense<0xFF800000> : vector<2xf32>
    %338 = vector.multi_reduction <maximumf>, %337, %cst_78 [1] : vector<2x128xf32> to vector<2xf32>
    %339 = vector.shape_cast %338 : vector<2xf32> to vector<2x1xf32>
    %340 = vector.broadcast %339 : vector<2x1xf32> to vector<2x128xf32>
    %341 = arith.subf %337, %340 : vector<2x128xf32>
    %342 = math.exp %341 : vector<2x128xf32>
    %cst_79 = arith.constant dense<0.000000e+00> : vector<2xf32>
    %343 = vector.multi_reduction <add>, %342, %cst_79 [1] : vector<2x128xf32> to vector<2xf32>
    %344 = vector.shape_cast %343 : vector<2xf32> to vector<2x1xf32>
    %345 = math.log %344 : vector<2x1xf32>
    %346 = arith.addf %345, %339 : vector<2x1xf32>
    %347 = vector.broadcast %346 : vector<2x1xf32> to vector<2x128xf32>
    %348 = arith.subf %337, %347 : vector<2x128xf32>
    %349 = vector.broadcast %339 : vector<2x1xf32> to vector<2x128xf32>
    %350 = arith.cmpf oeq, %337, %349 : vector<2x128xf32>
    %c128_i32_80 = arith.constant 128 : i32
    %351 = vector.broadcast %c128_i32_80 : i32 to vector<2x128xi32>
    %352 = arith.select %350, %210, %351 : vector<2x128xi1>, vector<2x128xi32>
    %cst_81 = arith.constant dense<2147483647> : vector<2xi32>
    %353 = vector.multi_reduction <minsi>, %352, %cst_81 [1] : vector<2x128xi32> to vector<2xi32>
    %354 = vector.shape_cast %353 : vector<2xi32> to vector<2x1xi32>
    %355 = vector.broadcast %354 : vector<2x1xi32> to vector<2x16xi32>
    %356 = arith.cmpi eq, %209, %355 : vector<2x16xi32>
    %357 = arith.extui %356 : vector<2x16xi1> to vector<2x16xi32>
    %358 = arith.sitofp %357 : vector<2x16xi32> to vector<2x16xf32>
    %cst_82 = arith.constant dense<0.000000e+00> : vector<2x384xf32>
    %359 = tpu.matmul %358, %203, %cst_82 {dimension_numbers = #tpu.dot_dimension_numbers<[1], [0], [0], [1], [0, 0, 1, 1], [], []>} : vector<2x16xf32>, vector<16x384xf32>, vector<2x384xf32> -> vector<2x384xf32>
    %cst_83 = arith.constant dense<0.000000e+00> : vector<2x384xf32>
    %360 = tpu.matmul %334, %204, %cst_83 {dimension_numbers = #tpu.dot_dimension_numbers<[1], [0], [0], [1], [0, 0, 1, 1], [], []>} : vector<2x128xf32>, vector<128x384xf32>, vector<2x384xf32> -> vector<2x384xf32>
    %361 = vector.broadcast %205 : vector<1x384xf32> to vector<2x384xf32>
    %362 = arith.addf %360, %361 : vector<2x384xf32>
    %363 = vector.extract_strided_slice %359 {offsets = [0, 0], sizes = [2, 256], strides = [1, 1]} : vector<2x384xf32> to vector<2x256xf32>
    %364 = vector.extract_strided_slice %362 {offsets = [0, 0], sizes = [2, 256], strides = [1, 1]} : vector<2x384xf32> to vector<2x256xf32>
    %365 = arith.addf %363, %364 : vector<2x256xf32>
    %366 = arith.negf %365 : vector<2x256xf32>
    %367 = math.exp %366 : vector<2x256xf32>
    %cst_84 = arith.constant 1.000000e+00 : f32
    %368 = vector.broadcast %cst_84 : f32 to vector<2x256xf32>
    %369 = arith.addf %368, %367 : vector<2x256xf32>
    %370 = arith.divf %368, %369 : vector<2x256xf32>
    %371 = vector.extract_strided_slice %370 {offsets = [0, 0], sizes = [2, 128], strides = [1, 1]} : vector<2x256xf32> to vector<2x128xf32>
    %372 = vector.extract_strided_slice %370 {offsets = [0, 128], sizes = [2, 128], strides = [1, 1]} : vector<2x256xf32> to vector<2x128xf32>
    %373 = vector.extract_strided_slice %359 {offsets = [0, 256], sizes = [2, 128], strides = [1, 1]} : vector<2x384xf32> to vector<2x128xf32>
    %374 = vector.extract_strided_slice %362 {offsets = [0, 256], sizes = [2, 128], strides = [1, 1]} : vector<2x384xf32> to vector<2x128xf32>
    %375 = arith.mulf %371, %374 : vector<2x128xf32>
    %376 = arith.addf %373, %375 : vector<2x128xf32>
    %377 = math.tanh %376 : vector<2x128xf32>
    %cst_85 = arith.constant 1.000000e+00 : f32
    %378 = vector.broadcast %cst_85 : f32 to vector<2x128xf32>
    %379 = arith.subf %378, %372 : vector<2x128xf32>
    %380 = arith.mulf %379, %377 : vector<2x128xf32>
    %381 = arith.mulf %372, %334 : vector<2x128xf32>
    %382 = arith.addf %380, %381 : vector<2x128xf32>
    %cst_86 = arith.constant dense<0.000000e+00> : vector<2x128xf32>
    %383 = tpu.matmul %382, %206, %cst_86 {dimension_numbers = #tpu.dot_dimension_numbers<[1], [0], [0], [1], [0, 0, 1, 1], [], []>} : vector<2x128xf32>, vector<128x128xf32>, vector<2x128xf32> -> vector<2x128xf32>
    %384 = vector.broadcast %207 : vector<1x128xf32> to vector<2x128xf32>
    %385 = arith.addf %383, %384 : vector<2x128xf32>
    %cst_87 = arith.constant dense<0xFF800000> : vector<2xf32>
    %386 = vector.multi_reduction <maximumf>, %385, %cst_87 [1] : vector<2x128xf32> to vector<2xf32>
    %387 = vector.shape_cast %386 : vector<2xf32> to vector<2x1xf32>
    %388 = vector.broadcast %387 : vector<2x1xf32> to vector<2x128xf32>
    %389 = arith.subf %385, %388 : vector<2x128xf32>
    %390 = math.exp %389 : vector<2x128xf32>
    %cst_88 = arith.constant dense<0.000000e+00> : vector<2xf32>
    %391 = vector.multi_reduction <add>, %390, %cst_88 [1] : vector<2x128xf32> to vector<2xf32>
    %392 = vector.shape_cast %391 : vector<2xf32> to vector<2x1xf32>
    %393 = math.log %392 : vector<2x1xf32>
    %394 = arith.addf %393, %387 : vector<2x1xf32>
    %395 = vector.broadcast %394 : vector<2x1xf32> to vector<2x128xf32>
    %396 = arith.subf %385, %395 : vector<2x128xf32>
    %397 = vector.broadcast %387 : vector<2x1xf32> to vector<2x128xf32>
    %398 = arith.cmpf oeq, %385, %397 : vector<2x128xf32>
    %c128_i32_89 = arith.constant 128 : i32
    %399 = vector.broadcast %c128_i32_89 : i32 to vector<2x128xi32>
    %400 = arith.select %398, %210, %399 : vector<2x128xi1>, vector<2x128xi32>
    %cst_90 = arith.constant dense<2147483647> : vector<2xi32>
    %401 = vector.multi_reduction <minsi>, %400, %cst_90 [1] : vector<2x128xi32> to vector<2xi32>
    %402 = vector.shape_cast %401 : vector<2xi32> to vector<2x1xi32>
    %403 = vector.broadcast %402 : vector<2x1xi32> to vector<2x16xi32>
    %404 = arith.cmpi eq, %209, %403 : vector<2x16xi32>
    %405 = arith.extui %404 : vector<2x16xi1> to vector<2x16xi32>
    %406 = arith.sitofp %405 : vector<2x16xi32> to vector<2x16xf32>
    %cst_91 = arith.constant dense<0.000000e+00> : vector<2x384xf32>
    %407 = tpu.matmul %406, %203, %cst_91 {dimension_numbers = #tpu.dot_dimension_numbers<[1], [0], [0], [1], [0, 0, 1, 1], [], []>} : vector<2x16xf32>, vector<16x384xf32>, vector<2x384xf32> -> vector<2x384xf32>
    %cst_92 = arith.constant dense<0.000000e+00> : vector<2x384xf32>
    %408 = tpu.matmul %382, %204, %cst_92 {dimension_numbers = #tpu.dot_dimension_numbers<[1], [0], [0], [1], [0, 0, 1, 1], [], []>} : vector<2x128xf32>, vector<128x384xf32>, vector<2x384xf32> -> vector<2x384xf32>
    %409 = vector.broadcast %205 : vector<1x384xf32> to vector<2x384xf32>
    %410 = arith.addf %408, %409 : vector<2x384xf32>
    %411 = vector.extract_strided_slice %407 {offsets = [0, 0], sizes = [2, 256], strides = [1, 1]} : vector<2x384xf32> to vector<2x256xf32>
    %412 = vector.extract_strided_slice %410 {offsets = [0, 0], sizes = [2, 256], strides = [1, 1]} : vector<2x384xf32> to vector<2x256xf32>
    %413 = arith.addf %411, %412 : vector<2x256xf32>
    %414 = arith.negf %413 : vector<2x256xf32>
    %415 = math.exp %414 : vector<2x256xf32>
    %cst_93 = arith.constant 1.000000e+00 : f32
    %416 = vector.broadcast %cst_93 : f32 to vector<2x256xf32>
    %417 = arith.addf %416, %415 : vector<2x256xf32>
    %418 = arith.divf %416, %417 : vector<2x256xf32>
    %419 = vector.extract_strided_slice %418 {offsets = [0, 0], sizes = [2, 128], strides = [1, 1]} : vector<2x256xf32> to vector<2x128xf32>
    %420 = vector.extract_strided_slice %418 {offsets = [0, 128], sizes = [2, 128], strides = [1, 1]} : vector<2x256xf32> to vector<2x128xf32>
    %421 = vector.extract_strided_slice %407 {offsets = [0, 256], sizes = [2, 128], strides = [1, 1]} : vector<2x384xf32> to vector<2x128xf32>
    %422 = vector.extract_strided_slice %410 {offsets = [0, 256], sizes = [2, 128], strides = [1, 1]} : vector<2x384xf32> to vector<2x128xf32>
    %423 = arith.mulf %419, %422 : vector<2x128xf32>
    %424 = arith.addf %421, %423 : vector<2x128xf32>
    %425 = math.tanh %424 : vector<2x128xf32>
    %cst_94 = arith.constant 1.000000e+00 : f32
    %426 = vector.broadcast %cst_94 : f32 to vector<2x128xf32>
    %427 = arith.subf %426, %420 : vector<2x128xf32>
    %428 = arith.mulf %427, %425 : vector<2x128xf32>
    %429 = arith.mulf %420, %382 : vector<2x128xf32>
    %430 = arith.addf %428, %429 : vector<2x128xf32>
    %cst_95 = arith.constant dense<0.000000e+00> : vector<2x128xf32>
    %431 = tpu.matmul %430, %206, %cst_95 {dimension_numbers = #tpu.dot_dimension_numbers<[1], [0], [0], [1], [0, 0, 1, 1], [], []>} : vector<2x128xf32>, vector<128x128xf32>, vector<2x128xf32> -> vector<2x128xf32>
    %432 = vector.broadcast %207 : vector<1x128xf32> to vector<2x128xf32>
    %433 = arith.addf %431, %432 : vector<2x128xf32>
    %cst_96 = arith.constant dense<0xFF800000> : vector<2xf32>
    %434 = vector.multi_reduction <maximumf>, %433, %cst_96 [1] : vector<2x128xf32> to vector<2xf32>
    %435 = vector.shape_cast %434 : vector<2xf32> to vector<2x1xf32>
    %436 = vector.broadcast %435 : vector<2x1xf32> to vector<2x128xf32>
    %437 = arith.subf %433, %436 : vector<2x128xf32>
    %438 = math.exp %437 : vector<2x128xf32>
    %cst_97 = arith.constant dense<0.000000e+00> : vector<2xf32>
    %439 = vector.multi_reduction <add>, %438, %cst_97 [1] : vector<2x128xf32> to vector<2xf32>
    %440 = vector.shape_cast %439 : vector<2xf32> to vector<2x1xf32>
    %441 = math.log %440 : vector<2x1xf32>
    %442 = arith.addf %441, %435 : vector<2x1xf32>
    %443 = vector.broadcast %442 : vector<2x1xf32> to vector<2x128xf32>
    %444 = arith.subf %433, %443 : vector<2x128xf32>
    %445 = vector.broadcast %435 : vector<2x1xf32> to vector<2x128xf32>
    %446 = arith.cmpf oeq, %433, %445 : vector<2x128xf32>
    %c128_i32_98 = arith.constant 128 : i32
    %447 = vector.broadcast %c128_i32_98 : i32 to vector<2x128xi32>
    %448 = arith.select %446, %210, %447 : vector<2x128xi1>, vector<2x128xi32>
    %cst_99 = arith.constant dense<2147483647> : vector<2xi32>
    %449 = vector.multi_reduction <minsi>, %448, %cst_99 [1] : vector<2x128xi32> to vector<2xi32>
    %450 = vector.shape_cast %449 : vector<2xi32> to vector<2x1xi32>
    %451 = vector.broadcast %450 : vector<2x1xi32> to vector<2x16xi32>
    %452 = arith.cmpi eq, %209, %451 : vector<2x16xi32>
    %453 = arith.extui %452 : vector<2x16xi1> to vector<2x16xi32>
    %454 = arith.sitofp %453 : vector<2x16xi32> to vector<2x16xf32>
    %cst_100 = arith.constant dense<0.000000e+00> : vector<2x384xf32>
    %455 = tpu.matmul %454, %203, %cst_100 {dimension_numbers = #tpu.dot_dimension_numbers<[1], [0], [0], [1], [0, 0, 1, 1], [], []>} : vector<2x16xf32>, vector<16x384xf32>, vector<2x384xf32> -> vector<2x384xf32>
    %cst_101 = arith.constant dense<0.000000e+00> : vector<2x384xf32>
    %456 = tpu.matmul %430, %204, %cst_101 {dimension_numbers = #tpu.dot_dimension_numbers<[1], [0], [0], [1], [0, 0, 1, 1], [], []>} : vector<2x128xf32>, vector<128x384xf32>, vector<2x384xf32> -> vector<2x384xf32>
    %457 = vector.broadcast %205 : vector<1x384xf32> to vector<2x384xf32>
    %458 = arith.addf %456, %457 : vector<2x384xf32>
    %459 = vector.extract_strided_slice %455 {offsets = [0, 0], sizes = [2, 256], strides = [1, 1]} : vector<2x384xf32> to vector<2x256xf32>
    %460 = vector.extract_strided_slice %458 {offsets = [0, 0], sizes = [2, 256], strides = [1, 1]} : vector<2x384xf32> to vector<2x256xf32>
    %461 = arith.addf %459, %460 : vector<2x256xf32>
    %462 = arith.negf %461 : vector<2x256xf32>
    %463 = math.exp %462 : vector<2x256xf32>
    %cst_102 = arith.constant 1.000000e+00 : f32
    %464 = vector.broadcast %cst_102 : f32 to vector<2x256xf32>
    %465 = arith.addf %464, %463 : vector<2x256xf32>
    %466 = arith.divf %464, %465 : vector<2x256xf32>
    %467 = vector.extract_strided_slice %466 {offsets = [0, 0], sizes = [2, 128], strides = [1, 1]} : vector<2x256xf32> to vector<2x128xf32>
    %468 = vector.extract_strided_slice %466 {offsets = [0, 128], sizes = [2, 128], strides = [1, 1]} : vector<2x256xf32> to vector<2x128xf32>
    %469 = vector.extract_strided_slice %455 {offsets = [0, 256], sizes = [2, 128], strides = [1, 1]} : vector<2x384xf32> to vector<2x128xf32>
    %470 = vector.extract_strided_slice %458 {offsets = [0, 256], sizes = [2, 128], strides = [1, 1]} : vector<2x384xf32> to vector<2x128xf32>
    %471 = arith.mulf %467, %470 : vector<2x128xf32>
    %472 = arith.addf %469, %471 : vector<2x128xf32>
    %473 = math.tanh %472 : vector<2x128xf32>
    %cst_103 = arith.constant 1.000000e+00 : f32
    %474 = vector.broadcast %cst_103 : f32 to vector<2x128xf32>
    %475 = arith.subf %474, %468 : vector<2x128xf32>
    %476 = arith.mulf %475, %473 : vector<2x128xf32>
    %477 = arith.mulf %468, %430 : vector<2x128xf32>
    %478 = arith.addf %476, %477 : vector<2x128xf32>
    %cst_104 = arith.constant dense<0.000000e+00> : vector<2x128xf32>
    %479 = tpu.matmul %478, %206, %cst_104 {dimension_numbers = #tpu.dot_dimension_numbers<[1], [0], [0], [1], [0, 0, 1, 1], [], []>} : vector<2x128xf32>, vector<128x128xf32>, vector<2x128xf32> -> vector<2x128xf32>
    %480 = vector.broadcast %207 : vector<1x128xf32> to vector<2x128xf32>
    %481 = arith.addf %479, %480 : vector<2x128xf32>
    %cst_105 = arith.constant dense<0xFF800000> : vector<2xf32>
    %482 = vector.multi_reduction <maximumf>, %481, %cst_105 [1] : vector<2x128xf32> to vector<2xf32>
    %483 = vector.shape_cast %482 : vector<2xf32> to vector<2x1xf32>
    %484 = vector.broadcast %483 : vector<2x1xf32> to vector<2x128xf32>
    %485 = arith.subf %481, %484 : vector<2x128xf32>
    %486 = math.exp %485 : vector<2x128xf32>
    %cst_106 = arith.constant dense<0.000000e+00> : vector<2xf32>
    %487 = vector.multi_reduction <add>, %486, %cst_106 [1] : vector<2x128xf32> to vector<2xf32>
    %488 = vector.shape_cast %487 : vector<2xf32> to vector<2x1xf32>
    %489 = math.log %488 : vector<2x1xf32>
    %490 = arith.addf %489, %483 : vector<2x1xf32>
    %491 = vector.broadcast %490 : vector<2x1xf32> to vector<2x128xf32>
    %492 = arith.subf %481, %491 : vector<2x128xf32>
    %493 = vector.broadcast %483 : vector<2x1xf32> to vector<2x128xf32>
    %494 = arith.cmpf oeq, %481, %493 : vector<2x128xf32>
    %c128_i32_107 = arith.constant 128 : i32
    %495 = vector.broadcast %c128_i32_107 : i32 to vector<2x128xi32>
    %496 = arith.select %494, %210, %495 : vector<2x128xi1>, vector<2x128xi32>
    %cst_108 = arith.constant dense<2147483647> : vector<2xi32>
    %497 = vector.multi_reduction <minsi>, %496, %cst_108 [1] : vector<2x128xi32> to vector<2xi32>
    %498 = vector.shape_cast %497 : vector<2xi32> to vector<2x1xi32>
    %499 = vector.broadcast %498 : vector<2x1xi32> to vector<2x16xi32>
    %500 = arith.cmpi eq, %209, %499 : vector<2x16xi32>
    %501 = arith.extui %500 : vector<2x16xi1> to vector<2x16xi32>
    %502 = arith.sitofp %501 : vector<2x16xi32> to vector<2x16xf32>
    %cst_109 = arith.constant dense<0.000000e+00> : vector<2x384xf32>
    %503 = tpu.matmul %502, %203, %cst_109 {dimension_numbers = #tpu.dot_dimension_numbers<[1], [0], [0], [1], [0, 0, 1, 1], [], []>} : vector<2x16xf32>, vector<16x384xf32>, vector<2x384xf32> -> vector<2x384xf32>
    %cst_110 = arith.constant dense<0.000000e+00> : vector<2x384xf32>
    %504 = tpu.matmul %478, %204, %cst_110 {dimension_numbers = #tpu.dot_dimension_numbers<[1], [0], [0], [1], [0, 0, 1, 1], [], []>} : vector<2x128xf32>, vector<128x384xf32>, vector<2x384xf32> -> vector<2x384xf32>
    %505 = vector.broadcast %205 : vector<1x384xf32> to vector<2x384xf32>
    %506 = arith.addf %504, %505 : vector<2x384xf32>
    %507 = vector.extract_strided_slice %503 {offsets = [0, 0], sizes = [2, 256], strides = [1, 1]} : vector<2x384xf32> to vector<2x256xf32>
    %508 = vector.extract_strided_slice %506 {offsets = [0, 0], sizes = [2, 256], strides = [1, 1]} : vector<2x384xf32> to vector<2x256xf32>
    %509 = arith.addf %507, %508 : vector<2x256xf32>
    %510 = arith.negf %509 : vector<2x256xf32>
    %511 = math.exp %510 : vector<2x256xf32>
    %cst_111 = arith.constant 1.000000e+00 : f32
    %512 = vector.broadcast %cst_111 : f32 to vector<2x256xf32>
    %513 = arith.addf %512, %511 : vector<2x256xf32>
    %514 = arith.divf %512, %513 : vector<2x256xf32>
    %515 = vector.extract_strided_slice %514 {offsets = [0, 0], sizes = [2, 128], strides = [1, 1]} : vector<2x256xf32> to vector<2x128xf32>
    %516 = vector.extract_strided_slice %514 {offsets = [0, 128], sizes = [2, 128], strides = [1, 1]} : vector<2x256xf32> to vector<2x128xf32>
    %517 = vector.extract_strided_slice %503 {offsets = [0, 256], sizes = [2, 128], strides = [1, 1]} : vector<2x384xf32> to vector<2x128xf32>
    %518 = vector.extract_strided_slice %506 {offsets = [0, 256], sizes = [2, 128], strides = [1, 1]} : vector<2x384xf32> to vector<2x128xf32>
    %519 = arith.mulf %515, %518 : vector<2x128xf32>
    %520 = arith.addf %517, %519 : vector<2x128xf32>
    %521 = math.tanh %520 : vector<2x128xf32>
    %cst_112 = arith.constant 1.000000e+00 : f32
    %522 = vector.broadcast %cst_112 : f32 to vector<2x128xf32>
    %523 = arith.subf %522, %516 : vector<2x128xf32>
    %524 = arith.mulf %523, %521 : vector<2x128xf32>
    %525 = arith.mulf %516, %478 : vector<2x128xf32>
    %526 = arith.addf %524, %525 : vector<2x128xf32>
    %cst_113 = arith.constant dense<0.000000e+00> : vector<2x128xf32>
    %527 = tpu.matmul %526, %206, %cst_113 {dimension_numbers = #tpu.dot_dimension_numbers<[1], [0], [0], [1], [0, 0, 1, 1], [], []>} : vector<2x128xf32>, vector<128x128xf32>, vector<2x128xf32> -> vector<2x128xf32>
    %528 = vector.broadcast %207 : vector<1x128xf32> to vector<2x128xf32>
    %529 = arith.addf %527, %528 : vector<2x128xf32>
    %cst_114 = arith.constant dense<0xFF800000> : vector<2xf32>
    %530 = vector.multi_reduction <maximumf>, %529, %cst_114 [1] : vector<2x128xf32> to vector<2xf32>
    %531 = vector.shape_cast %530 : vector<2xf32> to vector<2x1xf32>
    %532 = vector.broadcast %531 : vector<2x1xf32> to vector<2x128xf32>
    %533 = arith.subf %529, %532 : vector<2x128xf32>
    %534 = math.exp %533 : vector<2x128xf32>
    %cst_115 = arith.constant dense<0.000000e+00> : vector<2xf32>
    %535 = vector.multi_reduction <add>, %534, %cst_115 [1] : vector<2x128xf32> to vector<2xf32>
    %536 = vector.shape_cast %535 : vector<2xf32> to vector<2x1xf32>
    %537 = math.log %536 : vector<2x1xf32>
    %538 = arith.addf %537, %531 : vector<2x1xf32>
    %539 = vector.broadcast %538 : vector<2x1xf32> to vector<2x128xf32>
    %540 = arith.subf %529, %539 : vector<2x128xf32>
    %541 = vector.broadcast %531 : vector<2x1xf32> to vector<2x128xf32>
    %542 = arith.cmpf oeq, %529, %541 : vector<2x128xf32>
    %c128_i32_116 = arith.constant 128 : i32
    %543 = vector.broadcast %c128_i32_116 : i32 to vector<2x128xi32>
    %544 = arith.select %542, %210, %543 : vector<2x128xi1>, vector<2x128xi32>
    %cst_117 = arith.constant dense<2147483647> : vector<2xi32>
    %545 = vector.multi_reduction <minsi>, %544, %cst_117 [1] : vector<2x128xi32> to vector<2xi32>
    %546 = vector.shape_cast %545 : vector<2xi32> to vector<2x1xi32>
    %547 = vector.broadcast %546 : vector<2x1xi32> to vector<2x16xi32>
    %548 = arith.cmpi eq, %209, %547 : vector<2x16xi32>
    %549 = arith.extui %548 : vector<2x16xi1> to vector<2x16xi32>
    %550 = arith.sitofp %549 : vector<2x16xi32> to vector<2x16xf32>
    %cst_118 = arith.constant dense<0.000000e+00> : vector<2x384xf32>
    %551 = tpu.matmul %550, %203, %cst_118 {dimension_numbers = #tpu.dot_dimension_numbers<[1], [0], [0], [1], [0, 0, 1, 1], [], []>} : vector<2x16xf32>, vector<16x384xf32>, vector<2x384xf32> -> vector<2x384xf32>
    %cst_119 = arith.constant dense<0.000000e+00> : vector<2x384xf32>
    %552 = tpu.matmul %526, %204, %cst_119 {dimension_numbers = #tpu.dot_dimension_numbers<[1], [0], [0], [1], [0, 0, 1, 1], [], []>} : vector<2x128xf32>, vector<128x384xf32>, vector<2x384xf32> -> vector<2x384xf32>
    %553 = vector.broadcast %205 : vector<1x384xf32> to vector<2x384xf32>
    %554 = arith.addf %552, %553 : vector<2x384xf32>
    %555 = vector.extract_strided_slice %551 {offsets = [0, 0], sizes = [2, 256], strides = [1, 1]} : vector<2x384xf32> to vector<2x256xf32>
    %556 = vector.extract_strided_slice %554 {offsets = [0, 0], sizes = [2, 256], strides = [1, 1]} : vector<2x384xf32> to vector<2x256xf32>
    %557 = arith.addf %555, %556 : vector<2x256xf32>
    %558 = arith.negf %557 : vector<2x256xf32>
    %559 = math.exp %558 : vector<2x256xf32>
    %cst_120 = arith.constant 1.000000e+00 : f32
    %560 = vector.broadcast %cst_120 : f32 to vector<2x256xf32>
    %561 = arith.addf %560, %559 : vector<2x256xf32>
    %562 = arith.divf %560, %561 : vector<2x256xf32>
    %563 = vector.extract_strided_slice %562 {offsets = [0, 0], sizes = [2, 128], strides = [1, 1]} : vector<2x256xf32> to vector<2x128xf32>
    %564 = vector.extract_strided_slice %562 {offsets = [0, 128], sizes = [2, 128], strides = [1, 1]} : vector<2x256xf32> to vector<2x128xf32>
    %565 = vector.extract_strided_slice %551 {offsets = [0, 256], sizes = [2, 128], strides = [1, 1]} : vector<2x384xf32> to vector<2x128xf32>
    %566 = vector.extract_strided_slice %554 {offsets = [0, 256], sizes = [2, 128], strides = [1, 1]} : vector<2x384xf32> to vector<2x128xf32>
    %567 = arith.mulf %563, %566 : vector<2x128xf32>
    %568 = arith.addf %565, %567 : vector<2x128xf32>
    %569 = math.tanh %568 : vector<2x128xf32>
    %cst_121 = arith.constant 1.000000e+00 : f32
    %570 = vector.broadcast %cst_121 : f32 to vector<2x128xf32>
    %571 = arith.subf %570, %564 : vector<2x128xf32>
    %572 = arith.mulf %571, %569 : vector<2x128xf32>
    %573 = arith.mulf %564, %526 : vector<2x128xf32>
    %574 = arith.addf %572, %573 : vector<2x128xf32>
    %cst_122 = arith.constant dense<0.000000e+00> : vector<2x128xf32>
    %575 = tpu.matmul %574, %206, %cst_122 {dimension_numbers = #tpu.dot_dimension_numbers<[1], [0], [0], [1], [0, 0, 1, 1], [], []>} : vector<2x128xf32>, vector<128x128xf32>, vector<2x128xf32> -> vector<2x128xf32>
    %576 = vector.broadcast %207 : vector<1x128xf32> to vector<2x128xf32>
    %577 = arith.addf %575, %576 : vector<2x128xf32>
    %cst_123 = arith.constant dense<0xFF800000> : vector<2xf32>
    %578 = vector.multi_reduction <maximumf>, %577, %cst_123 [1] : vector<2x128xf32> to vector<2xf32>
    %579 = vector.shape_cast %578 : vector<2xf32> to vector<2x1xf32>
    %580 = vector.broadcast %579 : vector<2x1xf32> to vector<2x128xf32>
    %581 = arith.subf %577, %580 : vector<2x128xf32>
    %582 = math.exp %581 : vector<2x128xf32>
    %cst_124 = arith.constant dense<0.000000e+00> : vector<2xf32>
    %583 = vector.multi_reduction <add>, %582, %cst_124 [1] : vector<2x128xf32> to vector<2xf32>
    %584 = vector.shape_cast %583 : vector<2xf32> to vector<2x1xf32>
    %585 = math.log %584 : vector<2x1xf32>
    %586 = arith.addf %585, %579 : vector<2x1xf32>
    %587 = vector.broadcast %586 : vector<2x1xf32> to vector<2x128xf32>
    %588 = arith.subf %577, %587 : vector<2x128xf32>
    %589 = tpu.concatenate %252, %300, %348, %396, %444, %492, %540, %588 in 1 : vector<2x128xf32>, vector<2x128xf32>, vector<2x128xf32>, vector<2x128xf32>, vector<2x128xf32>, vector<2x128xf32>, vector<2x128xf32>, vector<2x128xf32> -> vector<2x1024xf32>
    %c0_125 = arith.constant 0 : index
    %c0_126 = arith.constant 0 : index
    %590 = vector.load %arg10[%c0_125, %c0_126] : memref<2x1024xf32, #tpu.memory_space<vmem>>, vector<2x1024xf32>
    tpu.vector_store %arg10[%c0_125, %c0_126], %589 {strides = array<i32>} : memref<2x1024xf32, #tpu.memory_space<vmem>>, vector<2x1024xf32>,
    return
  }
  func.func @transform_0(%arg0: i32) -> (i32, i32, i32) {
    %c0_i32 = arith.constant 0 : i32
    %c0_i32_0 = arith.constant 0 : i32
    %c0_i32_1 = arith.constant 0 : i32
    %c0_i32_2 = arith.constant 0 : i32
    return %c0_i32, %c0_i32_0, %c0_i32_1 : i32, i32, i32
  }
  func.func @transform_1(%arg0: i32) -> (i32, i32) {
    %c0_i32 = arith.constant 0 : i32
    %c0_i32_0 = arith.constant 0 : i32
    %c0_i32_1 = arith.constant 0 : i32
    return %c0_i32, %c0_i32_0 : i32, i32
  }
  func.func @transform_2(%arg0: i32) -> (i32, i32) {
    %c0_i32 = arith.constant 0 : i32
    %c0_i32_0 = arith.constant 0 : i32
    %c0_i32_1 = arith.constant 0 : i32
    return %c0_i32, %c0_i32_0 : i32, i32
  }
  func.func @transform_3(%arg0: i32) -> (i32, i32) {
    %c0_i32 = arith.constant 0 : i32
    %c0_i32_0 = arith.constant 0 : i32
    %c0_i32_1 = arith.constant 0 : i32
    return %c0_i32, %c0_i32_0 : i32, i32
  }
  func.func @transform_4(%arg0: i32) -> (i32, i32) {
    %c0_i32 = arith.constant 0 : i32
    %c0_i32_0 = arith.constant 0 : i32
    %c0_i32_1 = arith.constant 0 : i32
    return %c0_i32, %c0_i32_0 : i32, i32
  }
  func.func @transform_5(%arg0: i32) -> (i32, i32) {
    %c0_i32 = arith.constant 0 : i32
    %c0_i32_0 = arith.constant 0 : i32
    %c0_i32_1 = arith.constant 0 : i32
    return %c0_i32, %c0_i32_0 : i32, i32
  }
  func.func @transform_6(%arg0: i32) -> (i32, i32) {
    %c0_i32 = arith.constant 0 : i32
    %c0_i32_0 = arith.constant 0 : i32
    %c0_i32_1 = arith.constant 0 : i32
    return %c0_i32, %c0_i32_0 : i32, i32
  }
  func.func @transform_7(%arg0: i32) -> (i32, i32) {
    %c0_i32 = arith.constant 0 : i32
    %c0_i32_0 = arith.constant 0 : i32
    %c0_i32_1 = arith.constant 0 : i32
    return %c0_i32, %c0_i32_0 : i32, i32
  }
  func.func @transform_8(%arg0: i32) -> (i32, i32) {
    %c0_i32 = arith.constant 0 : i32
    %c0_i32_0 = arith.constant 0 : i32
    %c0_i32_1 = arith.constant 0 : i32
    return %c0_i32, %c0_i32_0 : i32, i32
  }
  func.func @transform_9(%arg0: i32) -> (i32, i32) {
    %c0_i32 = arith.constant 0 : i32
    %c0_i32_0 = arith.constant 0 : i32
    %c0_i32_1 = arith.constant 0 : i32
    return %c0_i32, %c0_i32_0 : i32, i32
  }
}

</mosaic_0001>

<llo_original>
// kernel: seq2seq_forward.1
$region0: #{seq2seq_forward.1}
  #allocation0 [shape = 'u32[]', space=smem, size = 0x4, offset = 0x4, fixed_abs, tag = 'smem constant byte address 0x4 - core index']
  #allocation1 [shape = 'u32[144,128]{1,0:T(1,128)}', space=vmem, size = 0x12000, scoped, tag = 'internal scratch']
  %s0 = inlined_call_operand.vmem [shape: f32[8,2,384], index: 0, kind: input, shape index: {}]
  %s1 = inlined_call_operand.vmem [shape: s32[2,1], index: 1, kind: input, shape index: {}]
  %s2 = inlined_call_operand.vmem [shape: f32[128,384], index: 2, kind: input, shape index: {}]
  %s3 = inlined_call_operand.vmem [shape: f32[1,384], index: 3, kind: input, shape index: {}]
  %s4 = inlined_call_operand.vmem [shape: f32[16,384], index: 4, kind: input, shape index: {}]
  %s5 = inlined_call_operand.hbm [shape: f32[128,384], index: 5, kind: input, shape index: {}]
  %s6 = inlined_call_operand.vmem [shape: f32[1,384], index: 6, kind: input, shape index: {}]
  %s7 = inlined_call_operand.vmem [shape: f32[128,128], index: 7, kind: input, shape index: {}]
  %s8 = inlined_call_operand.vmem [shape: f32[1,128], index: 8, kind: input, shape index: {}]
  %s9 = inlined_call_operand.vmem [shape: f32[2,1024], index: 9, kind: output, shape index: {}]
  %s10 = sld [smem:[#allocation0]]
  $region50: #{seq2seq_forward.1} parent=0
    _
  %s12 = ssub.s32 1, %s10
  %s13 = scalar_select 0, %s12, %s10
  $region1: #{seq2seq_forward.1} parent=0
    #allocation2 [shape = 'u8[196608]{0}', space=vmem, size = 0x30000, scoped, tag = 'input window, operand 5, single buffered']
    #allocation3 [shape = 's32[1]{0}', space=sflag, size = 0x4, scoped, tag = 'scoped memory for seq2seq_forward.1']
    %14 = vsyncpa [#allocation3], 0
    // Predicated region
    $region2: #{seq2seq_forward.1} parent=1 // pred_check
      _
    $region3: #{seq2seq_forward.1} parent=1 // pred_check_branch
      %16 = sbr.rel (0) target = $region5
    $region4: #{seq2seq_forward.1} parent=1 // pred_region
      _
    $region5: #{seq2seq_forward.1} parent=1 // pred_fallthru
      _
    // Predicated region
    $region6: #{seq2seq_forward.1} parent=1 // pred_check
      _
    $region7: #{seq2seq_forward.1} parent=1 // pred_check_branch
      %18 = sbr.rel (0) target = $region9
    $region8: #{seq2seq_forward.1} parent=1 // pred_region
      _
    $region9: #{seq2seq_forward.1} parent=1 // pred_fallthru
      _
    // Predicated region
    $region10: #{seq2seq_forward.1} parent=1 // pred_check
      _
    $region11: #{seq2seq_forward.1} parent=1 // pred_check_branch
      %20 = sbr.rel (0) target = $region13
    $region12: #{seq2seq_forward.1} parent=1 // pred_region
      _
    $region13: #{seq2seq_forward.1} parent=1 // pred_fallthru
      _
    // Predicated region
    $region14: #{seq2seq_forward.1} parent=1 // pred_check
      _
    $region15: #{seq2seq_forward.1} parent=1 // pred_check_branch
      %22 = sbr.rel (0) target = $region17
    $region16: #{seq2seq_forward.1} parent=1 // pred_region
      _
    $region17: #{seq2seq_forward.1} parent=1 // pred_fallthru
      _
    // Predicated region
    $region18: #{seq2seq_forward.1} parent=1 // pred_check
      _
    $region19: #{seq2seq_forward.1} parent=1 // pred_check_branch
      %24 = sbr.rel (0) target = $region21
    $region20: #{seq2seq_forward.1} parent=1 // pred_region
      _
    $region21: #{seq2seq_forward.1} parent=1 // pred_fallthru
      _
    // Predicated region
    $region22: #{seq2seq_forward.1} parent=1 // pred_check
      _
    $region23: #{seq2seq_forward.1} parent=1 // pred_check_branch
      %26 = sbr.rel (0) target = $region25
    $region24: #{seq2seq_forward.1} parent=1 // pred_region
      %s28 = ssub.s32 6144, 6144
      %29 = vsyncadd [#allocation3], %s28
      %s30 = sshll.u32 [#allocation2], 4
      %s31 = int_to_ptr.vmem [resolvable:$true] %s30
      %36 = dma.hbm_to_vmem [thread:$0]  %s5, 6144, %s31, [#allocation3], 384, 384, 24
    $region25: #{seq2seq_forward.1} parent=1 // pred_fallthru
      _
    // Predicated region
    $region26: #{seq2seq_forward.1} parent=1 // pred_check
      _
    $region27: #{seq2seq_forward.1} parent=1 // pred_check_branch
      %38 = sbr.rel (0) target = $region29
    $region28: #{seq2seq_forward.1} parent=1 // pred_region
      _
    $region29: #{seq2seq_forward.1} parent=1 // pred_fallthru
      _
    // Predicated region
    $region30: #{seq2seq_forward.1} parent=1 // pred_check
      _
    $region31: #{seq2seq_forward.1} parent=1 // pred_check_branch
      %40 = sbr.rel (0) target = $region33
    $region32: #{seq2seq_forward.1} parent=1 // pred_region
      _
    $region33: #{seq2seq_forward.1} parent=1 // pred_fallthru
      _
    // Predicated region
    $region34: #{seq2seq_forward.1} parent=1 // pred_check
      _
    $region35: #{seq2seq_forward.1} parent=1 // pred_check_branch
      %42 = sbr.rel (0) target = $region37
    $region36: #{seq2seq_forward.1} parent=1 // pred_region
      _
    $region37: #{seq2seq_forward.1} parent=1 // pred_fallthru
      _
    // Predicated region
    $region38: #{seq2seq_forward.1} parent=1 // pred_check
      _
    $region39: #{seq2seq_forward.1} parent=1 // pred_check_branch
      %44 = sbr.rel (0) target = $region41
    $region40: #{seq2seq_forward.1} parent=1 // pred_region
      %45 = dma.done [#allocation3], 6144
    $region41: #{seq2seq_forward.1} parent=1 // pred_fallthru
      _
    %v46 = vld [vmem:[%s2] sm:$0xff]
    %v47 = vld [vmem:[%s2 + $0x8] sm:$0xff]
    %v48 = vld [vmem:[%s2 + $0x10] sm:$0xff]
    %v49 = vld [vmem:[%s2 + $0x18] sm:$0xff]
    %v50 = vld [vmem:[%s2 + $0x20] sm:$0xff]
    %v51 = vld [vmem:[%s2 + $0x28] sm:$0xff]
    %v52 = vld [vmem:[%s2 + $0x30] sm:$0xff]
    %v53 = vld [vmem:[%s2 + $0x38] sm:$0xff]
    %v54 = vld [vmem:[%s2 + $0x40] sm:$0xff]
    %v55 = vld [vmem:[%s2 + $0x48] sm:$0xff]
    %v56 = vld [vmem:[%s2 + $0x50] sm:$0xff]
    %v57 = vld [vmem:[%s2 + $0x58] sm:$0xff]
    %v58 = vld [vmem:[%s2 + $0x60] sm:$0xff]
    %v59 = vld [vmem:[%s2 + $0x68] sm:$0xff]
    %v60 = vld [vmem:[%s2 + $0x70] sm:$0xff]
    %v61 = vld [vmem:[%s2 + $0x78] sm:$0xff]
    %v62 = vld [vmem:[%s2 + $0x80] sm:$0xff]
    %v63 = vld [vmem:[%s2 + $0x88] sm:$0xff]
    %v64 = vld [vmem:[%s2 + $0x90] sm:$0xff]
    %v65 = vld [vmem:[%s2 + $0x98] sm:$0xff]
    %v66 = vld [vmem:[%s2 + $0xa0] sm:$0xff]
    %v67 = vld [vmem:[%s2 + $0xa8] sm:$0xff]
    %v68 = vld [vmem:[%s2 + $0xb0] sm:$0xff]
    %v69 = vld [vmem:[%s2 + $0xb8] sm:$0xff]
    %v70 = vld [vmem:[%s2 + $0xc0] sm:$0xff]
    %v71 = vld [vmem:[%s2 + $0xc8] sm:$0xff]
    %v72 = vld [vmem:[%s2 + $0xd0] sm:$0xff]
    %v73 = vld [vmem:[%s2 + $0xd8] sm:$0xff]
    %v74 = vld [vmem:[%s2 + $0xe0] sm:$0xff]
    %v75 = vld [vmem:[%s2 + $0xe8] sm:$0xff]
    %v76 = vld [vmem:[%s2 + $0xf0] sm:$0xff]
    %v77 = vld [vmem:[%s2 + $0xf8] sm:$0xff]
    %v78 = vld [vmem:[%s2 + $0x100] sm:$0xff]
    %v79 = vld [vmem:[%s2 + $0x108] sm:$0xff]
    %v80 = vld [vmem:[%s2 + $0x110] sm:$0xff]
    %v81 = vld [vmem:[%s2 + $0x118] sm:$0xff]
    %v82 = vld [vmem:[%s2 + $0x120] sm:$0xff]
    %v83 = vld [vmem:[%s2 + $0x128] sm:$0xff]
    %v84 = vld [vmem:[%s2 + $0x130] sm:$0xff]
    %v85 = vld [vmem:[%s2 + $0x138] sm:$0xff]
    %v86 = vld [vmem:[%s2 + $0x140] sm:$0xff]
    %v87 = vld [vmem:[%s2 + $0x148] sm:$0xff]
    %v88 = vld [vmem:[%s2 + $0x150] sm:$0xff]
    %v89 = vld [vmem:[%s2 + $0x158] sm:$0xff]
    %v90 = vld [vmem:[%s2 + $0x160] sm:$0xff]
    %v91 = vld [vmem:[%s2 + $0x168] sm:$0xff]
    %v92 = vld [vmem:[%s2 + $0x170] sm:$0xff]
    %v93 = vld [vmem:[%s2 + $0x178] sm:$0xff]
    %v94 = vld [vmem:[%s3] sm:$0x7]
    %v95 = vld [vmem:[%s0] sm:$0x3f]
    %v97 = vlaneseq
    %v98 = vshrl.u32 %v97, 7
    %v99 = vsub.s32 0, %v98
    %v100 = vrot.slane %v94, %v99
    %v101 = vlaneseq
    %v102 = vshrl.u32 %v101, 7
    %v103 = vsub.s32 1, %v102
    %v104 = vrot.slane %v94, %v103
    %v105 = vlaneseq
    %v106 = vshrl.u32 %v105, 7
    %v107 = vsub.s32 2, %v106
    %v108 = vrot.slane %v94, %v107
    %112 = vmatprep.subr.mxu0 %v47
    %113 = vmatpush1.msra.mxu0 %v46
    %114 = vmatprep.subr.mxu0 %v50
    %115 = vmatpush1.msra.mxu0 %v49
    %116 = vmatprep.subr.mxu0 %v53
    %117 = vmatpush1.msra.mxu0 %v52
    %118 = vmatprep.subr.mxu0 %v56
    %119 = vmatpush1.msra.mxu0 %v55
    %120 = vmatprep.subr.mxu0 %v59
    %121 = vmatpush1.msra.mxu0 %v58
    %122 = vmatprep.subr.mxu0 %v62
    %123 = vmatpush1.msra.mxu0 %v61
    %124 = vmatprep.subr.mxu0 %v65
    %125 = vmatpush1.msra.mxu0 %v64
    %126 = vmatprep.subr.mxu0 %v68
    %127 = vmatpush1.msra.mxu0 %v67
    %128 = vmatprep.subr.mxu0 %v71
    %129 = vmatpush1.msra.mxu0 %v70
    %130 = vmatprep.subr.mxu0 %v74
    %131 = vmatpush1.msra.mxu0 %v73
    %132 = vmatprep.subr.mxu0 %v77
    %133 = vmatpush1.msra.mxu0 %v76
    %134 = vmatprep.subr.mxu0 %v80
    %135 = vmatpush1.msra.mxu0 %v79
    %136 = vmatprep.subr.mxu0 %v83
    %137 = vmatpush1.msra.mxu0 %v82
    %138 = vmatprep.subr.mxu0 %v86
    %139 = vmatpush1.msra.mxu0 %v85
    %140 = vmatprep.subr.mxu0 %v89
    %141 = vmatpush1.msra.mxu0 %v88
    %142 = vmatprep.subr.mxu0 %v92
    %143 = vmatpush1.msra.mxu0 %v91
    %144 = vmatprep.subr.mxu0 0.0
    %145 = vmatpush1.msra.mxu0 0.0
    %146 = vmatprep.subr.mxu0 0.0
    %147 = vmatpush1.msra.mxu0 0.0
    %148 = vmatprep.subr.mxu0 0.0
    %149 = vmatpush1.msra.mxu0 0.0
    %150 = vmatprep.subr.mxu0 0.0
    %151 = vmatpush1.msra.mxu0 0.0
    %152 = vmatprep.subr.mxu0 0.0
    %153 = vmatpush1.msra.mxu0 0.0
    %154 = vmatprep.subr.mxu0 0.0
    %155 = vmatpush1.msra.mxu0 0.0
    %156 = vmatprep.subr.mxu0 0.0
    %157 = vmatpush1.msra.mxu0 0.0
    %158 = vmatprep.subr.mxu0 0.0
    %159 = vmatpush1.msra.mxu0 0.0
    %160 = vmatprep.subr.mxu0 0.0
    %161 = vmatpush1.msra.mxu0 0.0
    %162 = vmatprep.subr.mxu0 0.0
    %163 = vmatpush1.msra.mxu0 0.0
    %164 = vmatprep.subr.mxu0 0.0
    %165 = vmatpush1.msra.mxu0 0.0
    %166 = vmatprep.subr.mxu0 0.0
    %167 = vmatpush1.msra.mxu0 0.0
    %168 = vmatprep.subr.mxu0 0.0
    %169 = vmatpush1.msra.mxu0 0.0
    %170 = vmatprep.subr.mxu0 0.0
    %171 = vmatpush1.msra.mxu0 0.0
    %172 = vmatprep.subr.mxu0 0.0
    %173 = vmatpush1.msra.mxu0 0.0
    %174 = vmatprep.subr.mxu0 0.0
    %175 = vmatpush1.msra.mxu0 0.0
    %176 = vmatprep.mubr.f32.mxu0 0.0
    %177 = vmatmul.mubr.f32.gmra.mrb[0].mxu0 0.0
    %v178 = vpop.f32.mrb[0].mxu0
    %v179 = vadd.f32 %v100, %v178
    %v180 = vpop.f32.mrb[0].mxu0
    %v181 = vadd.f32 %v104, %v180
    %182 = vdwg.mxu0
    %183 = vmatprep.subr.mxu0 0.0
    %184 = vmatpush1.msra.mxu0 %v48
    %185 = vmatprep.subr.mxu0 0.0
    %186 = vmatpush1.msra.mxu0 %v51
    %187 = vmatprep.subr.mxu0 0.0
    %188 = vmatpush1.msra.mxu0 %v54
    %189 = vmatprep.subr.mxu0 0.0
    %190 = vmatpush1.msra.mxu0 %v57
    %191 = vmatprep.subr.mxu0 0.0
    %192 = vmatpush1.msra.mxu0 %v60
    %193 = vmatprep.subr.mxu0 0.0
    %194 = vmatpush1.msra.mxu0 %v63
    %195 = vmatprep.subr.mxu0 0.0
    %196 = vmatpush1.msra.mxu0 %v66
    %197 = vmatprep.subr.mxu0 0.0
    %198 = vmatpush1.msra.mxu0 %v69
    %199 = vmatprep.subr.mxu0 0.0
    %200 = vmatpush1.msra.mxu0 %v72
    %201 = vmatprep.subr.mxu0 0.0
    %202 = vmatpush1.msra.mxu0 %v75
    %203 = vmatprep.subr.mxu0 0.0
    %204 = vmatpush1.msra.mxu0 %v78
    %205 = vmatprep.subr.mxu0 0.0
    %206 = vmatpush1.msra.mxu0 %v81
    %207 = vmatprep.subr.mxu0 0.0
    %208 = vmatpush1.msra.mxu0 %v84
    %209 = vmatprep.subr.mxu0 0.0
    %210 = vmatpush1.msra.mxu0 %v87
    %211 = vmatprep.subr.mxu0 0.0
    %212 = vmatpush1.msra.mxu0 %v90
    %213 = vmatprep.subr.mxu0 0.0
    %214 = vmatpush1.msra.mxu0 %v93
    %215 = vmatprep.subr.mxu0 0.0
    %216 = vmatpush1.msra.mxu0 0.0
    %217 = vmatprep.subr.mxu0 0.0
    %218 = vmatpush1.msra.mxu0 0.0
    %219 = vmatprep.subr.mxu0 0.0
    %220 = vmatpush1.msra.mxu0 0.0
    %221 = vmatprep.subr.mxu0 0.0
    %222 = vmatpush1.msra.mxu0 0.0
    %223 = vmatprep.subr.mxu0 0.0
    %224 = vmatpush1.msra.mxu0 0.0
    %225 = vmatprep.subr.mxu0 0.0
    %226 = vmatpush1.msra.mxu0 0.0
    %227 = vmatprep.subr.mxu0 0.0
    %228 = vmatpush1.msra.mxu0 0.0
    %229 = vmatprep.subr.mxu0 0.0
    %230 = vmatpush1.msra.mxu0 0.0
    %231 = vmatprep.subr.mxu0 0.0
    %232 = vmatpush1.msra.mxu0 0.0
    %233 = vmatprep.subr.mxu0 0.0
    %234 = vmatpush1.msra.mxu0 0.0
    %235 = vmatprep.subr.mxu0 0.0
    %236 = vmatpush1.msra.mxu0 0.0
    %237 = vmatprep.subr.mxu0 0.0
    %238 = vmatpush1.msra.mxu0 0.0
    %239 = vmatprep.subr.mxu0 0.0
    %240 = vmatpush1.msra.mxu0 0.0
    %241 = vmatprep.subr.mxu0 0.0
    %242 = vmatpush1.msra.mxu0 0.0
    %243 = vmatprep.subr.mxu0 0.0
    %244 = vmatpush1.msra.mxu0 0.0
    %245 = vmatprep.subr.mxu0 0.0
    %246 = vmatpush1.msra.mxu0 0.0
    %247 = vmatprep.mubr.f32.mxu0 0.0
    %248 = vmatmul.mubr.f32.gmra.mrb[0].mxu0 0.0
    %v249 = vpop.f32.mrb[0].mxu0
    %v250 = vadd.f32 %v108, %v249
    %v251 = vpop.f32.mrb[0].mxu0
    %252 = vdwg.mxu0
    %v255 = vcombine.low %v179, %v181
    %v257 = vunpack.c.l.s4 1983009808
    %v258 = vunpack.c.0.s8 %v257
    %v259 = vlaneseq
    %v260 = vshrl.u32 %v259, 7
    %v261 = vsub.s32 %v258, %v260
    %v262 = vrot.slane %v255, %v261
    %v264 = vadd.f32 %v95, %v262
    %v265 = vxor.u32 %v264, 2147483648
    %v266 = vmul.f32 %v265, 1.442695
    %v267 = vpow.pop %v266
    %v268 = vadd.f32 %v267, 1.0
    %v269 = vrcp.pop %v268
    %v270 = vmul.f32 1.0, %v269
    %v271 = vmul.f32 %v270, %v250
    %v273 = vrot.slane %v95, 4
    %v275 = vadd.f32 %v273, %v271
    %v276 = vtanh.pop %v275
    %v278 = vrot.slane %v270, 2
    %v280 = vsub.f32 1.0, %v278
    %v281 = vmul.f32 %v280, %v276
    %v282 = vmul.f32 %v278, 0.0
    %v283 = vadd.f32 %v281, %v282
    %s284 = scalar_lea.vmem %s0, 6
    %v285 = vld [vmem:[%s284] sm:$0x3f]
    %286 = vmatprep.subr.mxu0 %v47
    %287 = vmatpush1.msra.mxu0 %v46
    %288 = vmatprep.subr.mxu0 %v50
    %289 = vmatpush1.msra.mxu0 %v49
    %290 = vmatprep.subr.mxu0 %v53
    %291 = vmatpush1.msra.mxu0 %v52
    %292 = vmatprep.subr.mxu0 %v56
    %293 = vmatpush1.msra.mxu0 %v55
    %294 = vmatprep.subr.mxu0 %v59
    %295 = vmatpush1.msra.mxu0 %v58
    %296 = vmatprep.subr.mxu0 %v62
    %297 = vmatpush1.msra.mxu0 %v61
    %298 = vmatprep.subr.mxu0 %v65
    %299 = vmatpush1.msra.mxu0 %v64
    %300 = vmatprep.subr.mxu0 %v68
    %301 = vmatpush1.msra.mxu0 %v67
    %302 = vmatprep.subr.mxu0 %v71
    %303 = vmatpush1.msra.mxu0 %v70
    %304 = vmatprep.subr.mxu0 %v74
    %305 = vmatpush1.msra.mxu0 %v73
    %306 = vmatprep.subr.mxu0 %v77
    %307 = vmatpush1.msra.mxu0 %v76
    %308 = vmatprep.subr.mxu0 %v80
    %309 = vmatpush1.msra.mxu0 %v79
    %310 = vmatprep.subr.mxu0 %v83
    %311 = vmatpush1.msra.mxu0 %v82
    %312 = vmatprep.subr.mxu0 %v86
    %313 = vmatpush1.msra.mxu0 %v85
    %314 = vmatprep.subr.mxu0 %v89
    %315 = vmatpush1.msra.mxu0 %v88
    %316 = vmatprep.subr.mxu0 %v92
    %317 = vmatpush1.msra.mxu0 %v91
    %318 = vmatprep.subr.mxu0 0.0
    %319 = vmatpush1.msra.mxu0 0.0
    %320 = vmatprep.subr.mxu0 0.0
    %321 = vmatpush1.msra.mxu0 0.0
    %322 = vmatprep.subr.mxu0 0.0
    %323 = vmatpush1.msra.mxu0 0.0
    %324 = vmatprep.subr.mxu0 0.0
    %325 = vmatpush1.msra.mxu0 0.0
    %326 = vmatprep.subr.mxu0 0.0
    %327 = vmatpush1.msra.mxu0 0.0
    %328 = vmatprep.subr.mxu0 0.0
    %329 = vmatpush1.msra.mxu0 0.0
    %330 = vmatprep.subr.mxu0 0.0
    %331 = vmatpush1.msra.mxu0 0.0
    %332 = vmatprep.subr.mxu0 0.0
    %333 = vmatpush1.msra.mxu0 0.0
    %334 = vmatprep.subr.mxu0 0.0
    %335 = vmatpush1.msra.mxu0 0.0
    %336 = vmatprep.subr.mxu0 0.0
    %337 = vmatpush1.msra.mxu0 0.0
    %338 = vmatprep.subr.mxu0 0.0
    %339 = vmatpush1.msra.mxu0 0.0
    %340 = vmatprep.subr.mxu0 0.0
    %341 = vmatpush1.msra.mxu0 0.0
    %342 = vmatprep.subr.mxu0 0.0
    %343 = vmatpush1.msra.mxu0 0.0
    %344 = vmatprep.subr.mxu0 0.0
    %345 = vmatpush1.msra.mxu0 0.0
    %346 = vmatprep.subr.mxu0 0.0
    %347 = vmatpush1.msra.mxu0 0.0
    %348 = vmatprep.subr.mxu0 0.0
    %349 = vmatpush1.msra.mxu0 0.0
    %350 = vmatprep.mubr.f32.mxu0 0.0
    %351 = vmatmul.mubr.f32.gmra.mrb[0].mxu0 %v283
    %v352 = vpop.f32.mrb[0].mxu0
    %v353 = vadd.f32 %v100, %v352
    %v354 = vpop.f32.mrb[0].mxu0
    %v355 = vadd.f32 %v104, %v354
    %356 = vdwg.mxu0
    %357 = vmatprep.subr.mxu0 0.0
    %358 = vmatpush1.msra.mxu0 %v48
    %359 = vmatprep.subr.mxu0 0.0
    %360 = vmatpush1.msra.mxu0 %v51
    %361 = vmatprep.subr.mxu0 0.0
    %362 = vmatpush1.msra.mxu0 %v54
    %363 = vmatprep.subr.mxu0 0.0
    %364 = vmatpush1.msra.mxu0 %v57
    %365 = vmatprep.subr.mxu0 0.0
    %366 = vmatpush1.msra.mxu0 %v60
    %367 = vmatprep.subr.mxu0 0.0
    %368 = vmatpush1.msra.mxu0 %v63
    %369 = vmatprep.subr.mxu0 0.0
    %370 = vmatpush1.msra.mxu0 %v66
    %371 = vmatprep.subr.mxu0 0.0
    %372 = vmatpush1.msra.mxu0 %v69
    %373 = vmatprep.subr.mxu0 0.0
    %374 = vmatpush1.msra.mxu0 %v72
    %375 = vmatprep.subr.mxu0 0.0
    %376 = vmatpush1.msra.mxu0 %v75
    %377 = vmatprep.subr.mxu0 0.0
    %378 = vmatpush1.msra.mxu0 %v78
    %379 = vmatprep.subr.mxu0 0.0
    %380 = vmatpush1.msra.mxu0 %v81
    %381 = vmatprep.subr.mxu0 0.0
    %382 = vmatpush1.msra.mxu0 %v84
    %383 = vmatprep.subr.mxu0 0.0
    %384 = vmatpush1.msra.mxu0 %v87
    %385 = vmatprep.subr.mxu0 0.0
    %386 = vmatpush1.msra.mxu0 %v90
    %387 = vmatprep.subr.mxu0 0.0
    %388 = vmatpush1.msra.mxu0 %v93
    %389 = vmatprep.subr.mxu0 0.0
    %390 = vmatpush1.msra.mxu0 0.0
    %391 = vmatprep.subr.mxu0 0.0
    %392 = vmatpush1.msra.mxu0 0.0
    %393 = vmatprep.subr.mxu0 0.0
    %394 = vmatpush1.msra.mxu0 0.0
    %395 = vmatprep.subr.mxu0 0.0
    %396 = vmatpush1.msra.mxu0 0.0
    %397 = vmatprep.subr.mxu0 0.0
    %398 = vmatpush1.msra.mxu0 0.0
    %399 = vmatprep.subr.mxu0 0.0
    %400 = vmatpush1.msra.mxu0 0.0
    %401 = vmatprep.subr.mxu0 0.0
    %402 = vmatpush1.msra.mxu0 0.0
    %403 = vmatprep.subr.mxu0 0.0
    %404 = vmatpush1.msra.mxu0 0.0
    %405 = vmatprep.subr.mxu0 0.0
    %406 = vmatpush1.msra.mxu0 0.0
    %407 = vmatprep.subr.mxu0 0.0
    %408 = vmatpush1.msra.mxu0 0.0
    %409 = vmatprep.subr.mxu0 0.0
    %410 = vmatpush1.msra.mxu0 0.0
    %411 = vmatprep.subr.mxu0 0.0
    %412 = vmatpush1.msra.mxu0 0.0
    %413 = vmatprep.subr.mxu0 0.0
    %414 = vmatpush1.msra.mxu0 0.0
    %415 = vmatprep.subr.mxu0 0.0
    %416 = vmatpush1.msra.mxu0 0.0
    %417 = vmatprep.subr.mxu0 0.0
    %418 = vmatpush1.msra.mxu0 0.0
    %419 = vmatprep.subr.mxu0 0.0
    %420 = vmatpush1.msra.mxu0 0.0
    %421 = vmatprep.mubr.f32.mxu0 0.0
    %422 = vmatmul.mubr.f32.gmra.mrb[0].mxu0 %v283
    %v423 = vpop.f32.mrb[0].mxu0
    %v424 = vadd.f32 %v108, %v423
    %v425 = vpop.f32.mrb[0].mxu0
    %426 = vdwg.mxu0
    %v429 = vcombine.low %v353, %v355
    %v431 = vunpack.c.l.s4 1983009808
    %v432 = vunpack.c.0.s8 %v431
    %v433 = vlaneseq
    %v434 = vshrl.u32 %v433, 7
    %v435 = vsub.s32 %v432, %v434
    %v436 = vrot.slane %v429, %v435
    %v438 = vadd.f32 %v285, %v436
    %v439 = vxor.u32 %v438, 2147483648
    %v440 = vmul.f32 %v439, 1.442695
    %v441 = vpow.pop %v440
    %v442 = vadd.f32 %v441, 1.0
    %v443 = vrcp.pop %v442
    %v444 = vmul.f32 1.0, %v443
    %v445 = vmul.f32 %v444, %v424
    %v447 = vrot.slane %v285, 4
    %v449 = vadd.f32 %v447, %v445
    %v450 = vtanh.pop %v449
    %v452 = vrot.slane %v444, 2
    %v454 = vsub.f32 1.0, %v452
    %v455 = vmul.f32 %v454, %v450
    %v456 = vmul.f32 %v452, %v283
    %v457 = vadd.f32 %v455, %v456
    %s458 = scalar_lea.vmem %s0, 12
    %v459 = vld [vmem:[%s458] sm:$0x3f]
    %460 = vmatprep.subr.mxu0 %v47
    %461 = vmatpush1.msra.mxu0 %v46
    %462 = vmatprep.subr.mxu0 %v50
    %463 = vmatpush1.msra.mxu0 %v49
    %464 = vmatprep.subr.mxu0 %v53
    %465 = vmatpush1.msra.mxu0 %v52
    %466 = vmatprep.subr.mxu0 %v56
    %467 = vmatpush1.msra.mxu0 %v55
    %468 = vmatprep.subr.mxu0 %v59
    %469 = vmatpush1.msra.mxu0 %v58
    %470 = vmatprep.subr.mxu0 %v62
    %471 = vmatpush1.msra.mxu0 %v61
    %472 = vmatprep.subr.mxu0 %v65
    %473 = vmatpush1.msra.mxu0 %v64
    %474 = vmatprep.subr.mxu0 %v68
    %475 = vmatpush1.msra.mxu0 %v67
    %476 = vmatprep.subr.mxu0 %v71
    %477 = vmatpush1.msra.mxu0 %v70
    %478 = vmatprep.subr.mxu0 %v74
    %479 = vmatpush1.msra.mxu0 %v73
    %480 = vmatprep.subr.mxu0 %v77
    %481 = vmatpush1.msra.mxu0 %v76
    %482 = vmatprep.subr.mxu0 %v80
    %483 = vmatpush1.msra.mxu0 %v79
    %484 = vmatprep.subr.mxu0 %v83
    %485 = vmatpush1.msra.mxu0 %v82
    %486 = vmatprep.subr.mxu0 %v86
    %487 = vmatpush1.msra.mxu0 %v85
    %488 = vmatprep.subr.mxu0 %v89
    %489 = vmatpush1.msra.mxu0 %v88
    %490 = vmatprep.subr.mxu0 %v92
    %491 = vmatpush1.msra.mxu0 %v91
    %492 = vmatprep.subr.mxu0 0.0
    %493 = vmatpush1.msra.mxu0 0.0
    %494 = vmatprep.subr.mxu0 0.0
    %495 = vmatpush1.msra.mxu0 0.0
    %496 = vmatprep.subr.mxu0 0.0
    %497 = vmatpush1.msra.mxu0 0.0
    %498 = vmatprep.subr.mxu0 0.0
    %499 = vmatpush1.msra.mxu0 0.0
    %500 = vmatprep.subr.mxu0 0.0
    %501 = vmatpush1.msra.mxu0 0.0
    %502 = vmatprep.subr.mxu0 0.0
    %503 = vmatpush1.msra.mxu0 0.0
    %504 = vmatprep.subr.mxu0 0.0
    %505 = vmatpush1.msra.mxu0 0.0
    %506 = vmatprep.subr.mxu0 0.0
    %507 = vmatpush1.msra.mxu0 0.0
    %508 = vmatprep.subr.mxu0 0.0
    %509 = vmatpush1.msra.mxu0 0.0
    %510 = vmatprep.subr.mxu0 0.0
    %511 = vmatpush1.msra.mxu0 0.0
    %512 = vmatprep.subr.mxu0 0.0
    %513 = vmatpush1.msra.mxu0 0.0
    %514 = vmatprep.subr.mxu0 0.0
    %515 = vmatpush1.msra.mxu0 0.0
    %516 = vmatprep.subr.mxu0 0.0
    %517 = vmatpush1.msra.mxu0 0.0
    %518 = vmatprep.subr.mxu0 0.0
    %519 = vmatpush1.msra.mxu0 0.0
    %520 = vmatprep.subr.mxu0 0.0
    %521 = vmatpush1.msra.mxu0 0.0
    %522 = vmatprep.subr.mxu0 0.0
    %523 = vmatpush1.msra.mxu0 0.0
    %524 = vmatprep.mubr.f32.mxu0 0.0
    %525 = vmatmul.mubr.f32.gmra.mrb[0].mxu0 %v457
    %v526 = vpop.f32.mrb[0].mxu0
    %v527 = vadd.f32 %v100, %v526
    %v528 = vpop.f32.mrb[0].mxu0
    %v529 = vadd.f32 %v104, %v528
    %530 = vdwg.mxu0
    %531 = vmatprep.subr.mxu0 0.0
    %532 = vmatpush1.msra.mxu0 %v48
    %533 = vmatprep.subr.mxu0 0.0
    %534 = vmatpush1.msra.mxu0 %v51
    %535 = vmatprep.subr.mxu0 0.0
    %536 = vmatpush1.msra.mxu0 %v54
    %537 = vmatprep.subr.mxu0 0.0
    %538 = vmatpush1.msra.mxu0 %v57
    %539 = vmatprep.subr.mxu0 0.0
    %540 = vmatpush1.msra.mxu0 %v60
    %541 = vmatprep.subr.mxu0 0.0
    %542 = vmatpush1.msra.mxu0 %v63
    %543 = vmatprep.subr.mxu0 0.0
    %544 = vmatpush1.msra.mxu0 %v66
    %545 = vmatprep.subr.mxu0 0.0
    %546 = vmatpush1.msra.mxu0 %v69
    %547 = vmatprep.subr.mxu0 0.0
    %548 = vmatpush1.msra.mxu0 %v72
    %549 = vmatprep.subr.mxu0 0.0
    %550 = vmatpush1.msra.mxu0 %v75
    %551 = vmatprep.subr.mxu0 0.0
    %552 = vmatpush1.msra.mxu0 %v78
    %553 = vmatprep.subr.mxu0 0.0
    %554 = vmatpush1.msra.mxu0 %v81
    %555 = vmatprep.subr.mxu0 0.0
    %556 = vmatpush1.msra.mxu0 %v84
    %557 = vmatprep.subr.mxu0 0.0
    %558 = vmatpush1.msra.mxu0 %v87
    %559 = vmatprep.subr.mxu0 0.0
    %560 = vmatpush1.msra.mxu0 %v90
    %561 = vmatprep.subr.mxu0 0.0
    %562 = vmatpush1.msra.mxu0 %v93
    %563 = vmatprep.subr.mxu0 0.0
    %564 = vmatpush1.msra.mxu0 0.0
    %565 = vmatprep.subr.mxu0 0.0
    %566 = vmatpush1.msra.mxu0 0.0
    %567 = vmatprep.subr.mxu0 0.0
    %568 = vmatpush1.msra.mxu0 0.0
    %569 = vmatprep.subr.mxu0 0.0
    %570 = vmatpush1.msra.mxu0 0.0
    %571 = vmatprep.subr.mxu0 0.0
    %572 = vmatpush1.msra.mxu0 0.0
    %573 = vmatprep.subr.mxu0 0.0
    %574 = vmatpush1.msra.mxu0 0.0
    %575 = vmatprep.subr.mxu0 0.0
    %576 = vmatpush1.msra.mxu0 0.0
    %577 = vmatprep.subr.mxu0 0.0
    %578 = vmatpush1.msra.mxu0 0.0
    %579 = vmatprep.subr.mxu0 0.0
    %580 = vmatpush1.msra.mxu0 0.0
    %581 = vmatprep.subr.mxu0 0.0
    %582 = vmatpush1.msra.mxu0 0.0
    %583 = vmatprep.subr.mxu0 0.0
    %584 = vmatpush1.msra.mxu0 0.0
    %585 = vmatprep.subr.mxu0 0.0
    %586 = vmatpush1.msra.mxu0 0.0
    %587 = vmatprep.subr.mxu0 0.0
    %588 = vmatpush1.msra.mxu0 0.0
    %589 = vmatprep.subr.mxu0 0.0
    %590 = vmatpush1.msra.mxu0 0.0
    %591 = vmatprep.subr.mxu0 0.0
    %592 = vmatpush1.msra.mxu0 0.0
    %593 = vmatprep.subr.mxu0 0.0
    %594 = vmatpush1.msra.mxu0 0.0
    %595 = vmatprep.mubr.f32.mxu0 0.0
    %596 = vmatmul.mubr.f32.gmra.mrb[0].mxu0 %v457
    %v597 = vpop.f32.mrb[0].mxu0
    %v598 = vadd.f32 %v108, %v597
    %v599 = vpop.f32.mrb[0].mxu0
    %600 = vdwg.mxu0
    %v603 = vcombine.low %v527, %v529
    %v605 = vunpack.c.l.s4 1983009808
    %v606 = vunpack.c.0.s8 %v605
    %v607 = vlaneseq
    %v608 = vshrl.u32 %v607, 7
    %v609 = vsub.s32 %v606, %v608
    %v610 = vrot.slane %v603, %v609
    %v612 = vadd.f32 %v459, %v610
    %v613 = vxor.u32 %v612, 2147483648
    %v614 = vmul.f32 %v613, 1.442695
    %v615 = vpow.pop %v614
    %v616 = vadd.f32 %v615, 1.0
    %v617 = vrcp.pop %v616
    %v618 = vmul.f32 1.0, %v617
    %v619 = vmul.f32 %v618, %v598
    %v621 = vrot.slane %v459, 4
    %v623 = vadd.f32 %v621, %v619
    %v624 = vtanh.pop %v623
    %v626 = vrot.slane %v618, 2
    %v628 = vsub.f32 1.0, %v626
    %v629 = vmul.f32 %v628, %v624
    %v630 = vmul.f32 %v626, %v457
    %v631 = vadd.f32 %v629, %v630
    %s632 = scalar_lea.vmem %s0, 18
    %v633 = vld [vmem:[%s632] sm:$0x3f]
    %634 = vmatprep.subr.mxu0 %v47
    %635 = vmatpush1.msra.mxu0 %v46
    %636 = vmatprep.subr.mxu0 %v50
    %637 = vmatpush1.msra.mxu0 %v49
    %638 = vmatprep.subr.mxu0 %v53
    %639 = vmatpush1.msra.mxu0 %v52
    %640 = vmatprep.subr.mxu0 %v56
    %641 = vmatpush1.msra.mxu0 %v55
    %642 = vmatprep.subr.mxu0 %v59
    %643 = vmatpush1.msra.mxu0 %v58
    %644 = vmatprep.subr.mxu0 %v62
    %645 = vmatpush1.msra.mxu0 %v61
    %646 = vmatprep.subr.mxu0 %v65
    %647 = vmatpush1.msra.mxu0 %v64
    %648 = vmatprep.subr.mxu0 %v68
    %649 = vmatpush1.msra.mxu0 %v67
    %650 = vmatprep.subr.mxu0 %v71
    %651 = vmatpush1.msra.mxu0 %v70
    %652 = vmatprep.subr.mxu0 %v74
    %653 = vmatpush1.msra.mxu0 %v73
    %654 = vmatprep.subr.mxu0 %v77
    %655 = vmatpush1.msra.mxu0 %v76
    %656 = vmatprep.subr.mxu0 %v80
    %657 = vmatpush1.msra.mxu0 %v79
    %658 = vmatprep.subr.mxu0 %v83
    %659 = vmatpush1.msra.mxu0 %v82
    %660 = vmatprep.subr.mxu0 %v86
    %661 = vmatpush1.msra.mxu0 %v85
    %662 = vmatprep.subr.mxu0 %v89
    %663 = vmatpush1.msra.mxu0 %v88
    %664 = vmatprep.subr.mxu0 %v92
    %665 = vmatpush1.msra.mxu0 %v91
    %666 = vmatprep.subr.mxu0 0.0
    %667 = vmatpush1.msra.mxu0 0.0
    %668 = vmatprep.subr.mxu0 0.0
    %669 = vmatpush1.msra.mxu0 0.0
    %670 = vmatprep.subr.mxu0 0.0
    %671 = vmatpush1.msra.mxu0 0.0
    %672 = vmatprep.subr.mxu0 0.0
    %673 = vmatpush1.msra.mxu0 0.0
    %674 = vmatprep.subr.mxu0 0.0
    %675 = vmatpush1.msra.mxu0 0.0
    %676 = vmatprep.subr.mxu0 0.0
    %677 = vmatpush1.msra.mxu0 0.0
    %678 = vmatprep.subr.mxu0 0.0
    %679 = vmatpush1.msra.mxu0 0.0
    %680 = vmatprep.subr.mxu0 0.0
    %681 = vmatpush1.msra.mxu0 0.0
    %682 = vmatprep.subr.mxu0 0.0
    %683 = vmatpush1.msra.mxu0 0.0
    %684 = vmatprep.subr.mxu0 0.0
    %685 = vmatpush1.msra.mxu0 0.0
    %686 = vmatprep.subr.mxu0 0.0
    %687 = vmatpush1.msra.mxu0 0.0
    %688 = vmatprep.subr.mxu0 0.0
    %689 = vmatpush1.msra.mxu0 0.0
    %690 = vmatprep.subr.mxu0 0.0
    %691 = vmatpush1.msra.mxu0 0.0
    %692 = vmatprep.subr.mxu0 0.0
    %693 = vmatpush1.msra.mxu0 0.0
    %694 = vmatprep.subr.mxu0 0.0
    %695 = vmatpush1.msra.mxu0 0.0
    %696 = vmatprep.subr.mxu0 0.0
    %697 = vmatpush1.msra.mxu0 0.0
    %698 = vmatprep.mubr.f32.mxu0 0.0
    %699 = vmatmul.mubr.f32.gmra.mrb[0].mxu0 %v631
    %v700 = vpop.f32.mrb[0].mxu0
    %v701 = vadd.f32 %v100, %v700
    %v702 = vpop.f32.mrb[0].mxu0
    %v703 = vadd.f32 %v104, %v702
    %704 = vdwg.mxu0
    %705 = vmatprep.subr.mxu0 0.0
    %706 = vmatpush1.msra.mxu0 %v48
    %707 = vmatprep.subr.mxu0 0.0
    %708 = vmatpush1.msra.mxu0 %v51
    %709 = vmatprep.subr.mxu0 0.0
    %710 = vmatpush1.msra.mxu0 %v54
    %711 = vmatprep.subr.mxu0 0.0
    %712 = vmatpush1.msra.mxu0 %v57
    %713 = vmatprep.subr.mxu0 0.0
    %714 = vmatpush1.msra.mxu0 %v60
    %715 = vmatprep.subr.mxu0 0.0
    %716 = vmatpush1.msra.mxu0 %v63
    %717 = vmatprep.subr.mxu0 0.0
    %718 = vmatpush1.msra.mxu0 %v66
    %719 = vmatprep.subr.mxu0 0.0
    %720 = vmatpush1.msra.mxu0 %v69
    %721 = vmatprep.subr.mxu0 0.0
    %722 = vmatpush1.msra.mxu0 %v72
    %723 = vmatprep.subr.mxu0 0.0
    %724 = vmatpush1.msra.mxu0 %v75
    %725 = vmatprep.subr.mxu0 0.0
    %726 = vmatpush1.msra.mxu0 %v78
    %727 = vmatprep.subr.mxu0 0.0
    %728 = vmatpush1.msra.mxu0 %v81
    %729 = vmatprep.subr.mxu0 0.0
    %730 = vmatpush1.msra.mxu0 %v84
    %731 = vmatprep.subr.mxu0 0.0
    %732 = vmatpush1.msra.mxu0 %v87
    %733 = vmatprep.subr.mxu0 0.0
    %734 = vmatpush1.msra.mxu0 %v90
    %735 = vmatprep.subr.mxu0 0.0
    %736 = vmatpush1.msra.mxu0 %v93
    %737 = vmatprep.subr.mxu0 0.0
    %738 = vmatpush1.msra.mxu0 0.0
    %739 = vmatprep.subr.mxu0 0.0
    %740 = vmatpush1.msra.mxu0 0.0
    %741 = vmatprep.subr.mxu0 0.0
    %742 = vmatpush1.msra.mxu0 0.0
    %743 = vmatprep.subr.mxu0 0.0
    %744 = vmatpush1.msra.mxu0 0.0
    %745 = vmatprep.subr.mxu0 0.0
    %746 = vmatpush1.msra.mxu0 0.0
    %747 = vmatprep.subr.mxu0 0.0
    %748 = vmatpush1.msra.mxu0 0.0
    %749 = vmatprep.subr.mxu0 0.0
    %750 = vmatpush1.msra.mxu0 0.0
    %751 = vmatprep.subr.mxu0 0.0
    %752 = vmatpush1.msra.mxu0 0.0
    %753 = vmatprep.subr.mxu0 0.0
    %754 = vmatpush1.msra.mxu0 0.0
    %755 = vmatprep.subr.mxu0 0.0
    %756 = vmatpush1.msra.mxu0 0.0
    %757 = vmatprep.subr.mxu0 0.0
    %758 = vmatpush1.msra.mxu0 0.0
    %759 = vmatprep.subr.mxu0 0.0
    %760 = vmatpush1.msra.mxu0 0.0
    %761 = vmatprep.subr.mxu0 0.0
    %762 = vmatpush1.msra.mxu0 0.0
    %763 = vmatprep.subr.mxu0 0.0
    %764 = vmatpush1.msra.mxu0 0.0
    %765 = vmatprep.subr.mxu0 0.0
    %766 = vmatpush1.msra.mxu0 0.0
    %767 = vmatprep.subr.mxu0 0.0
    %768 = vmatpush1.msra.mxu0 0.0
    %769 = vmatprep.mubr.f32.mxu0 0.0
    %770 = vmatmul.mubr.f32.gmra.mrb[0].mxu0 %v631
    %v771 = vpop.f32.mrb[0].mxu0
    %v772 = vadd.f32 %v108, %v771
    %v773 = vpop.f32.mrb[0].mxu0
    %774 = vdwg.mxu0
    %v777 = vcombine.low %v701, %v703
    %v779 = vunpack.c.l.s4 1983009808
    %v780 = vunpack.c.0.s8 %v779
    %v781 = vlaneseq
    %v782 = vshrl.u32 %v781, 7
    %v783 = vsub.s32 %v780, %v782
    %v784 = vrot.slane %v777, %v783
    %v786 = vadd.f32 %v633, %v784
    %v787 = vxor.u32 %v786, 2147483648
    %v788 = vmul.f32 %v787, 1.442695
    %v789 = vpow.pop %v788
    %v790 = vadd.f32 %v789, 1.0
    %v791 = vrcp.pop %v790
    %v792 = vmul.f32 1.0, %v791
    %v793 = vmul.f32 %v792, %v772
    %v795 = vrot.slane %v633, 4
    %v797 = vadd.f32 %v795, %v793
    %v798 = vtanh.pop %v797
    %v800 = vrot.slane %v792, 2
    %v802 = vsub.f32 1.0, %v800
    %v803 = vmul.f32 %v802, %v798
    %v804 = vmul.f32 %v800, %v631
    %v805 = vadd.f32 %v803, %v804
    %s806 = scalar_lea.vmem %s0, 24
    %v807 = vld [vmem:[%s806] sm:$0x3f]
    %808 = vmatprep.subr.mxu0 %v47
    %809 = vmatpush1.msra.mxu0 %v46
    %810 = vmatprep.subr.mxu0 %v50
    %811 = vmatpush1.msra.mxu0 %v49
    %812 = vmatprep.subr.mxu0 %v53
    %813 = vmatpush1.msra.mxu0 %v52
    %814 = vmatprep.subr.mxu0 %v56
    %815 = vmatpush1.msra.mxu0 %v55
    %816 = vmatprep.subr.mxu0 %v59
    %817 = vmatpush1.msra.mxu0 %v58
    %818 = vmatprep.subr.mxu0 %v62
    %819 = vmatpush1.msra.mxu0 %v61
    %820 = vmatprep.subr.mxu0 %v65
    %821 = vmatpush1.msra.mxu0 %v64
    %822 = vmatprep.subr.mxu0 %v68
    %823 = vmatpush1.msra.mxu0 %v67
    %824 = vmatprep.subr.mxu0 %v71
    %825 = vmatpush1.msra.mxu0 %v70
    %826 = vmatprep.subr.mxu0 %v74
    %827 = vmatpush1.msra.mxu0 %v73
    %828 = vmatprep.subr.mxu0 %v77
    %829 = vmatpush1.msra.mxu0 %v76
    %830 = vmatprep.subr.mxu0 %v80
    %831 = vmatpush1.msra.mxu0 %v79
    %832 = vmatprep.subr.mxu0 %v83
    %833 = vmatpush1.msra.mxu0 %v82
    %834 = vmatprep.subr.mxu0 %v86
    %835 = vmatpush1.msra.mxu0 %v85
    %836 = vmatprep.subr.mxu0 %v89
    %837 = vmatpush1.msra.mxu0 %v88
    %838 = vmatprep.subr.mxu0 %v92
    %839 = vmatpush1.msra.mxu0 %v91
    %840 = vmatprep.subr.mxu0 0.0
    %841 = vmatpush1.msra.mxu0 0.0
    %842 = vmatprep.subr.mxu0 0.0
    %843 = vmatpush1.msra.mxu0 0.0
    %844 = vmatprep.subr.mxu0 0.0
    %845 = vmatpush1.msra.mxu0 0.0
    %846 = vmatprep.subr.mxu0 0.0
    %847 = vmatpush1.msra.mxu0 0.0
    %848 = vmatprep.subr.mxu0 0.0
    %849 = vmatpush1.msra.mxu0 0.0
    %850 = vmatprep.subr.mxu0 0.0
    %851 = vmatpush1.msra.mxu0 0.0
    %852 = vmatprep.subr.mxu0 0.0
    %853 = vmatpush1.msra.mxu0 0.0
    %854 = vmatprep.subr.mxu0 0.0
    %855 = vmatpush1.msra.mxu0 0.0
    %856 = vmatprep.subr.mxu0 0.0
    %857 = vmatpush1.msra.mxu0 0.0
    %858 = vmatprep.subr.mxu0 0.0
    %859 = vmatpush1.msra.mxu0 0.0
    %860 = vmatprep.subr.mxu0 0.0
    %861 = vmatpush1.msra.mxu0 0.0
    %862 = vmatprep.subr.mxu0 0.0
    %863 = vmatpush1.msra.mxu0 0.0
    %864 = vmatprep.subr.mxu0 0.0
    %865 = vmatpush1.msra.mxu0 0.0
    %866 = vmatprep.subr.mxu0 0.0
    %867 = vmatpush1.msra.mxu0 0.0
    %868 = vmatprep.subr.mxu0 0.0
    %869 = vmatpush1.msra.mxu0 0.0
    %870 = vmatprep.subr.mxu0 0.0
    %871 = vmatpush1.msra.mxu0 0.0
    %872 = vmatprep.mubr.f32.mxu0 0.0
    %873 = vmatmul.mubr.f32.gmra.mrb[0].mxu0 %v805
    %v874 = vpop.f32.mrb[0].mxu0
    %v875 = vadd.f32 %v100, %v874
    %v876 = vpop.f32.mrb[0].mxu0
    %v877 = vadd.f32 %v104, %v876
    %878 = vdwg.mxu0
    %879 = vmatprep.subr.mxu0 0.0
    %880 = vmatpush1.msra.mxu0 %v48
    %881 = vmatprep.subr.mxu0 0.0
    %882 = vmatpush1.msra.mxu0 %v51
    %883 = vmatprep.subr.mxu0 0.0
    %884 = vmatpush1.msra.mxu0 %v54
    %885 = vmatprep.subr.mxu0 0.0
    %886 = vmatpush1.msra.mxu0 %v57
    %887 = vmatprep.subr.mxu0 0.0
    %888 = vmatpush1.msra.mxu0 %v60
    %889 = vmatprep.subr.mxu0 0.0
    %890 = vmatpush1.msra.mxu0 %v63
    %891 = vmatprep.subr.mxu0 0.0
    %892 = vmatpush1.msra.mxu0 %v66
    %893 = vmatprep.subr.mxu0 0.0
    %894 = vmatpush1.msra.mxu0 %v69
    %895 = vmatprep.subr.mxu0 0.0
    %896 = vmatpush1.msra.mxu0 %v72
    %897 = vmatprep.subr.mxu0 0.0
    %898 = vmatpush1.msra.mxu0 %v75
    %899 = vmatprep.subr.mxu0 0.0
    %900 = vmatpush1.msra.mxu0 %v78
    %901 = vmatprep.subr.mxu0 0.0
    %902 = vmatpush1.msra.mxu0 %v81
    %903 = vmatprep.subr.mxu0 0.0
    %904 = vmatpush1.msra.mxu0 %v84
    %905 = vmatprep.subr.mxu0 0.0
    %906 = vmatpush1.msra.mxu0 %v87
    %907 = vmatprep.subr.mxu0 0.0
    %908 = vmatpush1.msra.mxu0 %v90
    %909 = vmatprep.subr.mxu0 0.0
    %910 = vmatpush1.msra.mxu0 %v93
    %911 = vmatprep.subr.mxu0 0.0
    %912 = vmatpush1.msra.mxu0 0.0
    %913 = vmatprep.subr.mxu0 0.0
    %914 = vmatpush1.msra.mxu0 0.0
    %915 = vmatprep.subr.mxu0 0.0
    %916 = vmatpush1.msra.mxu0 0.0
    %917 = vmatprep.subr.mxu0 0.0
    %918 = vmatpush1.msra.mxu0 0.0
    %919 = vmatprep.subr.mxu0 0.0
    %920 = vmatpush1.msra.mxu0 0.0
    %921 = vmatprep.subr.mxu0 0.0
    %922 = vmatpush1.msra.mxu0 0.0
    %923 = vmatprep.subr.mxu0 0.0
    %924 = vmatpush1.msra.mxu0 0.0
    %925 = vmatprep.subr.mxu0 0.0
    %926 = vmatpush1.msra.mxu0 0.0
    %927 = vmatprep.subr.mxu0 0.0
    %928 = vmatpush1.msra.mxu0 0.0
    %929 = vmatprep.subr.mxu0 0.0
    %930 = vmatpush1.msra.mxu0 0.0
    %931 = vmatprep.subr.mxu0 0.0
    %932 = vmatpush1.msra.mxu0 0.0
    %933 = vmatprep.subr.mxu0 0.0
    %934 = vmatpush1.msra.mxu0 0.0
    %935 = vmatprep.subr.mxu0 0.0
    %936 = vmatpush1.msra.mxu0 0.0
    %937 = vmatprep.subr.mxu0 0.0
    %938 = vmatpush1.msra.mxu0 0.0
    %939 = vmatprep.subr.mxu0 0.0
    %940 = vmatpush1.msra.mxu0 0.0
    %941 = vmatprep.subr.mxu0 0.0
    %942 = vmatpush1.msra.mxu0 0.0
    %943 = vmatprep.mubr.f32.mxu0 0.0
    %944 = vmatmul.mubr.f32.gmra.mrb[0].mxu0 %v805
    %v945 = vpop.f32.mrb[0].mxu0
    %v946 = vadd.f32 %v108, %v945
    %v947 = vpop.f32.mrb[0].mxu0
    %948 = vdwg.mxu0
    %v951 = vcombine.low %v875, %v877
    %v953 = vunpack.c.l.s4 1983009808
    %v954 = vunpack.c.0.s8 %v953
    %v955 = vlaneseq
    %v956 = vshrl.u32 %v955, 7
    %v957 = vsub.s32 %v954, %v956
    %v958 = vrot.slane %v951, %v957
    %v960 = vadd.f32 %v807, %v958
    %v961 = vxor.u32 %v960, 2147483648
    %v962 = vmul.f32 %v961, 1.442695
    %v963 = vpow.pop %v962
    %v964 = vadd.f32 %v963, 1.0
    %v965 = vrcp.pop %v964
    %v966 = vmul.f32 1.0, %v965
    %v967 = vmul.f32 %v966, %v946
    %v969 = vrot.slane %v807, 4
    %v971 = vadd.f32 %v969, %v967
    %v972 = vtanh.pop %v971
    %v974 = vrot.slane %v966, 2
    %v976 = vsub.f32 1.0, %v974
    %v977 = vmul.f32 %v976, %v972
    %v978 = vmul.f32 %v974, %v805
    %v979 = vadd.f32 %v977, %v978
    %s980 = scalar_lea.vmem %s0, 30
    %v981 = vld [vmem:[%s980] sm:$0x3f]
    %982 = vmatprep.subr.mxu0 %v47
    %983 = vmatpush1.msra.mxu0 %v46
    %984 = vmatprep.subr.mxu0 %v50
    %985 = vmatpush1.msra.mxu0 %v49
    %986 = vmatprep.subr.mxu0 %v53
    %987 = vmatpush1.msra.mxu0 %v52
    %988 = vmatprep.subr.mxu0 %v56
    %989 = vmatpush1.msra.mxu0 %v55
    %990 = vmatprep.subr.mxu0 %v59
    %991 = vmatpush1.msra.mxu0 %v58
    %992 = vmatprep.subr.mxu0 %v62
    %993 = vmatpush1.msra.mxu0 %v61
    %994 = vmatprep.subr.mxu0 %v65
    %995 = vmatpush1.msra.mxu0 %v64
    %996 = vmatprep.subr.mxu0 %v68
    %997 = vmatpush1.msra.mxu0 %v67
    %998 = vmatprep.subr.mxu0 %v71
    %999 = vmatpush1.msra.mxu0 %v70
    %1000 = vmatprep.subr.mxu0 %v74
    %1001 = vmatpush1.msra.mxu0 %v73
    %1002 = vmatprep.subr.mxu0 %v77
    %1003 = vmatpush1.msra.mxu0 %v76
    %1004 = vmatprep.subr.mxu0 %v80
    %1005 = vmatpush1.msra.mxu0 %v79
    %1006 = vmatprep.subr.mxu0 %v83
    %1007 = vmatpush1.msra.mxu0 %v82
    %1008 = vmatprep.subr.mxu0 %v86
    %1009 = vmatpush1.msra.mxu0 %v85
    %1010 = vmatprep.subr.mxu0 %v89
    %1011 = vmatpush1.msra.mxu0 %v88
    %1012 = vmatprep.subr.mxu0 %v92
    %1013 = vmatpush1.msra.mxu0 %v91
    %1014 = vmatprep.subr.mxu0 0.0
    %1015 = vmatpush1.msra.mxu0 0.0
    %1016 = vmatprep.subr.mxu0 0.0
    %1017 = vmatpush1.msra.mxu0 0.0
    %1018 = vmatprep.subr.mxu0 0.0
    %1019 = vmatpush1.msra.mxu0 0.0
    %1020 = vmatprep.subr.mxu0 0.0
    %1021 = vmatpush1.msra.mxu0 0.0
    %1022 = vmatprep.subr.mxu0 0.0
    %1023 = vmatpush1.msra.mxu0 0.0
    %1024 = vmatprep.subr.mxu0 0.0
    %1025 = vmatpush1.msra.mxu0 0.0
    %1026 = vmatprep.subr.mxu0 0.0
    %1027 = vmatpush1.msra.mxu0 0.0
    %1028 = vmatprep.subr.mxu0 0.0
    %1029 = vmatpush1.msra.mxu0 0.0
    %1030 = vmatprep.subr.mxu0 0.0
    %1031 = vmatpush1.msra.mxu0 0.0
    %1032 = vmatprep.subr.mxu0 0.0
    %1033 = vmatpush1.msra.mxu0 0.0
    %1034 = vmatprep.subr.mxu0 0.0
    %1035 = vmatpush1.msra.mxu0 0.0
    %1036 = vmatprep.subr.mxu0 0.0
    %1037 = vmatpush1.msra.mxu0 0.0
    %1038 = vmatprep.subr.mxu0 0.0
    %1039 = vmatpush1.msra.mxu0 0.0
    %1040 = vmatprep.subr.mxu0 0.0
    %1041 = vmatpush1.msra.mxu0 0.0
    %1042 = vmatprep.subr.mxu0 0.0
    %1043 = vmatpush1.msra.mxu0 0.0
    %1044 = vmatprep.subr.mxu0 0.0
    %1045 = vmatpush1.msra.mxu0 0.0
    %1046 = vmatprep.mubr.f32.mxu0 0.0
    %1047 = vmatmul.mubr.f32.gmra.mrb[0].mxu0 %v979
    %v1048 = vpop.f32.mrb[0].mxu0
    %v1049 = vadd.f32 %v100, %v1048
    %v1050 = vpop.f32.mrb[0].mxu0
    %v1051 = vadd.f32 %v104, %v1050
    %1052 = vdwg.mxu0
    %1053 = vmatprep.subr.mxu0 0.0
    %1054 = vmatpush1.msra.mxu0 %v48
    %1055 = vmatprep.subr.mxu0 0.0
    %1056 = vmatpush1.msra.mxu0 %v51
    %1057 = vmatprep.subr.mxu0 0.0
    %1058 = vmatpush1.msra.mxu0 %v54
    %1059 = vmatprep.subr.mxu0 0.0
    %1060 = vmatpush1.msra.mxu0 %v57
    %1061 = vmatprep.subr.mxu0 0.0
    %1062 = vmatpush1.msra.mxu0 %v60
    %1063 = vmatprep.subr.mxu0 0.0
    %1064 = vmatpush1.msra.mxu0 %v63
    %1065 = vmatprep.subr.mxu0 0.0
    %1066 = vmatpush1.msra.mxu0 %v66
    %1067 = vmatprep.subr.mxu0 0.0
    %1068 = vmatpush1.msra.mxu0 %v69
    %1069 = vmatprep.subr.mxu0 0.0
    %1070 = vmatpush1.msra.mxu0 %v72
    %1071 = vmatprep.subr.mxu0 0.0
    %1072 = vmatpush1.msra.mxu0 %v75
    %1073 = vmatprep.subr.mxu0 0.0
    %1074 = vmatpush1.msra.mxu0 %v78
    %1075 = vmatprep.subr.mxu0 0.0
    %1076 = vmatpush1.msra.mxu0 %v81
    %1077 = vmatprep.subr.mxu0 0.0
    %1078 = vmatpush1.msra.mxu0 %v84
    %1079 = vmatprep.subr.mxu0 0.0
    %1080 = vmatpush1.msra.mxu0 %v87
    %1081 = vmatprep.subr.mxu0 0.0
    %1082 = vmatpush1.msra.mxu0 %v90
    %1083 = vmatprep.subr.mxu0 0.0
    %1084 = vmatpush1.msra.mxu0 %v93
    %1085 = vmatprep.subr.mxu0 0.0
    %1086 = vmatpush1.msra.mxu0 0.0
    %1087 = vmatprep.subr.mxu0 0.0
    %1088 = vmatpush1.msra.mxu0 0.0
    %1089 = vmatprep.subr.mxu0 0.0
    %1090 = vmatpush1.msra.mxu0 0.0
    %1091 = vmatprep.subr.mxu0 0.0
    %1092 = vmatpush1.msra.mxu0 0.0
    %1093 = vmatprep.subr.mxu0 0.0
    %1094 = vmatpush1.msra.mxu0 0.0
    %1095 = vmatprep.subr.mxu0 0.0
    %1096 = vmatpush1.msra.mxu0 0.0
    %1097 = vmatprep.subr.mxu0 0.0
    %1098 = vmatpush1.msra.mxu0 0.0
    %1099 = vmatprep.subr.mxu0 0.0
    %1100 = vmatpush1.msra.mxu0 0.0
    %1101 = vmatprep.subr.mxu0 0.0
    %1102 = vmatpush1.msra.mxu0 0.0
    %1103 = vmatprep.subr.mxu0 0.0
    %1104 = vmatpush1.msra.mxu0 0.0
    %1105 = vmatprep.subr.mxu0 0.0
    %1106 = vmatpush1.msra.mxu0 0.0
    %1107 = vmatprep.subr.mxu0 0.0
    %1108 = vmatpush1.msra.mxu0 0.0
    %1109 = vmatprep.subr.mxu0 0.0
    %1110 = vmatpush1.msra.mxu0 0.0
    %1111 = vmatprep.subr.mxu0 0.0
    %1112 = vmatpush1.msra.mxu0 0.0
    %1113 = vmatprep.subr.mxu0 0.0
    %1114 = vmatpush1.msra.mxu0 0.0
    %1115 = vmatprep.subr.mxu0 0.0
    %1116 = vmatpush1.msra.mxu0 0.0
    %1117 = vmatprep.mubr.f32.mxu0 0.0
    %1118 = vmatmul.mubr.f32.gmra.mrb[0].mxu0 %v979
    %v1119 = vpop.f32.mrb[0].mxu0
    %v1120 = vadd.f32 %v108, %v1119
    %v1121 = vpop.f32.mrb[0].mxu0
    %1122 = vdwg.mxu0
    %v1125 = vcombine.low %v1049, %v1051
    %v1127 = vunpack.c.l.s4 1983009808
    %v1128 = vunpack.c.0.s8 %v1127
    %v1129 = vlaneseq
    %v1130 = vshrl.u32 %v1129, 7
    %v1131 = vsub.s32 %v1128, %v1130
    %v1132 = vrot.slane %v1125, %v1131
    %v1134 = vadd.f32 %v981, %v1132
    %v1135 = vxor.u32 %v1134, 2147483648
    %v1136 = vmul.f32 %v1135, 1.442695
    %v1137 = vpow.pop %v1136
    %v1138 = vadd.f32 %v1137, 1.0
    %v1139 = vrcp.pop %v1138
    %v1140 = vmul.f32 1.0, %v1139
    %v1141 = vmul.f32 %v1140, %v1120
    %v1143 = vrot.slane %v981, 4
    %v1145 = vadd.f32 %v1143, %v1141
    %v1146 = vtanh.pop %v1145
    %v1148 = vrot.slane %v1140, 2
    %v1150 = vsub.f32 1.0, %v1148
    %v1151 = vmul.f32 %v1150, %v1146
    %v1152 = vmul.f32 %v1148, %v979
    %v1153 = vadd.f32 %v1151, %v1152
    %s1154 = scalar_lea.vmem %s0, 36
    %v1155 = vld [vmem:[%s1154] sm:$0x3f]
    %1156 = vmatprep.subr.mxu0 %v47
    %1157 = vmatpush1.msra.mxu0 %v46
    %1158 = vmatprep.subr.mxu0 %v50
    %1159 = vmatpush1.msra.mxu0 %v49
    %1160 = vmatprep.subr.mxu0 %v53
    %1161 = vmatpush1.msra.mxu0 %v52
    %1162 = vmatprep.subr.mxu0 %v56
    %1163 = vmatpush1.msra.mxu0 %v55
    %1164 = vmatprep.subr.mxu0 %v59
    %1165 = vmatpush1.msra.mxu0 %v58
    %1166 = vmatprep.subr.mxu0 %v62
    %1167 = vmatpush1.msra.mxu0 %v61
    %1168 = vmatprep.subr.mxu0 %v65
    %1169 = vmatpush1.msra.mxu0 %v64
    %1170 = vmatprep.subr.mxu0 %v68
    %1171 = vmatpush1.msra.mxu0 %v67
    %1172 = vmatprep.subr.mxu0 %v71
    %1173 = vmatpush1.msra.mxu0 %v70
    %1174 = vmatprep.subr.mxu0 %v74
    %1175 = vmatpush1.msra.mxu0 %v73
    %1176 = vmatprep.subr.mxu0 %v77
    %1177 = vmatpush1.msra.mxu0 %v76
    %1178 = vmatprep.subr.mxu0 %v80
    %1179 = vmatpush1.msra.mxu0 %v79
    %1180 = vmatprep.subr.mxu0 %v83
    %1181 = vmatpush1.msra.mxu0 %v82
    %1182 = vmatprep.subr.mxu0 %v86
    %1183 = vmatpush1.msra.mxu0 %v85
    %1184 = vmatprep.subr.mxu0 %v89
    %1185 = vmatpush1.msra.mxu0 %v88
    %1186 = vmatprep.subr.mxu0 %v92
    %1187 = vmatpush1.msra.mxu0 %v91
    %1188 = vmatprep.subr.mxu0 0.0
    %1189 = vmatpush1.msra.mxu0 0.0
    %1190 = vmatprep.subr.mxu0 0.0
    %1191 = vmatpush1.msra.mxu0 0.0
    %1192 = vmatprep.subr.mxu0 0.0
    %1193 = vmatpush1.msra.mxu0 0.0
    %1194 = vmatprep.subr.mxu0 0.0
    %1195 = vmatpush1.msra.mxu0 0.0
    %1196 = vmatprep.subr.mxu0 0.0
    %1197 = vmatpush1.msra.mxu0 0.0
    %1198 = vmatprep.subr.mxu0 0.0
    %1199 = vmatpush1.msra.mxu0 0.0
    %1200 = vmatprep.subr.mxu0 0.0
    %1201 = vmatpush1.msra.mxu0 0.0
    %1202 = vmatprep.subr.mxu0 0.0
    %1203 = vmatpush1.msra.mxu0 0.0
    %1204 = vmatprep.subr.mxu0 0.0
    %1205 = vmatpush1.msra.mxu0 0.0
    %1206 = vmatprep.subr.mxu0 0.0
    %1207 = vmatpush1.msra.mxu0 0.0
    %1208 = vmatprep.subr.mxu0 0.0
    %1209 = vmatpush1.msra.mxu0 0.0
    %1210 = vmatprep.subr.mxu0 0.0
    %1211 = vmatpush1.msra.mxu0 0.0
    %1212 = vmatprep.subr.mxu0 0.0
    %1213 = vmatpush1.msra.mxu0 0.0
    %1214 = vmatprep.subr.mxu0 0.0
    %1215 = vmatpush1.msra.mxu0 0.0
    %1216 = vmatprep.subr.mxu0 0.0
    %1217 = vmatpush1.msra.mxu0 0.0
    %1218 = vmatprep.subr.mxu0 0.0
    %1219 = vmatpush1.msra.mxu0 0.0
    %1220 = vmatprep.mubr.f32.mxu0 0.0
    %1221 = vmatmul.mubr.f32.gmra.mrb[0].mxu0 %v1153
    %v1222 = vpop.f32.mrb[0].mxu0
    %v1223 = vadd.f32 %v100, %v1222
    %v1224 = vpop.f32.mrb[0].mxu0
    %v1225 = vadd.f32 %v104, %v1224
    %1226 = vdwg.mxu0
    %1227 = vmatprep.subr.mxu0 0.0
    %1228 = vmatpush1.msra.mxu0 %v48
    %1229 = vmatprep.subr.mxu0 0.0
    %1230 = vmatpush1.msra.mxu0 %v51
    %1231 = vmatprep.subr.mxu0 0.0
    %1232 = vmatpush1.msra.mxu0 %v54
    %1233 = vmatprep.subr.mxu0 0.0
    %1234 = vmatpush1.msra.mxu0 %v57
    %1235 = vmatprep.subr.mxu0 0.0
    %1236 = vmatpush1.msra.mxu0 %v60
    %1237 = vmatprep.subr.mxu0 0.0
    %1238 = vmatpush1.msra.mxu0 %v63
    %1239 = vmatprep.subr.mxu0 0.0
    %1240 = vmatpush1.msra.mxu0 %v66
    %1241 = vmatprep.subr.mxu0 0.0
    %1242 = vmatpush1.msra.mxu0 %v69
    %1243 = vmatprep.subr.mxu0 0.0
    %1244 = vmatpush1.msra.mxu0 %v72
    %1245 = vmatprep.subr.mxu0 0.0
    %1246 = vmatpush1.msra.mxu0 %v75
    %1247 = vmatprep.subr.mxu0 0.0
    %1248 = vmatpush1.msra.mxu0 %v78
    %1249 = vmatprep.subr.mxu0 0.0
    %1250 = vmatpush1.msra.mxu0 %v81
    %1251 = vmatprep.subr.mxu0 0.0
    %1252 = vmatpush1.msra.mxu0 %v84
    %1253 = vmatprep.subr.mxu0 0.0
    %1254 = vmatpush1.msra.mxu0 %v87
    %1255 = vmatprep.subr.mxu0 0.0
    %1256 = vmatpush1.msra.mxu0 %v90
    %1257 = vmatprep.subr.mxu0 0.0
    %1258 = vmatpush1.msra.mxu0 %v93
    %1259 = vmatprep.subr.mxu0 0.0
    %1260 = vmatpush1.msra.mxu0 0.0
    %1261 = vmatprep.subr.mxu0 0.0
    %1262 = vmatpush1.msra.mxu0 0.0
    %1263 = vmatprep.subr.mxu0 0.0
    %1264 = vmatpush1.msra.mxu0 0.0
    %1265 = vmatprep.subr.mxu0 0.0
    %1266 = vmatpush1.msra.mxu0 0.0
    %1267 = vmatprep.subr.mxu0 0.0
    %1268 = vmatpush1.msra.mxu0 0.0
    %1269 = vmatprep.subr.mxu0 0.0
    %1270 = vmatpush1.msra.mxu0 0.0
    %1271 = vmatprep.subr.mxu0 0.0
    %1272 = vmatpush1.msra.mxu0 0.0
    %1273 = vmatprep.subr.mxu0 0.0
    %1274 = vmatpush1.msra.mxu0 0.0
    %1275 = vmatprep.subr.mxu0 0.0
    %1276 = vmatpush1.msra.mxu0 0.0
    %1277 = vmatprep.subr.mxu0 0.0
    %1278 = vmatpush1.msra.mxu0 0.0
    %1279 = vmatprep.subr.mxu0 0.0
    %1280 = vmatpush1.msra.mxu0 0.0
    %1281 = vmatprep.subr.mxu0 0.0
    %1282 = vmatpush1.msra.mxu0 0.0
    %1283 = vmatprep.subr.mxu0 0.0
    %1284 = vmatpush1.msra.mxu0 0.0
    %1285 = vmatprep.subr.mxu0 0.0
    %1286 = vmatpush1.msra.mxu0 0.0
    %1287 = vmatprep.subr.mxu0 0.0
    %1288 = vmatpush1.msra.mxu0 0.0
    %1289 = vmatprep.subr.mxu0 0.0
    %1290 = vmatpush1.msra.mxu0 0.0
    %1291 = vmatprep.mubr.f32.mxu0 0.0
    %1292 = vmatmul.mubr.f32.gmra.mrb[0].mxu0 %v1153
    %v1293 = vpop.f32.mrb[0].mxu0
    %v1294 = vadd.f32 %v108, %v1293
    %v1295 = vpop.f32.mrb[0].mxu0
    %1296 = vdwg.mxu0
    %v1299 = vcombine.low %v1223, %v1225
    %v1301 = vunpack.c.l.s4 1983009808
    %v1302 = vunpack.c.0.s8 %v1301
    %v1303 = vlaneseq
    %v1304 = vshrl.u32 %v1303, 7
    %v1305 = vsub.s32 %v1302, %v1304
    %v1306 = vrot.slane %v1299, %v1305
    %v1308 = vadd.f32 %v1155, %v1306
    %v1309 = vxor.u32 %v1308, 2147483648
    %v1310 = vmul.f32 %v1309, 1.442695
    %v1311 = vpow.pop %v1310
    %v1312 = vadd.f32 %v1311, 1.0
    %v1313 = vrcp.pop %v1312
    %v1314 = vmul.f32 1.0, %v1313
    %v1315 = vmul.f32 %v1314, %v1294
    %v1317 = vrot.slane %v1155, 4
    %v1319 = vadd.f32 %v1317, %v1315
    %v1320 = vtanh.pop %v1319
    %v1322 = vrot.slane %v1314, 2
    %v1324 = vsub.f32 1.0, %v1322
    %v1325 = vmul.f32 %v1324, %v1320
    %v1326 = vmul.f32 %v1322, %v1153
    %v1327 = vadd.f32 %v1325, %v1326
    %s1328 = scalar_lea.vmem %s0, 42
    %v1329 = vld [vmem:[%s1328] sm:$0x3f]
    %1330 = vmatprep.subr.mxu0 %v47
    %1331 = vmatpush1.msra.mxu0 %v46
    %1332 = vmatprep.subr.mxu0 %v50
    %1333 = vmatpush1.msra.mxu0 %v49
    %1334 = vmatprep.subr.mxu0 %v53
    %1335 = vmatpush1.msra.mxu0 %v52
    %1336 = vmatprep.subr.mxu0 %v56
    %1337 = vmatpush1.msra.mxu0 %v55
    %1338 = vmatprep.subr.mxu0 %v59
    %1339 = vmatpush1.msra.mxu0 %v58
    %1340 = vmatprep.subr.mxu0 %v62
    %1341 = vmatpush1.msra.mxu0 %v61
    %1342 = vmatprep.subr.mxu0 %v65
    %1343 = vmatpush1.msra.mxu0 %v64
    %1344 = vmatprep.subr.mxu0 %v68
    %1345 = vmatpush1.msra.mxu0 %v67
    %1346 = vmatprep.subr.mxu0 %v71
    %1347 = vmatpush1.msra.mxu0 %v70
    %1348 = vmatprep.subr.mxu0 %v74
    %1349 = vmatpush1.msra.mxu0 %v73
    %1350 = vmatprep.subr.mxu0 %v77
    %1351 = vmatpush1.msra.mxu0 %v76
    %1352 = vmatprep.subr.mxu0 %v80
    %1353 = vmatpush1.msra.mxu0 %v79
    %1354 = vmatprep.subr.mxu0 %v83
    %1355 = vmatpush1.msra.mxu0 %v82
    %1356 = vmatprep.subr.mxu0 %v86
    %1357 = vmatpush1.msra.mxu0 %v85
    %1358 = vmatprep.subr.mxu0 %v89
    %1359 = vmatpush1.msra.mxu0 %v88
    %1360 = vmatprep.subr.mxu0 %v92
    %1361 = vmatpush1.msra.mxu0 %v91
    %1362 = vmatprep.subr.mxu0 0.0
    %1363 = vmatpush1.msra.mxu0 0.0
    %1364 = vmatprep.subr.mxu0 0.0
    %1365 = vmatpush1.msra.mxu0 0.0
    %1366 = vmatprep.subr.mxu0 0.0
    %1367 = vmatpush1.msra.mxu0 0.0
    %1368 = vmatprep.subr.mxu0 0.0
    %1369 = vmatpush1.msra.mxu0 0.0
    %1370 = vmatprep.subr.mxu0 0.0
    %1371 = vmatpush1.msra.mxu0 0.0
    %1372 = vmatprep.subr.mxu0 0.0
    %1373 = vmatpush1.msra.mxu0 0.0
    %1374 = vmatprep.subr.mxu0 0.0
    %1375 = vmatpush1.msra.mxu0 0.0
    %1376 = vmatprep.subr.mxu0 0.0
    %1377 = vmatpush1.msra.mxu0 0.0
    %1378 = vmatprep.subr.mxu0 0.0
    %1379 = vmatpush1.msra.mxu0 0.0
    %1380 = vmatprep.subr.mxu0 0.0
    %1381 = vmatpush1.msra.mxu0 0.0
    %1382 = vmatprep.subr.mxu0 0.0
    %1383 = vmatpush1.msra.mxu0 0.0
    %1384 = vmatprep.subr.mxu0 0.0
    %1385 = vmatpush1.msra.mxu0 0.0
    %1386 = vmatprep.subr.mxu0 0.0
    %1387 = vmatpush1.msra.mxu0 0.0
    %1388 = vmatprep.subr.mxu0 0.0
    %1389 = vmatpush1.msra.mxu0 0.0
    %1390 = vmatprep.subr.mxu0 0.0
    %1391 = vmatpush1.msra.mxu0 0.0
    %1392 = vmatprep.subr.mxu0 0.0
    %1393 = vmatpush1.msra.mxu0 0.0
    %1394 = vmatprep.mubr.f32.mxu0 0.0
    %1395 = vmatmul.mubr.f32.gmra.mrb[0].mxu0 %v1327
    %v1396 = vpop.f32.mrb[0].mxu0
    %v1397 = vadd.f32 %v100, %v1396
    %v1398 = vpop.f32.mrb[0].mxu0
    %v1399 = vadd.f32 %v104, %v1398
    %1400 = vdwg.mxu0
    %1401 = vmatprep.subr.mxu0 0.0
    %1402 = vmatpush1.msra.mxu0 %v48
    %1403 = vmatprep.subr.mxu0 0.0
    %1404 = vmatpush1.msra.mxu0 %v51
    %1405 = vmatprep.subr.mxu0 0.0
    %1406 = vmatpush1.msra.mxu0 %v54
    %1407 = vmatprep.subr.mxu0 0.0
    %1408 = vmatpush1.msra.mxu0 %v57
    %1409 = vmatprep.subr.mxu0 0.0
    %1410 = vmatpush1.msra.mxu0 %v60
    %1411 = vmatprep.subr.mxu0 0.0
    %1412 = vmatpush1.msra.mxu0 %v63
    %1413 = vmatprep.subr.mxu0 0.0
    %1414 = vmatpush1.msra.mxu0 %v66
    %1415 = vmatprep.subr.mxu0 0.0
    %1416 = vmatpush1.msra.mxu0 %v69
    %1417 = vmatprep.subr.mxu0 0.0
    %1418 = vmatpush1.msra.mxu0 %v72
    %1419 = vmatprep.subr.mxu0 0.0
    %1420 = vmatpush1.msra.mxu0 %v75
    %1421 = vmatprep.subr.mxu0 0.0
    %1422 = vmatpush1.msra.mxu0 %v78
    %1423 = vmatprep.subr.mxu0 0.0
    %1424 = vmatpush1.msra.mxu0 %v81
    %1425 = vmatprep.subr.mxu0 0.0
    %1426 = vmatpush1.msra.mxu0 %v84
    %1427 = vmatprep.subr.mxu0 0.0
    %1428 = vmatpush1.msra.mxu0 %v87
    %1429 = vmatprep.subr.mxu0 0.0
    %1430 = vmatpush1.msra.mxu0 %v90
    %1431 = vmatprep.subr.mxu0 0.0
    %1432 = vmatpush1.msra.mxu0 %v93
    %1433 = vmatprep.subr.mxu0 0.0
    %1434 = vmatpush1.msra.mxu0 0.0
    %1435 = vmatprep.subr.mxu0 0.0
    %1436 = vmatpush1.msra.mxu0 0.0
    %1437 = vmatprep.subr.mxu0 0.0
    %1438 = vmatpush1.msra.mxu0 0.0
    %1439 = vmatprep.subr.mxu0 0.0
    %1440 = vmatpush1.msra.mxu0 0.0
    %1441 = vmatprep.subr.mxu0 0.0
    %1442 = vmatpush1.msra.mxu0 0.0
    %1443 = vmatprep.subr.mxu0 0.0
    %1444 = vmatpush1.msra.mxu0 0.0
    %1445 = vmatprep.subr.mxu0 0.0
    %1446 = vmatpush1.msra.mxu0 0.0
    %1447 = vmatprep.subr.mxu0 0.0
    %1448 = vmatpush1.msra.mxu0 0.0
    %1449 = vmatprep.subr.mxu0 0.0
    %1450 = vmatpush1.msra.mxu0 0.0
    %1451 = vmatprep.subr.mxu0 0.0
    %1452 = vmatpush1.msra.mxu0 0.0
    %1453 = vmatprep.subr.mxu0 0.0
    %1454 = vmatpush1.msra.mxu0 0.0
    %1455 = vmatprep.subr.mxu0 0.0
    %1456 = vmatpush1.msra.mxu0 0.0
    %1457 = vmatprep.subr.mxu0 0.0
    %1458 = vmatpush1.msra.mxu0 0.0
    %1459 = vmatprep.subr.mxu0 0.0
    %1460 = vmatpush1.msra.mxu0 0.0
    %1461 = vmatprep.subr.mxu0 0.0
    %1462 = vmatpush1.msra.mxu0 0.0
    %1463 = vmatprep.subr.mxu0 0.0
    %1464 = vmatpush1.msra.mxu0 0.0
    %1465 = vmatprep.mubr.f32.mxu0 0.0
    %1466 = vmatmul.mubr.f32.gmra.mrb[0].mxu0 %v1327
    %v1467 = vpop.f32.mrb[0].mxu0
    %v1468 = vadd.f32 %v108, %v1467
    %v1469 = vpop.f32.mrb[0].mxu0
    %1470 = vdwg.mxu0
    %v1473 = vcombine.low %v1397, %v1399
    %v1475 = vunpack.c.l.s4 1983009808
    %v1476 = vunpack.c.0.s8 %v1475
    %v1477 = vlaneseq
    %v1478 = vshrl.u32 %v1477, 7
    %v1479 = vsub.s32 %v1476, %v1478
    %v1480 = vrot.slane %v1473, %v1479
    %v1482 = vadd.f32 %v1329, %v1480
    %v1483 = vxor.u32 %v1482, 2147483648
    %v1484 = vmul.f32 %v1483, 1.442695
    %v1485 = vpow.pop %v1484
    %v1486 = vadd.f32 %v1485, 1.0
    %v1487 = vrcp.pop %v1486
    %v1488 = vmul.f32 1.0, %v1487
    %v1489 = vmul.f32 %v1488, %v1468
    %v1491 = vrot.slane %v1329, 4
    %v1493 = vadd.f32 %v1491, %v1489
    %v1494 = vtanh.pop %v1493
    %v1496 = vrot.slane %v1488, 2
    %v1498 = vsub.f32 1.0, %v1496
    %v1499 = vmul.f32 %v1498, %v1494
    %v1500 = vmul.f32 %v1496, %v1327
    %v1501 = vadd.f32 %v1499, %v1500
    %v1502 = vld [vmem:[%s4] sm:$0xff]
    %v1503 = vld [vmem:[%s4 + $0x8] sm:$0xff]
    %v1504 = vld [vmem:[%s4 + $0x10] sm:$0xff]
    %v1505 = vld [vmem:[%s4 + $0x18] sm:$0xff]
    %v1506 = vld [vmem:[%s4 + $0x20] sm:$0xff]
    %v1507 = vld [vmem:[%s4 + $0x28] sm:$0xff]
    %v1508 = vld [vmem:[#allocation2] sm:$0xff]
    %v1509 = vld [vmem:[#allocation2 + $0x8] sm:$0xff]
    %v1510 = vld [vmem:[#allocation2 + $0x10] sm:$0xff]
    %v1511 = vld [vmem:[#allocation2 + $0x18] sm:$0xff]
    %v1512 = vld [vmem:[#allocation2 + $0x20] sm:$0xff]
    %v1513 = vld [vmem:[#allocation2 + $0x28] sm:$0xff]
    %v1514 = vld [vmem:[#allocation2 + $0x30] sm:$0xff]
    %v1515 = vld [vmem:[#allocation2 + $0x38] sm:$0xff]
    %v1516 = vld [vmem:[#allocation2 + $0x40] sm:$0xff]
    %v1517 = vld [vmem:[#allocation2 + $0x48] sm:$0xff]
    %v1518 = vld [vmem:[#allocation2 + $0x50] sm:$0xff]
    %v1519 = vld [vmem:[#allocation2 + $0x58] sm:$0xff]
    %v1520 = vld [vmem:[#allocation2 + $0x60] sm:$0xff]
    %v1521 = vld [vmem:[#allocation2 + $0x68] sm:$0xff]
    %v1522 = vld [vmem:[#allocation2 + $0x70] sm:$0xff]
    %v1523 = vld [vmem:[#allocation2 + $0x78] sm:$0xff]
    %v1524 = vld [vmem:[#allocation2 + $0x80] sm:$0xff]
    %v1525 = vld [vmem:[#allocation2 + $0x88] sm:$0xff]
    %v1526 = vld [vmem:[#allocation2 + $0x90] sm:$0xff]
    %v1527 = vld [vmem:[#allocation2 + $0x98] sm:$0xff]
    %v1528 = vld [vmem:[#allocation2 + $0xa0] sm:$0xff]
    %v1529 = vld [vmem:[#allocation2 + $0xa8] sm:$0xff]
    %v1530 = vld [vmem:[#allocation2 + $0xb0] sm:$0xff]
    %v1531 = vld [vmem:[#allocation2 + $0xb8] sm:$0xff]
    %v1532 = vld [vmem:[#allocation2 + $0xc0] sm:$0xff]
    %v1533 = vld [vmem:[#allocation2 + $0xc8] sm:$0xff]
    %v1534 = vld [vmem:[#allocation2 + $0xd0] sm:$0xff]
    %v1535 = vld [vmem:[#allocation2 + $0xd8] sm:$0xff]
    %v1536 = vld [vmem:[#allocation2 + $0xe0] sm:$0xff]
    %v1537 = vld [vmem:[#allocation2 + $0xe8] sm:$0xff]
    %v1538 = vld [vmem:[#allocation2 + $0xf0] sm:$0xff]
    %v1539 = vld [vmem:[#allocation2 + $0xf8] sm:$0xff]
    %v1540 = vld [vmem:[#allocation2 + $0x100] sm:$0xff]
    %v1541 = vld [vmem:[#allocation2 + $0x108] sm:$0xff]
    %v1542 = vld [vmem:[#allocation2 + $0x110] sm:$0xff]
    %v1543 = vld [vmem:[#allocation2 + $0x118] sm:$0xff]
    %v1544 = vld [vmem:[#allocation2 + $0x120] sm:$0xff]
    %v1545 = vld [vmem:[#allocation2 + $0x128] sm:$0xff]
    %v1546 = vld [vmem:[#allocation2 + $0x130] sm:$0xff]
    %v1547 = vld [vmem:[#allocation2 + $0x138] sm:$0xff]
    %v1548 = vld [vmem:[#allocation2 + $0x140] sm:$0xff]
    %v1549 = vld [vmem:[#allocation2 + $0x148] sm:$0xff]
    %v1550 = vld [vmem:[#allocation2 + $0x150] sm:$0xff]
    %v1551 = vld [vmem:[#allocation2 + $0x158] sm:$0xff]
    %v1552 = vld [vmem:[#allocation2 + $0x160] sm:$0xff]
    %v1553 = vld [vmem:[#allocation2 + $0x168] sm:$0xff]
    %v1554 = vld [vmem:[#allocation2 + $0x170] sm:$0xff]
    %v1555 = vld [vmem:[#allocation2 + $0x178] sm:$0xff]
    %v1556 = vld [vmem:[%s6] sm:$0x7]
    %v1557 = vld [vmem:[%s7] sm:$0xff]
    %v1558 = vld [vmem:[%s7 + $0x8] sm:$0xff]
    %v1559 = vld [vmem:[%s7 + $0x10] sm:$0xff]
    %v1560 = vld [vmem:[%s7 + $0x18] sm:$0xff]
    %v1561 = vld [vmem:[%s7 + $0x20] sm:$0xff]
    %v1562 = vld [vmem:[%s7 + $0x28] sm:$0xff]
    %v1563 = vld [vmem:[%s7 + $0x30] sm:$0xff]
    %v1564 = vld [vmem:[%s7 + $0x38] sm:$0xff]
    %v1565 = vld [vmem:[%s7 + $0x40] sm:$0xff]
    %v1566 = vld [vmem:[%s7 + $0x48] sm:$0xff]
    %v1567 = vld [vmem:[%s7 + $0x50] sm:$0xff]
    %v1568 = vld [vmem:[%s7 + $0x58] sm:$0xff]
    %v1569 = vld [vmem:[%s7 + $0x60] sm:$0xff]
    %v1570 = vld [vmem:[%s7 + $0x68] sm:$0xff]
    %v1571 = vld [vmem:[%s7 + $0x70] sm:$0xff]
    %v1572 = vld [vmem:[%s7 + $0x78] sm:$0xff]
    %v1573 = vld [vmem:[%s8] sm:$0x1]
    %v1574 = vld [vmem:[%s1] sm:$0x3]
    %v1575 = vlaneseq
    %v1576 = vand.u32 %v1575, 127
    %1577 = vset.pattern.permute.xlu0 0
    %1578 = vperm.xlu0 %1577, %v1574
    %v1579 = vpop.permute.xlu0 %1578
    %vm1580 = vcmp.eq.s32.totalorder %v1576, %v1579
    %v1581 = vsel %vm1580, 1, 0
    %v1582 = vcvt.s32.f32 %v1581
    %vm1583 = vcmask 130048
    %v1585 = vsel %vm1583, %v1582, 0
    %1587 = vmatprep.subr.mxu0 %v1503
    %1588 = vmatpush1.msra.mxu0 %v1502
    %1589 = vmatprep.subr.mxu0 %v1506
    %1590 = vmatpush1.msra.mxu0 %v1505
    %1591 = vmatprep.subr.mxu0 0.0
    %1592 = vmatpush1.msra.mxu0 0.0
    %1593 = vmatprep.subr.mxu0 0.0
    %1594 = vmatpush1.msra.mxu0 0.0
    %1595 = vmatprep.subr.mxu0 0.0
    %1596 = vmatpush1.msra.mxu0 0.0
    %1597 = vmatprep.subr.mxu0 0.0
    %1598 = vmatpush1.msra.mxu0 0.0
    %1599 = vmatprep.subr.mxu0 0.0
    %1600 = vmatpush1.msra.mxu0 0.0
    %1601 = vmatprep.subr.mxu0 0.0
    %1602 = vmatpush1.msra.mxu0 0.0
    %1603 = vmatprep.subr.mxu0 0.0
    %1604 = vmatpush1.msra.mxu0 0.0
    %1605 = vmatprep.subr.mxu0 0.0
    %1606 = vmatpush1.msra.mxu0 0.0
    %1607 = vmatprep.subr.mxu0 0.0
    %1608 = vmatpush1.msra.mxu0 0.0
    %1609 = vmatprep.subr.mxu0 0.0
    %1610 = vmatpush1.msra.mxu0 0.0
    %1611 = vmatprep.subr.mxu0 0.0
    %1612 = vmatpush1.msra.mxu0 0.0
    %1613 = vmatprep.subr.mxu0 0.0
    %1614 = vmatpush1.msra.mxu0 0.0
    %1615 = vmatprep.subr.mxu0 0.0
    %1616 = vmatpush1.msra.mxu0 0.0
    %1617 = vmatprep.subr.mxu0 0.0
    %1618 = vmatpush1.msra.mxu0 0.0
    %1619 = vmatprep.subr.mxu0 0.0
    %1620 = vmatpush1.msra.mxu0 0.0
    %1621 = vmatprep.subr.mxu0 0.0
    %1622 = vmatpush1.msra.mxu0 0.0
    %1623 = vmatprep.subr.mxu0 0.0
    %1624 = vmatpush1.msra.mxu0 0.0
    %1625 = vmatprep.subr.mxu0 0.0
    %1626 = vmatpush1.msra.mxu0 0.0
    %1627 = vmatprep.subr.mxu0 0.0
    %1628 = vmatpush1.msra.mxu0 0.0
    %1629 = vmatprep.subr.mxu0 0.0
    %1630 = vmatpush1.msra.mxu0 0.0
    %1631 = vmatprep.subr.mxu0 0.0
    %1632 = vmatpush1.msra.mxu0 0.0
    %1633 = vmatprep.subr.mxu0 0.0
    %1634 = vmatpush1.msra.mxu0 0.0
    %1635 = vmatprep.subr.mxu0 0.0
    %1636 = vmatpush1.msra.mxu0 0.0
    %1637 = vmatprep.subr.mxu0 0.0
    %1638 = vmatpush1.msra.mxu0 0.0
    %1639 = vmatprep.subr.mxu0 0.0
    %1640 = vmatpush1.msra.mxu0 0.0
    %1641 = vmatprep.subr.mxu0 0.0
    %1642 = vmatpush1.msra.mxu0 0.0
    %1643 = vmatprep.subr.mxu0 0.0
    %1644 = vmatpush1.msra.mxu0 0.0
    %1645 = vmatprep.subr.mxu0 0.0
    %1646 = vmatpush1.msra.mxu0 0.0
    %1647 = vmatprep.subr.mxu0 0.0
    %1648 = vmatpush1.msra.mxu0 0.0
    %1649 = vmatprep.subr.mxu0 0.0
    %1650 = vmatpush1.msra.mxu0 0.0
    %1651 = vmatprep.mubr.f32.mxu0 0.0
    %1652 = vmatmul.mubr.f32.gmra.mrb[0].mxu0 %v1585
    %v1653 = vpop.f32.mrb[0].mxu0
    %v1654 = vadd.f32 0.0, %v1653
    %v1655 = vpop.f32.mrb[0].mxu0
    %v1656 = vadd.f32 0.0, %v1655
    %1657 = vdwg.mxu0
    %1658 = vmatprep.subr.mxu0 0.0
    %1659 = vmatpush1.msra.mxu0 %v1504
    %1660 = vmatprep.subr.mxu0 0.0
    %1661 = vmatpush1.msra.mxu0 %v1507
    %1662 = vmatprep.subr.mxu0 0.0
    %1663 = vmatpush1.msra.mxu0 0.0
    %1664 = vmatprep.subr.mxu0 0.0
    %1665 = vmatpush1.msra.mxu0 0.0
    %1666 = vmatprep.subr.mxu0 0.0
    %1667 = vmatpush1.msra.mxu0 0.0
    %1668 = vmatprep.subr.mxu0 0.0
    %1669 = vmatpush1.msra.mxu0 0.0
    %1670 = vmatprep.subr.mxu0 0.0
    %1671 = vmatpush1.msra.mxu0 0.0
    %1672 = vmatprep.subr.mxu0 0.0
    %1673 = vmatpush1.msra.mxu0 0.0
    %1674 = vmatprep.subr.mxu0 0.0
    %1675 = vmatpush1.msra.mxu0 0.0
    %1676 = vmatprep.subr.mxu0 0.0
    %1677 = vmatpush1.msra.mxu0 0.0
    %1678 = vmatprep.subr.mxu0 0.0
    %1679 = vmatpush1.msra.mxu0 0.0
    %1680 = vmatprep.subr.mxu0 0.0
    %1681 = vmatpush1.msra.mxu0 0.0
    %1682 = vmatprep.subr.mxu0 0.0
    %1683 = vmatpush1.msra.mxu0 0.0
    %1684 = vmatprep.subr.mxu0 0.0
    %1685 = vmatpush1.msra.mxu0 0.0
    %1686 = vmatprep.subr.mxu0 0.0
    %1687 = vmatpush1.msra.mxu0 0.0
    %1688 = vmatprep.subr.mxu0 0.0
    %1689 = vmatpush1.msra.mxu0 0.0
    %1690 = vmatprep.subr.mxu0 0.0
    %1691 = vmatpush1.msra.mxu0 0.0
    %1692 = vmatprep.subr.mxu0 0.0
    %1693 = vmatpush1.msra.mxu0 0.0
    %1694 = vmatprep.subr.mxu0 0.0
    %1695 = vmatpush1.msra.mxu0 0.0
    %1696 = vmatprep.subr.mxu0 0.0
    %1697 = vmatpush1.msra.mxu0 0.0
    %1698 = vmatprep.subr.mxu0 0.0
    %1699 = vmatpush1.msra.mxu0 0.0
    %1700 = vmatprep.subr.mxu0 0.0
    %1701 = vmatpush1.msra.mxu0 0.0
    %1702 = vmatprep.subr.mxu0 0.0
    %1703 = vmatpush1.msra.mxu0 0.0
    %1704 = vmatprep.subr.mxu0 0.0
    %1705 = vmatpush1.msra.mxu0 0.0
    %1706 = vmatprep.subr.mxu0 0.0
    %1707 = vmatpush1.msra.mxu0 0.0
    %1708 = vmatprep.subr.mxu0 0.0
    %1709 = vmatpush1.msra.mxu0 0.0
    %1710 = vmatprep.subr.mxu0 0.0
    %1711 = vmatpush1.msra.mxu0 0.0
    %1712 = vmatprep.subr.mxu0 0.0
    %1713 = vmatpush1.msra.mxu0 0.0
    %1714 = vmatprep.subr.mxu0 0.0
    %1715 = vmatpush1.msra.mxu0 0.0
    %1716 = vmatprep.subr.mxu0 0.0
    %1717 = vmatpush1.msra.mxu0 0.0
    %1718 = vmatprep.subr.mxu0 0.0
    %1719 = vmatpush1.msra.mxu0 0.0
    %1720 = vmatprep.subr.mxu0 0.0
    %1721 = vmatpush1.msra.mxu0 0.0
    %1722 = vmatprep.mubr.f32.mxu0 0.0
    %1723 = vmatmul.mubr.f32.gmra.mrb[0].mxu0 %v1585
    %v1724 = vpop.f32.mrb[0].mxu0
    %v1725 = vadd.f32 0.0, %v1724
    %v1726 = vpop.f32.mrb[0].mxu0
    %1727 = vdwg.mxu0
    %v1729 = vlaneseq
    %v1730 = vshrl.u32 %v1729, 7
    %v1731 = vsub.s32 0, %v1730
    %v1732 = vrot.slane %v1556, %v1731
    %v1733 = vlaneseq
    %v1734 = vshrl.u32 %v1733, 7
    %v1735 = vsub.s32 1, %v1734
    %v1736 = vrot.slane %v1556, %v1735
    %v1737 = vlaneseq
    %v1738 = vshrl.u32 %v1737, 7
    %v1739 = vsub.s32 2, %v1738
    %v1740 = vrot.slane %v1556, %v1739
    %1744 = vmatprep.subr.mxu0 %v1509
    %1745 = vmatpush1.msra.mxu0 %v1508
    %1746 = vmatprep.subr.mxu0 %v1512
    %1747 = vmatpush1.msra.mxu0 %v1511
    %1748 = vmatprep.subr.mxu0 %v1515
    %1749 = vmatpush1.msra.mxu0 %v1514
    %1750 = vmatprep.subr.mxu0 %v1518
    %1751 = vmatpush1.msra.mxu0 %v1517
    %1752 = vmatprep.subr.mxu0 %v1521
    %1753 = vmatpush1.msra.mxu0 %v1520
    %1754 = vmatprep.subr.mxu0 %v1524
    %1755 = vmatpush1.msra.mxu0 %v1523
    %1756 = vmatprep.subr.mxu0 %v1527
    %1757 = vmatpush1.msra.mxu0 %v1526
    %1758 = vmatprep.subr.mxu0 %v1530
    %1759 = vmatpush1.msra.mxu0 %v1529
    %1760 = vmatprep.subr.mxu0 %v1533
    %1761 = vmatpush1.msra.mxu0 %v1532
    %1762 = vmatprep.subr.mxu0 %v1536
    %1763 = vmatpush1.msra.mxu0 %v1535
    %1764 = vmatprep.subr.mxu0 %v1539
    %1765 = vmatpush1.msra.mxu0 %v1538
    %1766 = vmatprep.subr.mxu0 %v1542
    %1767 = vmatpush1.msra.mxu0 %v1541
    %1768 = vmatprep.subr.mxu0 %v1545
    %1769 = vmatpush1.msra.mxu0 %v1544
    %1770 = vmatprep.subr.mxu0 %v1548
    %1771 = vmatpush1.msra.mxu0 %v1547
    %1772 = vmatprep.subr.mxu0 %v1551
    %1773 = vmatpush1.msra.mxu0 %v1550
    %1774 = vmatprep.subr.mxu0 %v1554
    %1775 = vmatpush1.msra.mxu0 %v1553
    %1776 = vmatprep.subr.mxu0 0.0
    %1777 = vmatpush1.msra.mxu0 0.0
    %1778 = vmatprep.subr.mxu0 0.0
    %1779 = vmatpush1.msra.mxu0 0.0
    %1780 = vmatprep.subr.mxu0 0.0
    %1781 = vmatpush1.msra.mxu0 0.0
    %1782 = vmatprep.subr.mxu0 0.0
    %1783 = vmatpush1.msra.mxu0 0.0
    %1784 = vmatprep.subr.mxu0 0.0
    %1785 = vmatpush1.msra.mxu0 0.0
    %1786 = vmatprep.subr.mxu0 0.0
    %1787 = vmatpush1.msra.mxu0 0.0
    %1788 = vmatprep.subr.mxu0 0.0
    %1789 = vmatpush1.msra.mxu0 0.0
    %1790 = vmatprep.subr.mxu0 0.0
    %1791 = vmatpush1.msra.mxu0 0.0
    %1792 = vmatprep.subr.mxu0 0.0
    %1793 = vmatpush1.msra.mxu0 0.0
    %1794 = vmatprep.subr.mxu0 0.0
    %1795 = vmatpush1.msra.mxu0 0.0
    %1796 = vmatprep.subr.mxu0 0.0
    %1797 = vmatpush1.msra.mxu0 0.0
    %1798 = vmatprep.subr.mxu0 0.0
    %1799 = vmatpush1.msra.mxu0 0.0
    %1800 = vmatprep.subr.mxu0 0.0
    %1801 = vmatpush1.msra.mxu0 0.0
    %1802 = vmatprep.subr.mxu0 0.0
    %1803 = vmatpush1.msra.mxu0 0.0
    %1804 = vmatprep.subr.mxu0 0.0
    %1805 = vmatpush1.msra.mxu0 0.0
    %1806 = vmatprep.subr.mxu0 0.0
    %1807 = vmatpush1.msra.mxu0 0.0
    %1808 = vmatprep.mubr.f32.mxu0 0.0
    %1809 = vmatmul.mubr.f32.gmra.mrb[0].mxu0 %v1501
    %v1810 = vpop.f32.mrb[0].mxu0
    %v1811 = vadd.f32 %v1732, %v1810
    %v1812 = vpop.f32.mrb[0].mxu0
    %v1813 = vadd.f32 %v1736, %v1812
    %1814 = vdwg.mxu0
    %1815 = vmatprep.subr.mxu0 0.0
    %1816 = vmatpush1.msra.mxu0 %v1510
    %1817 = vmatprep.subr.mxu0 0.0
    %1818 = vmatpush1.msra.mxu0 %v1513
    %1819 = vmatprep.subr.mxu0 0.0
    %1820 = vmatpush1.msra.mxu0 %v1516
    %1821 = vmatprep.subr.mxu0 0.0
    %1822 = vmatpush1.msra.mxu0 %v1519
    %1823 = vmatprep.subr.mxu0 0.0
    %1824 = vmatpush1.msra.mxu0 %v1522
    %1825 = vmatprep.subr.mxu0 0.0
    %1826 = vmatpush1.msra.mxu0 %v1525
    %1827 = vmatprep.subr.mxu0 0.0
    %1828 = vmatpush1.msra.mxu0 %v1528
    %1829 = vmatprep.subr.mxu0 0.0
    %1830 = vmatpush1.msra.mxu0 %v1531
    %1831 = vmatprep.subr.mxu0 0.0
    %1832 = vmatpush1.msra.mxu0 %v1534
    %1833 = vmatprep.subr.mxu0 0.0
    %1834 = vmatpush1.msra.mxu0 %v1537
    %1835 = vmatprep.subr.mxu0 0.0
    %1836 = vmatpush1.msra.mxu0 %v1540
    %1837 = vmatprep.subr.mxu0 0.0
    %1838 = vmatpush1.msra.mxu0 %v1543
    %1839 = vmatprep.subr.mxu0 0.0
    %1840 = vmatpush1.msra.mxu0 %v1546
    %1841 = vmatprep.subr.mxu0 0.0
    %1842 = vmatpush1.msra.mxu0 %v1549
    %1843 = vmatprep.subr.mxu0 0.0
    %1844 = vmatpush1.msra.mxu0 %v1552
    %1845 = vmatprep.subr.mxu0 0.0
    %1846 = vmatpush1.msra.mxu0 %v1555
    %1847 = vmatprep.subr.mxu0 0.0
    %1848 = vmatpush1.msra.mxu0 0.0
    %1849 = vmatprep.subr.mxu0 0.0
    %1850 = vmatpush1.msra.mxu0 0.0
    %1851 = vmatprep.subr.mxu0 0.0
    %1852 = vmatpush1.msra.mxu0 0.0
    %1853 = vmatprep.subr.mxu0 0.0
    %1854 = vmatpush1.msra.mxu0 0.0
    %1855 = vmatprep.subr.mxu0 0.0
    %1856 = vmatpush1.msra.mxu0 0.0
    %1857 = vmatprep.subr.mxu0 0.0
    %1858 = vmatpush1.msra.mxu0 0.0
    %1859 = vmatprep.subr.mxu0 0.0
    %1860 = vmatpush1.msra.mxu0 0.0
    %1861 = vmatprep.subr.mxu0 0.0
    %1862 = vmatpush1.msra.mxu0 0.0
    %1863 = vmatprep.subr.mxu0 0.0
    %1864 = vmatpush1.msra.mxu0 0.0
    %1865 = vmatprep.subr.mxu0 0.0
    %1866 = vmatpush1.msra.mxu0 0.0
    %1867 = vmatprep.subr.mxu0 0.0
    %1868 = vmatpush1.msra.mxu0 0.0
    %1869 = vmatprep.subr.mxu0 0.0
    %1870 = vmatpush1.msra.mxu0 0.0
    %1871 = vmatprep.subr.mxu0 0.0
    %1872 = vmatpush1.msra.mxu0 0.0
    %1873 = vmatprep.subr.mxu0 0.0
    %1874 = vmatpush1.msra.mxu0 0.0
    %1875 = vmatprep.subr.mxu0 0.0
    %1876 = vmatpush1.msra.mxu0 0.0
    %1877 = vmatprep.subr.mxu0 0.0
    %1878 = vmatpush1.msra.mxu0 0.0
    %1879 = vmatprep.mubr.f32.mxu0 0.0
    %1880 = vmatmul.mubr.f32.gmra.mrb[0].mxu0 %v1501
    %v1881 = vpop.f32.mrb[0].mxu0
    %v1882 = vadd.f32 %v1740, %v1881
    %v1883 = vpop.f32.mrb[0].mxu0
    %1884 = vdwg.mxu0
    %v1885 = vadd.f32 %v1654, %v1811
    %v1886 = vadd.f32 %v1656, %v1813
    %v1887 = vxor.u32 %v1885, 2147483648
    %v1888 = vxor.u32 %v1886, 2147483648
    %v1889 = vmul.f32 %v1887, 1.442695
    %v1890 = vpow.pop %v1889
    %v1891 = vmul.f32 %v1888, 1.442695
    %v1892 = vpow.pop %v1891
    %v1893 = vadd.f32 %v1890, 1.0
    %v1894 = vadd.f32 %v1892, 1.0
    %v1895 = vrcp.pop %v1893
    %v1896 = vmul.f32 1.0, %v1895
    %v1897 = vrcp.pop %v1894
    %v1898 = vmul.f32 1.0, %v1897
    %v1899 = vmul.f32 %v1896, %v1882
    %v1900 = vadd.f32 %v1725, %v1899
    %v1901 = vtanh.pop %v1900
    %v1902 = vsub.f32 1.0, %v1898
    %v1903 = vmul.f32 %v1902, %v1901
    %v1904 = vmul.f32 %v1898, %v1501
    %v1905 = vadd.f32 %v1903, %v1904
    %v1907 = vlaneseq
    %v1908 = vshrl.u32 %v1907, 7
    %v1909 = vsub.s32 0, %v1908
    %v1910 = vrot.slane %v1573, %v1909
    %1912 = vmatprep.subr.mxu0 0.0
    %1913 = vmatpush1.msra.mxu0 %v1557
    %1914 = vmatprep.subr.mxu0 0.0
    %1915 = vmatpush1.msra.mxu0 %v1558
    %1916 = vmatprep.subr.mxu0 0.0
    %1917 = vmatpush1.msra.mxu0 %v1559
    %1918 = vmatprep.subr.mxu0 0.0
    %1919 = vmatpush1.msra.mxu0 %v1560
    %1920 = vmatprep.subr.mxu0 0.0
    %1921 = vmatpush1.msra.mxu0 %v1561
    %1922 = vmatprep.subr.mxu0 0.0
    %1923 = vmatpush1.msra.mxu0 %v1562
    %1924 = vmatprep.subr.mxu0 0.0
    %1925 = vmatpush1.msra.mxu0 %v1563
    %1926 = vmatprep.subr.mxu0 0.0
    %1927 = vmatpush1.msra.mxu0 %v1564
    %1928 = vmatprep.subr.mxu0 0.0
    %1929 = vmatpush1.msra.mxu0 %v1565
    %1930 = vmatprep.subr.mxu0 0.0
    %1931 = vmatpush1.msra.mxu0 %v1566
    %1932 = vmatprep.subr.mxu0 0.0
    %1933 = vmatpush1.msra.mxu0 %v1567
    %1934 = vmatprep.subr.mxu0 0.0
    %1935 = vmatpush1.msra.mxu0 %v1568
    %1936 = vmatprep.subr.mxu0 0.0
    %1937 = vmatpush1.msra.mxu0 %v1569
    %1938 = vmatprep.subr.mxu0 0.0
    %1939 = vmatpush1.msra.mxu0 %v1570
    %1940 = vmatprep.subr.mxu0 0.0
    %1941 = vmatpush1.msra.mxu0 %v1571
    %1942 = vmatprep.subr.mxu0 0.0
    %1943 = vmatpush1.msra.mxu0 %v1572
    %1944 = vmatprep.subr.mxu0 0.0
    %1945 = vmatpush1.msra.mxu0 0.0
    %1946 = vmatprep.subr.mxu0 0.0
    %1947 = vmatpush1.msra.mxu0 0.0
    %1948 = vmatprep.subr.mxu0 0.0
    %1949 = vmatpush1.msra.mxu0 0.0
    %1950 = vmatprep.subr.mxu0 0.0
    %1951 = vmatpush1.msra.mxu0 0.0
    %1952 = vmatprep.subr.mxu0 0.0
    %1953 = vmatpush1.msra.mxu0 0.0
    %1954 = vmatprep.subr.mxu0 0.0
    %1955 = vmatpush1.msra.mxu0 0.0
    %1956 = vmatprep.subr.mxu0 0.0
    %1957 = vmatpush1.msra.mxu0 0.0
    %1958 = vmatprep.subr.mxu0 0.0
    %1959 = vmatpush1.msra.mxu0 0.0
    %1960 = vmatprep.subr.mxu0 0.0
    %1961 = vmatpush1.msra.mxu0 0.0
    %1962 = vmatprep.subr.mxu0 0.0
    %1963 = vmatpush1.msra.mxu0 0.0
    %1964 = vmatprep.subr.mxu0 0.0
    %1965 = vmatpush1.msra.mxu0 0.0
    %1966 = vmatprep.subr.mxu0 0.0
    %1967 = vmatpush1.msra.mxu0 0.0
    %1968 = vmatprep.subr.mxu0 0.0
    %1969 = vmatpush1.msra.mxu0 0.0
    %1970 = vmatprep.subr.mxu0 0.0
    %1971 = vmatpush1.msra.mxu0 0.0
    %1972 = vmatprep.subr.mxu0 0.0
    %1973 = vmatpush1.msra.mxu0 0.0
    %1974 = vmatprep.subr.mxu0 0.0
    %1975 = vmatpush1.msra.mxu0 0.0
    %1976 = vmatprep.mubr.f32.mxu0 0.0
    %1977 = vmatmul.mubr.f32.gmra.mrb[0].mxu0 %v1905
    %v1978 = vpop.f32.mrb[0].mxu0
    %v1979 = vadd.f32 %v1910, %v1978
    %v1980 = vpop.f32.mrb[0].mxu0
    %1981 = vdwg.mxu0
    %vm1982 = vcmask 1041408
    %v1983 = vsel %vm1982, %v1979, -inf
    %1984 = vmax.xlane.f32.xlu0 %v1983
    %v1985 = vpop.xlane.xlu0 %1984
    %v1986 = vsub.f32 %v1979, %v1985
    %v1987 = vmul.f32 %v1986, 1.442695
    %v1988 = vpow.pop %v1987
    %v1989 = vsel %vm1982, %v1988, 0.0
    %1990 = vadd.xlane.f32.xlu0 %v1989
    %v1991 = vpop.xlane.xlu0 %1990
    %v1992 = vlog2.pop %v1991
    %v1993 = vmul.f32 %v1992, 0.6931472
    %v1994 = vadd.f32 %v1993, %v1985
    %v1995 = vsub.f32 %v1979, %v1994
    %vm1996 = vcmp.eq.f32.partialorder %v1979, %v1985
    %v1997 = vsel %vm1996, %v1576, 128
    %v1998 = vsel %vm1982, %v1997, 2147483647
    %v1999 = vand.u32 %v1998, 65535
    %v2000 = vshra.s32 %v1998, 16
    %v2001 = vcvt.s32.f32 %v1999
    %v2002 = vcvt.s32.f32 %v2000
    %2003 = vmin.xlane.f32.xlu0 %v2002
    %v2004 = vpop.xlane.xlu0 %2003
    %vm2005 = vcmp.eq.f32.partialorder %v2002, %v2004
    %v2006 = vsel %vm2005, %v2001, inf
    %2007 = vmin.xlane.f32.xlu0 %v2006
    %v2008 = vpop.xlane.xlu0 %2007
    %v2009 = vcvt.f32.s32 %v2008
    %v2010 = vcvt.f32.s32 %v2004
    %v2011 = vshll.u32 %v2010, 16
    %v2012 = vadd.s32 %v2011, %v2009
    %vm2013 = vcmp.eq.s32.totalorder %v1576, %v2012
    %v2014 = vsel %vm2013, 1, 0
    %v2015 = vcvt.s32.f32 %v2014
    %v2017 = vsel %vm1583, %v2015, 0
    %2019 = vmatprep.subr.mxu0 %v1503
    %2020 = vmatpush1.msra.mxu0 %v1502
    %2021 = vmatprep.subr.mxu0 %v1506
    %2022 = vmatpush1.msra.mxu0 %v1505
    %2023 = vmatprep.subr.mxu0 0.0
    %2024 = vmatpush1.msra.mxu0 0.0
    %2025 = vmatprep.subr.mxu0 0.0
    %2026 = vmatpush1.msra.mxu0 0.0
    %2027 = vmatprep.subr.mxu0 0.0
    %2028 = vmatpush1.msra.mxu0 0.0
    %2029 = vmatprep.subr.mxu0 0.0
    %2030 = vmatpush1.msra.mxu0 0.0
    %2031 = vmatprep.subr.mxu0 0.0
    %2032 = vmatpush1.msra.mxu0 0.0
    %2033 = vmatprep.subr.mxu0 0.0
    %2034 = vmatpush1.msra.mxu0 0.0
    %2035 = vmatprep.subr.mxu0 0.0
    %2036 = vmatpush1.msra.mxu0 0.0
    %2037 = vmatprep.subr.mxu0 0.0
    %2038 = vmatpush1.msra.mxu0 0.0
    %2039 = vmatprep.subr.mxu0 0.0
    %2040 = vmatpush1.msra.mxu0 0.0
    %2041 = vmatprep.subr.mxu0 0.0
    %2042 = vmatpush1.msra.mxu0 0.0
    %2043 = vmatprep.subr.mxu0 0.0
    %2044 = vmatpush1.msra.mxu0 0.0
    %2045 = vmatprep.subr.mxu0 0.0
    %2046 = vmatpush1.msra.mxu0 0.0
    %2047 = vmatprep.subr.mxu0 0.0
    %2048 = vmatpush1.msra.mxu0 0.0
    %2049 = vmatprep.subr.mxu0 0.0
    %2050 = vmatpush1.msra.mxu0 0.0
    %2051 = vmatprep.subr.mxu0 0.0
    %2052 = vmatpush1.msra.mxu0 0.0
    %2053 = vmatprep.subr.mxu0 0.0
    %2054 = vmatpush1.msra.mxu0 0.0
    %2055 = vmatprep.subr.mxu0 0.0
    %2056 = vmatpush1.msra.mxu0 0.0
    %2057 = vmatprep.subr.mxu0 0.0
    %2058 = vmatpush1.msra.mxu0 0.0
    %2059 = vmatprep.subr.mxu0 0.0
    %2060 = vmatpush1.msra.mxu0 0.0
    %2061 = vmatprep.subr.mxu0 0.0
    %2062 = vmatpush1.msra.mxu0 0.0
    %2063 = vmatprep.subr.mxu0 0.0
    %2064 = vmatpush1.msra.mxu0 0.0
    %2065 = vmatprep.subr.mxu0 0.0
    %2066 = vmatpush1.msra.mxu0 0.0
    %2067 = vmatprep.subr.mxu0 0.0
    %2068 = vmatpush1.msra.mxu0 0.0
    %2069 = vmatprep.subr.mxu0 0.0
    %2070 = vmatpush1.msra.mxu0 0.0
    %2071 = vmatprep.subr.mxu0 0.0
    %2072 = vmatpush1.msra.mxu0 0.0
    %2073 = vmatprep.subr.mxu0 0.0
    %2074 = vmatpush1.msra.mxu0 0.0
    %2075 = vmatprep.subr.mxu0 0.0
    %2076 = vmatpush1.msra.mxu0 0.0
    %2077 = vmatprep.subr.mxu0 0.0
    %2078 = vmatpush1.msra.mxu0 0.0
    %2079 = vmatprep.subr.mxu0 0.0
    %2080 = vmatpush1.msra.mxu0 0.0
    %2081 = vmatprep.subr.mxu0 0.0
    %2082 = vmatpush1.msra.mxu0 0.0
    %2083 = vmatprep.mubr.f32.mxu0 0.0
    %2084 = vmatmul.mubr.f32.gmra.mrb[0].mxu0 %v2017
    %v2085 = vpop.f32.mrb[0].mxu0
    %v2086 = vadd.f32 0.0, %v2085
    %v2087 = vpop.f32.mrb[0].mxu0
    %v2088 = vadd.f32 0.0, %v2087
    %2089 = vdwg.mxu0
    %2090 = vmatprep.subr.mxu0 0.0
    %2091 = vmatpush1.msra.mxu0 %v1504
    %2092 = vmatprep.subr.mxu0 0.0
    %2093 = vmatpush1.msra.mxu0 %v1507
    %2094 = vmatprep.subr.mxu0 0.0
    %2095 = vmatpush1.msra.mxu0 0.0
    %2096 = vmatprep.subr.mxu0 0.0
    %2097 = vmatpush1.msra.mxu0 0.0
    %2098 = vmatprep.subr.mxu0 0.0
    %2099 = vmatpush1.msra.mxu0 0.0
    %2100 = vmatprep.subr.mxu0 0.0
    %2101 = vmatpush1.msra.mxu0 0.0
    %2102 = vmatprep.subr.mxu0 0.0
    %2103 = vmatpush1.msra.mxu0 0.0
    %2104 = vmatprep.subr.mxu0 0.0
    %2105 = vmatpush1.msra.mxu0 0.0
    %2106 = vmatprep.subr.mxu0 0.0
    %2107 = vmatpush1.msra.mxu0 0.0
    %2108 = vmatprep.subr.mxu0 0.0
    %2109 = vmatpush1.msra.mxu0 0.0
    %2110 = vmatprep.subr.mxu0 0.0
    %2111 = vmatpush1.msra.mxu0 0.0
    %2112 = vmatprep.subr.mxu0 0.0
    %2113 = vmatpush1.msra.mxu0 0.0
    %2114 = vmatprep.subr.mxu0 0.0
    %2115 = vmatpush1.msra.mxu0 0.0
    %2116 = vmatprep.subr.mxu0 0.0
    %2117 = vmatpush1.msra.mxu0 0.0
    %2118 = vmatprep.subr.mxu0 0.0
    %2119 = vmatpush1.msra.mxu0 0.0
    %2120 = vmatprep.subr.mxu0 0.0
    %2121 = vmatpush1.msra.mxu0 0.0
    %2122 = vmatprep.subr.mxu0 0.0
    %2123 = vmatpush1.msra.mxu0 0.0
    %2124 = vmatprep.subr.mxu0 0.0
    %2125 = vmatpush1.msra.mxu0 0.0
    %2126 = vmatprep.subr.mxu0 0.0
    %2127 = vmatpush1.msra.mxu0 0.0
    %2128 = vmatprep.subr.mxu0 0.0
    %2129 = vmatpush1.msra.mxu0 0.0
    %2130 = vmatprep.subr.mxu0 0.0
    %2131 = vmatpush1.msra.mxu0 0.0
    %2132 = vmatprep.subr.mxu0 0.0
    %2133 = vmatpush1.msra.mxu0 0.0
    %2134 = vmatprep.subr.mxu0 0.0
    %2135 = vmatpush1.msra.mxu0 0.0
    %2136 = vmatprep.subr.mxu0 0.0
    %2137 = vmatpush1.msra.mxu0 0.0
    %2138 = vmatprep.subr.mxu0 0.0
    %2139 = vmatpush1.msra.mxu0 0.0
    %2140 = vmatprep.subr.mxu0 0.0
    %2141 = vmatpush1.msra.mxu0 0.0
    %2142 = vmatprep.subr.mxu0 0.0
    %2143 = vmatpush1.msra.mxu0 0.0
    %2144 = vmatprep.subr.mxu0 0.0
    %2145 = vmatpush1.msra.mxu0 0.0
    %2146 = vmatprep.subr.mxu0 0.0
    %2147 = vmatpush1.msra.mxu0 0.0
    %2148 = vmatprep.subr.mxu0 0.0
    %2149 = vmatpush1.msra.mxu0 0.0
    %2150 = vmatprep.subr.mxu0 0.0
    %2151 = vmatpush1.msra.mxu0 0.0
    %2152 = vmatprep.subr.mxu0 0.0
    %2153 = vmatpush1.msra.mxu0 0.0
    %2154 = vmatprep.mubr.f32.mxu0 0.0
    %2155 = vmatmul.mubr.f32.gmra.mrb[0].mxu0 %v2017
    %v2156 = vpop.f32.mrb[0].mxu0
    %v2157 = vadd.f32 0.0, %v2156
    %v2158 = vpop.f32.mrb[0].mxu0
    %2159 = vdwg.mxu0
    %2160 = vmatprep.subr.mxu0 %v1509
    %2161 = vmatpush1.msra.mxu0 %v1508
    %2162 = vmatprep.subr.mxu0 %v1512
    %2163 = vmatpush1.msra.mxu0 %v1511
    %2164 = vmatprep.subr.mxu0 %v1515
    %2165 = vmatpush1.msra.mxu0 %v1514
    %2166 = vmatprep.subr.mxu0 %v1518
    %2167 = vmatpush1.msra.mxu0 %v1517
    %2168 = vmatprep.subr.mxu0 %v1521
    %2169 = vmatpush1.msra.mxu0 %v1520
    %2170 = vmatprep.subr.mxu0 %v1524
    %2171 = vmatpush1.msra.mxu0 %v1523
    %2172 = vmatprep.subr.mxu0 %v1527
    %2173 = vmatpush1.msra.mxu0 %v1526
    %2174 = vmatprep.subr.mxu0 %v1530
    %2175 = vmatpush1.msra.mxu0 %v1529
    %2176 = vmatprep.subr.mxu0 %v1533
    %2177 = vmatpush1.msra.mxu0 %v1532
    %2178 = vmatprep.subr.mxu0 %v1536
    %2179 = vmatpush1.msra.mxu0 %v1535
    %2180 = vmatprep.subr.mxu0 %v1539
    %2181 = vmatpush1.msra.mxu0 %v1538
    %2182 = vmatprep.subr.mxu0 %v1542
    %2183 = vmatpush1.msra.mxu0 %v1541
    %2184 = vmatprep.subr.mxu0 %v1545
    %2185 = vmatpush1.msra.mxu0 %v1544
    %2186 = vmatprep.subr.mxu0 %v1548
    %2187 = vmatpush1.msra.mxu0 %v1547
    %2188 = vmatprep.subr.mxu0 %v1551
    %2189 = vmatpush1.msra.mxu0 %v1550
    %2190 = vmatprep.subr.mxu0 %v1554
    %2191 = vmatpush1.msra.mxu0 %v1553
    %2192 = vmatprep.subr.mxu0 0.0
    %2193 = vmatpush1.msra.mxu0 0.0
    %2194 = vmatprep.subr.mxu0 0.0
    %2195 = vmatpush1.msra.mxu0 0.0
    %2196 = vmatprep.subr.mxu0 0.0
    %2197 = vmatpush1.msra.mxu0 0.0
    %2198 = vmatprep.subr.mxu0 0.0
    %2199 = vmatpush1.msra.mxu0 0.0
    %2200 = vmatprep.subr.mxu0 0.0
    %2201 = vmatpush1.msra.mxu0 0.0
    %2202 = vmatprep.subr.mxu0 0.0
    %2203 = vmatpush1.msra.mxu0 0.0
    %2204 = vmatprep.subr.mxu0 0.0
    %2205 = vmatpush1.msra.mxu0 0.0
    %2206 = vmatprep.subr.mxu0 0.0
    %2207 = vmatpush1.msra.mxu0 0.0
    %2208 = vmatprep.subr.mxu0 0.0
    %2209 = vmatpush1.msra.mxu0 0.0
    %2210 = vmatprep.subr.mxu0 0.0
    %2211 = vmatpush1.msra.mxu0 0.0
    %2212 = vmatprep.subr.mxu0 0.0
    %2213 = vmatpush1.msra.mxu0 0.0
    %2214 = vmatprep.subr.mxu0 0.0
    %2215 = vmatpush1.msra.mxu0 0.0
    %2216 = vmatprep.subr.mxu0 0.0
    %2217 = vmatpush1.msra.mxu0 0.0
    %2218 = vmatprep.subr.mxu0 0.0
    %2219 = vmatpush1.msra.mxu0 0.0
    %2220 = vmatprep.subr.mxu0 0.0
    %2221 = vmatpush1.msra.mxu0 0.0
    %2222 = vmatprep.subr.mxu0 0.0
    %2223 = vmatpush1.msra.mxu0 0.0
    %2224 = vmatprep.mubr.f32.mxu0 0.0
    %2225 = vmatmul.mubr.f32.gmra.mrb[0].mxu0 %v1905
    %v2226 = vpop.f32.mrb[0].mxu0
    %v2227 = vadd.f32 %v1732, %v2226
    %v2228 = vpop.f32.mrb[0].mxu0
    %v2229 = vadd.f32 %v1736, %v2228
    %2230 = vdwg.mxu0
    %2231 = vmatprep.subr.mxu0 0.0
    %2232 = vmatpush1.msra.mxu0 %v1510
    %2233 = vmatprep.subr.mxu0 0.0
    %2234 = vmatpush1.msra.mxu0 %v1513
    %2235 = vmatprep.subr.mxu0 0.0
    %2236 = vmatpush1.msra.mxu0 %v1516
    %2237 = vmatprep.subr.mxu0 0.0
    %2238 = vmatpush1.msra.mxu0 %v1519
    %2239 = vmatprep.subr.mxu0 0.0
    %2240 = vmatpush1.msra.mxu0 %v1522
    %2241 = vmatprep.subr.mxu0 0.0
    %2242 = vmatpush1.msra.mxu0 %v1525
    %2243 = vmatprep.subr.mxu0 0.0
    %2244 = vmatpush1.msra.mxu0 %v1528
    %2245 = vmatprep.subr.mxu0 0.0
    %2246 = vmatpush1.msra.mxu0 %v1531
    %2247 = vmatprep.subr.mxu0 0.0
    %2248 = vmatpush1.msra.mxu0 %v1534
    %2249 = vmatprep.subr.mxu0 0.0
    %2250 = vmatpush1.msra.mxu0 %v1537
    %2251 = vmatprep.subr.mxu0 0.0
    %2252 = vmatpush1.msra.mxu0 %v1540
    %2253 = vmatprep.subr.mxu0 0.0
    %2254 = vmatpush1.msra.mxu0 %v1543
    %2255 = vmatprep.subr.mxu0 0.0
    %2256 = vmatpush1.msra.mxu0 %v1546
    %2257 = vmatprep.subr.mxu0 0.0
    %2258 = vmatpush1.msra.mxu0 %v1549
    %2259 = vmatprep.subr.mxu0 0.0
    %2260 = vmatpush1.msra.mxu0 %v1552
    %2261 = vmatprep.subr.mxu0 0.0
    %2262 = vmatpush1.msra.mxu0 %v1555
    %2263 = vmatprep.subr.mxu0 0.0
    %2264 = vmatpush1.msra.mxu0 0.0
    %2265 = vmatprep.subr.mxu0 0.0
    %2266 = vmatpush1.msra.mxu0 0.0
    %2267 = vmatprep.subr.mxu0 0.0
    %2268 = vmatpush1.msra.mxu0 0.0
    %2269 = vmatprep.subr.mxu0 0.0
    %2270 = vmatpush1.msra.mxu0 0.0
    %2271 = vmatprep.subr.mxu0 0.0
    %2272 = vmatpush1.msra.mxu0 0.0
    %2273 = vmatprep.subr.mxu0 0.0
    %2274 = vmatpush1.msra.mxu0 0.0
    %2275 = vmatprep.subr.mxu0 0.0
    %2276 = vmatpush1.msra.mxu0 0.0
    %2277 = vmatprep.subr.mxu0 0.0
    %2278 = vmatpush1.msra.mxu0 0.0
    %2279 = vmatprep.subr.mxu0 0.0
    %2280 = vmatpush1.msra.mxu0 0.0
    %2281 = vmatprep.subr.mxu0 0.0
    %2282 = vmatpush1.msra.mxu0 0.0
    %2283 = vmatprep.subr.mxu0 0.0
    %2284 = vmatpush1.msra.mxu0 0.0
    %2285 = vmatprep.subr.mxu0 0.0
    %2286 = vmatpush1.msra.mxu0 0.0
    %2287 = vmatprep.subr.mxu0 0.0
    %2288 = vmatpush1.msra.mxu0 0.0
    %2289 = vmatprep.subr.mxu0 0.0
    %2290 = vmatpush1.msra.mxu0 0.0
    %2291 = vmatprep.subr.mxu0 0.0
    %2292 = vmatpush1.msra.mxu0 0.0
    %2293 = vmatprep.subr.mxu0 0.0
    %2294 = vmatpush1.msra.mxu0 0.0
    %2295 = vmatprep.mubr.f32.mxu0 0.0
    %2296 = vmatmul.mubr.f32.gmra.mrb[0].mxu0 %v1905
    %v2297 = vpop.f32.mrb[0].mxu0
    %v2298 = vadd.f32 %v1740, %v2297
    %v2299 = vpop.f32.mrb[0].mxu0
    %2300 = vdwg.mxu0
    %v2301 = vadd.f32 %v2086, %v2227
    %v2302 = vadd.f32 %v2088, %v2229
    %v2303 = vxor.u32 %v2301, 2147483648
    %v2304 = vxor.u32 %v2302, 2147483648
    %v2305 = vmul.f32 %v2303, 1.442695
    %v2306 = vpow.pop %v2305
    %v2307 = vmul.f32 %v2304, 1.442695
    %v2308 = vpow.pop %v2307
    %v2309 = vadd.f32 %v2306, 1.0
    %v2310 = vadd.f32 %v2308, 1.0
    %v2311 = vrcp.pop %v2309
    %v2312 = vmul.f32 1.0, %v2311
    %v2313 = vrcp.pop %v2310
    %v2314 = vmul.f32 1.0, %v2313
    %v2315 = vmul.f32 %v2312, %v2298
    %v2316 = vadd.f32 %v2157, %v2315
    %v2317 = vtanh.pop %v2316
    %v2318 = vsub.f32 1.0, %v2314
    %v2319 = vmul.f32 %v2318, %v2317
    %v2320 = vmul.f32 %v2314, %v1905
    %v2321 = vadd.f32 %v2319, %v2320
    %2322 = vmatprep.subr.mxu0 0.0
    %2323 = vmatpush1.msra.mxu0 %v1557
    %2324 = vmatprep.subr.mxu0 0.0
    %2325 = vmatpush1.msra.mxu0 %v1558
    %2326 = vmatprep.subr.mxu0 0.0
    %2327 = vmatpush1.msra.mxu0 %v1559
    %2328 = vmatprep.subr.mxu0 0.0
    %2329 = vmatpush1.msra.mxu0 %v1560
    %2330 = vmatprep.subr.mxu0 0.0
    %2331 = vmatpush1.msra.mxu0 %v1561
    %2332 = vmatprep.subr.mxu0 0.0
    %2333 = vmatpush1.msra.mxu0 %v1562
    %2334 = vmatprep.subr.mxu0 0.0
    %2335 = vmatpush1.msra.mxu0 %v1563
    %2336 = vmatprep.subr.mxu0 0.0
    %2337 = vmatpush1.msra.mxu0 %v1564
    %2338 = vmatprep.subr.mxu0 0.0
    %2339 = vmatpush1.msra.mxu0 %v1565
    %2340 = vmatprep.subr.mxu0 0.0
    %2341 = vmatpush1.msra.mxu0 %v1566
    %2342 = vmatprep.subr.mxu0 0.0
    %2343 = vmatpush1.msra.mxu0 %v1567
    %2344 = vmatprep.subr.mxu0 0.0
    %2345 = vmatpush1.msra.mxu0 %v1568
    %2346 = vmatprep.subr.mxu0 0.0
    %2347 = vmatpush1.msra.mxu0 %v1569
    %2348 = vmatprep.subr.mxu0 0.0
    %2349 = vmatpush1.msra.mxu0 %v1570
    %2350 = vmatprep.subr.mxu0 0.0
    %2351 = vmatpush1.msra.mxu0 %v1571
    %2352 = vmatprep.subr.mxu0 0.0
    %2353 = vmatpush1.msra.mxu0 %v1572
    %2354 = vmatprep.subr.mxu0 0.0
    %2355 = vmatpush1.msra.mxu0 0.0
    %2356 = vmatprep.subr.mxu0 0.0
    %2357 = vmatpush1.msra.mxu0 0.0
    %2358 = vmatprep.subr.mxu0 0.0
    %2359 = vmatpush1.msra.mxu0 0.0
    %2360 = vmatprep.subr.mxu0 0.0
    %2361 = vmatpush1.msra.mxu0 0.0
    %2362 = vmatprep.subr.mxu0 0.0
    %2363 = vmatpush1.msra.mxu0 0.0
    %2364 = vmatprep.subr.mxu0 0.0
    %2365 = vmatpush1.msra.mxu0 0.0
    %2366 = vmatprep.subr.mxu0 0.0
    %2367 = vmatpush1.msra.mxu0 0.0
    %2368 = vmatprep.subr.mxu0 0.0
    %2369 = vmatpush1.msra.mxu0 0.0
    %2370 = vmatprep.subr.mxu0 0.0
    %2371 = vmatpush1.msra.mxu0 0.0
    %2372 = vmatprep.subr.mxu0 0.0
    %2373 = vmatpush1.msra.mxu0 0.0
    %2374 = vmatprep.subr.mxu0 0.0
    %2375 = vmatpush1.msra.mxu0 0.0
    %2376 = vmatprep.subr.mxu0 0.0
    %2377 = vmatpush1.msra.mxu0 0.0
    %2378 = vmatprep.subr.mxu0 0.0
    %2379 = vmatpush1.msra.mxu0 0.0
    %2380 = vmatprep.subr.mxu0 0.0
    %2381 = vmatpush1.msra.mxu0 0.0
    %2382 = vmatprep.subr.mxu0 0.0
    %2383 = vmatpush1.msra.mxu0 0.0
    %2384 = vmatprep.subr.mxu0 0.0
    %2385 = vmatpush1.msra.mxu0 0.0
    %2386 = vmatprep.mubr.f32.mxu0 0.0
    %2387 = vmatmul.mubr.f32.gmra.mrb[0].mxu0 %v2321
    %v2388 = vpop.f32.mrb[0].mxu0
    %v2389 = vadd.f32 %v1910, %v2388
    %v2390 = vpop.f32.mrb[0].mxu0
    %2391 = vdwg.mxu0
    %v2392 = vsel %vm1982, %v2389, -inf
    %2393 = vmax.xlane.f32.xlu0 %v2392
    %v2394 = vpop.xlane.xlu0 %2393
    %v2395 = vsub.f32 %v2389, %v2394
    %v2396 = vmul.f32 %v2395, 1.442695
    %v2397 = vpow.pop %v2396
    %v2398 = vsel %vm1982, %v2397, 0.0
    %2399 = vadd.xlane.f32.xlu0 %v2398
    %v2400 = vpop.xlane.xlu0 %2399
    %v2401 = vlog2.pop %v2400
    %v2402 = vmul.f32 %v2401, 0.6931472
    %v2403 = vadd.f32 %v2402, %v2394
    %v2404 = vsub.f32 %v2389, %v2403
    %vm2405 = vcmp.eq.f32.partialorder %v2389, %v2394
    %v2406 = vsel %vm2405, %v1576, 128
    %v2407 = vsel %vm1982, %v2406, 2147483647
    %v2408 = vand.u32 %v2407, 65535
    %v2409 = vshra.s32 %v2407, 16
    %v2410 = vcvt.s32.f32 %v2408
    %v2411 = vcvt.s32.f32 %v2409
    %2412 = vmin.xlane.f32.xlu0 %v2411
    %v2413 = vpop.xlane.xlu0 %2412
    %vm2414 = vcmp.eq.f32.partialorder %v2411, %v2413
    %v2415 = vsel %vm2414, %v2410, inf
    %2416 = vmin.xlane.f32.xlu0 %v2415
    %v2417 = vpop.xlane.xlu0 %2416
    %v2418 = vcvt.f32.s32 %v2417
    %v2419 = vcvt.f32.s32 %v2413
    %v2420 = vshll.u32 %v2419, 16
    %v2421 = vadd.s32 %v2420, %v2418
    %vm2422 = vcmp.eq.s32.totalorder %v1576, %v2421
    %v2423 = vsel %vm2422, 1, 0
    %v2424 = vcvt.s32.f32 %v2423
    %v2426 = vsel %vm1583, %v2424, 0
    %2428 = vmatprep.subr.mxu0 %v1503
    %2429 = vmatpush1.msra.mxu0 %v1502
    %2430 = vmatprep.subr.mxu0 %v1506
    %2431 = vmatpush1.msra.mxu0 %v1505
    %2432 = vmatprep.subr.mxu0 0.0
    %2433 = vmatpush1.msra.mxu0 0.0
    %2434 = vmatprep.subr.mxu0 0.0
    %2435 = vmatpush1.msra.mxu0 0.0
    %2436 = vmatprep.subr.mxu0 0.0
    %2437 = vmatpush1.msra.mxu0 0.0
    %2438 = vmatprep.subr.mxu0 0.0
    %2439 = vmatpush1.msra.mxu0 0.0
    %2440 = vmatprep.subr.mxu0 0.0
    %2441 = vmatpush1.msra.mxu0 0.0
    %2442 = vmatprep.subr.mxu0 0.0
    %2443 = vmatpush1.msra.mxu0 0.0
    %2444 = vmatprep.subr.mxu0 0.0
    %2445 = vmatpush1.msra.mxu0 0.0
    %2446 = vmatprep.subr.mxu0 0.0
    %2447 = vmatpush1.msra.mxu0 0.0
    %2448 = vmatprep.subr.mxu0 0.0
    %2449 = vmatpush1.msra.mxu0 0.0
    %2450 = vmatprep.subr.mxu0 0.0
    %2451 = vmatpush1.msra.mxu0 0.0
    %2452 = vmatprep.subr.mxu0 0.0
    %2453 = vmatpush1.msra.mxu0 0.0
    %2454 = vmatprep.subr.mxu0 0.0
    %2455 = vmatpush1.msra.mxu0 0.0
    %2456 = vmatprep.subr.mxu0 0.0
    %2457 = vmatpush1.msra.mxu0 0.0
    %2458 = vmatprep.subr.mxu0 0.0
    %2459 = vmatpush1.msra.mxu0 0.0
    %2460 = vmatprep.subr.mxu0 0.0
    %2461 = vmatpush1.msra.mxu0 0.0
    %2462 = vmatprep.subr.mxu0 0.0
    %2463 = vmatpush1.msra.mxu0 0.0
    %2464 = vmatprep.subr.mxu0 0.0
    %2465 = vmatpush1.msra.mxu0 0.0
    %2466 = vmatprep.subr.mxu0 0.0
    %2467 = vmatpush1.msra.mxu0 0.0
    %2468 = vmatprep.subr.mxu0 0.0
    %2469 = vmatpush1.msra.mxu0 0.0
    %2470 = vmatprep.subr.mxu0 0.0
    %2471 = vmatpush1.msra.mxu0 0.0
    %2472 = vmatprep.subr.mxu0 0.0
    %2473 = vmatpush1.msra.mxu0 0.0
    %2474 = vmatprep.subr.mxu0 0.0
    %2475 = vmatpush1.msra.mxu0 0.0
    %2476 = vmatprep.subr.mxu0 0.0
    %2477 = vmatpush1.msra.mxu0 0.0
    %2478 = vmatprep.subr.mxu0 0.0
    %2479 = vmatpush1.msra.mxu0 0.0
    %2480 = vmatprep.subr.mxu0 0.0
    %2481 = vmatpush1.msra.mxu0 0.0
    %2482 = vmatprep.subr.mxu0 0.0
    %2483 = vmatpush1.msra.mxu0 0.0
    %2484 = vmatprep.subr.mxu0 0.0
    %2485 = vmatpush1.msra.mxu0 0.0
    %2486 = vmatprep.subr.mxu0 0.0
    %2487 = vmatpush1.msra.mxu0 0.0
    %2488 = vmatprep.subr.mxu0 0.0
    %2489 = vmatpush1.msra.mxu0 0.0
    %2490 = vmatprep.subr.mxu0 0.0
    %2491 = vmatpush1.msra.mxu0 0.0
    %2492 = vmatprep.mubr.f32.mxu0 0.0
    %2493 = vmatmul.mubr.f32.gmra.mrb[0].mxu0 %v2426
    %v2494 = vpop.f32.mrb[0].mxu0
    %v2495 = vadd.f32 0.0, %v2494
    %v2496 = vpop.f32.mrb[0].mxu0
    %v2497 = vadd.f32 0.0, %v2496
    %2498 = vdwg.mxu0
    %2499 = vmatprep.subr.mxu0 0.0
    %2500 = vmatpush1.msra.mxu0 %v1504
    %2501 = vmatprep.subr.mxu0 0.0
    %2502 = vmatpush1.msra.mxu0 %v1507
    %2503 = vmatprep.subr.mxu0 0.0
    %2504 = vmatpush1.msra.mxu0 0.0
    %2505 = vmatprep.subr.mxu0 0.0
    %2506 = vmatpush1.msra.mxu0 0.0
    %2507 = vmatprep.subr.mxu0 0.0
    %2508 = vmatpush1.msra.mxu0 0.0
    %2509 = vmatprep.subr.mxu0 0.0
    %2510 = vmatpush1.msra.mxu0 0.0
    %2511 = vmatprep.subr.mxu0 0.0
    %2512 = vmatpush1.msra.mxu0 0.0
    %2513 = vmatprep.subr.mxu0 0.0
    %2514 = vmatpush1.msra.mxu0 0.0
    %2515 = vmatprep.subr.mxu0 0.0
    %2516 = vmatpush1.msra.mxu0 0.0
    %2517 = vmatprep.subr.mxu0 0.0
    %2518 = vmatpush1.msra.mxu0 0.0
    %2519 = vmatprep.subr.mxu0 0.0
    %2520 = vmatpush1.msra.mxu0 0.0
    %2521 = vmatprep.subr.mxu0 0.0
    %2522 = vmatpush1.msra.mxu0 0.0
    %2523 = vmatprep.subr.mxu0 0.0
    %2524 = vmatpush1.msra.mxu0 0.0
    %2525 = vmatprep.subr.mxu0 0.0
    %2526 = vmatpush1.msra.mxu0 0.0
    %2527 = vmatprep.subr.mxu0 0.0
    %2528 = vmatpush1.msra.mxu0 0.0
    %2529 = vmatprep.subr.mxu0 0.0
    %2530 = vmatpush1.msra.mxu0 0.0
    %2531 = vmatprep.subr.mxu0 0.0
    %2532 = vmatpush1.msra.mxu0 0.0
    %2533 = vmatprep.subr.mxu0 0.0
    %2534 = vmatpush1.msra.mxu0 0.0
    %2535 = vmatprep.subr.mxu0 0.0
    %2536 = vmatpush1.msra.mxu0 0.0
    %2537 = vmatprep.subr.mxu0 0.0
    %2538 = vmatpush1.msra.mxu0 0.0
    %2539 = vmatprep.subr.mxu0 0.0
    %2540 = vmatpush1.msra.mxu0 0.0
    %2541 = vmatprep.subr.mxu0 0.0
    %2542 = vmatpush1.msra.mxu0 0.0
    %2543 = vmatprep.subr.mxu0 0.0
    %2544 = vmatpush1.msra.mxu0 0.0
    %2545 = vmatprep.subr.mxu0 0.0
    %2546 = vmatpush1.msra.mxu0 0.0
    %2547 = vmatprep.subr.mxu0 0.0
    %2548 = vmatpush1.msra.mxu0 0.0
    %2549 = vmatprep.subr.mxu0 0.0
    %2550 = vmatpush1.msra.mxu0 0.0
    %2551 = vmatprep.subr.mxu0 0.0
    %2552 = vmatpush1.msra.mxu0 0.0
    %2553 = vmatprep.subr.mxu0 0.0
    %2554 = vmatpush1.msra.mxu0 0.0
    %2555 = vmatprep.subr.mxu0 0.0
    %2556 = vmatpush1.msra.mxu0 0.0
    %2557 = vmatprep.subr.mxu0 0.0
    %2558 = vmatpush1.msra.mxu0 0.0
    %2559 = vmatprep.subr.mxu0 0.0
    %2560 = vmatpush1.msra.mxu0 0.0
    %2561 = vmatprep.subr.mxu0 0.0
    %2562 = vmatpush1.msra.mxu0 0.0
    %2563 = vmatprep.mubr.f32.mxu0 0.0
    %2564 = vmatmul.mubr.f32.gmra.mrb[0].mxu0 %v2426
    %v2565 = vpop.f32.mrb[0].mxu0
    %v2566 = vadd.f32 0.0, %v2565
    %v2567 = vpop.f32.mrb[0].mxu0
    %2568 = vdwg.mxu0
    %2569 = vmatprep.subr.mxu0 %v1509
    %2570 = vmatpush1.msra.mxu0 %v1508
    %2571 = vmatprep.subr.mxu0 %v1512
    %2572 = vmatpush1.msra.mxu0 %v1511
    %2573 = vmatprep.subr.mxu0 %v1515
    %2574 = vmatpush1.msra.mxu0 %v1514
    %2575 = vmatprep.subr.mxu0 %v1518
    %2576 = vmatpush1.msra.mxu0 %v1517
    %2577 = vmatprep.subr.mxu0 %v1521
    %2578 = vmatpush1.msra.mxu0 %v1520
    %2579 = vmatprep.subr.mxu0 %v1524
    %2580 = vmatpush1.msra.mxu0 %v1523
    %2581 = vmatprep.subr.mxu0 %v1527
    %2582 = vmatpush1.msra.mxu0 %v1526
    %2583 = vmatprep.subr.mxu0 %v1530
    %2584 = vmatpush1.msra.mxu0 %v1529
    %2585 = vmatprep.subr.mxu0 %v1533
    %2586 = vmatpush1.msra.mxu0 %v1532
    %2587 = vmatprep.subr.mxu0 %v1536
    %2588 = vmatpush1.msra.mxu0 %v1535
    %2589 = vmatprep.subr.mxu0 %v1539
    %2590 = vmatpush1.msra.mxu0 %v1538
    %2591 = vmatprep.subr.mxu0 %v1542
    %2592 = vmatpush1.msra.mxu0 %v1541
    %2593 = vmatprep.subr.mxu0 %v1545
    %2594 = vmatpush1.msra.mxu0 %v1544
    %2595 = vmatprep.subr.mxu0 %v1548
    %2596 = vmatpush1.msra.mxu0 %v1547
    %2597 = vmatprep.subr.mxu0 %v1551
    %2598 = vmatpush1.msra.mxu0 %v1550
    %2599 = vmatprep.subr.mxu0 %v1554
    %2600 = vmatpush1.msra.mxu0 %v1553
    %2601 = vmatprep.subr.mxu0 0.0
    %2602 = vmatpush1.msra.mxu0 0.0
    %2603 = vmatprep.subr.mxu0 0.0
    %2604 = vmatpush1.msra.mxu0 0.0
    %2605 = vmatprep.subr.mxu0 0.0
    %2606 = vmatpush1.msra.mxu0 0.0
    %2607 = vmatprep.subr.mxu0 0.0
    %2608 = vmatpush1.msra.mxu0 0.0
    %2609 = vmatprep.subr.mxu0 0.0
    %2610 = vmatpush1.msra.mxu0 0.0
    %2611 = vmatprep.subr.mxu0 0.0
    %2612 = vmatpush1.msra.mxu0 0.0
    %2613 = vmatprep.subr.mxu0 0.0
    %2614 = vmatpush1.msra.mxu0 0.0
    %2615 = vmatprep.subr.mxu0 0.0
    %2616 = vmatpush1.msra.mxu0 0.0
    %2617 = vmatprep.subr.mxu0 0.0
    %2618 = vmatpush1.msra.mxu0 0.0
    %2619 = vmatprep.subr.mxu0 0.0
    %2620 = vmatpush1.msra.mxu0 0.0
    %2621 = vmatprep.subr.mxu0 0.0
    %2622 = vmatpush1.msra.mxu0 0.0
    %2623 = vmatprep.subr.mxu0 0.0
    %2624 = vmatpush1.msra.mxu0 0.0
    %2625 = vmatprep.subr.mxu0 0.0
    %2626 = vmatpush1.msra.mxu0 0.0
    %2627 = vmatprep.subr.mxu0 0.0
    %2628 = vmatpush1.msra.mxu0 0.0
    %2629 = vmatprep.subr.mxu0 0.0
    %2630 = vmatpush1.msra.mxu0 0.0
    %2631 = vmatprep.subr.mxu0 0.0
    %2632 = vmatpush1.msra.mxu0 0.0
    %2633 = vmatprep.mubr.f32.mxu0 0.0
    %2634 = vmatmul.mubr.f32.gmra.mrb[0].mxu0 %v2321
    %v2635 = vpop.f32.mrb[0].mxu0
    %v2636 = vadd.f32 %v1732, %v2635
    %v2637 = vpop.f32.mrb[0].mxu0
    %v2638 = vadd.f32 %v1736, %v2637
    %2639 = vdwg.mxu0
    %2640 = vmatprep.subr.mxu0 0.0
    %2641 = vmatpush1.msra.mxu0 %v1510
    %2642 = vmatprep.subr.mxu0 0.0
    %2643 = vmatpush1.msra.mxu0 %v1513
    %2644 = vmatprep.subr.mxu0 0.0
    %2645 = vmatpush1.msra.mxu0 %v1516
    %2646 = vmatprep.subr.mxu0 0.0
    %2647 = vmatpush1.msra.mxu0 %v1519
    %2648 = vmatprep.subr.mxu0 0.0
    %2649 = vmatpush1.msra.mxu0 %v1522
    %2650 = vmatprep.subr.mxu0 0.0
    %2651 = vmatpush1.msra.mxu0 %v1525
    %2652 = vmatprep.subr.mxu0 0.0
    %2653 = vmatpush1.msra.mxu0 %v1528
    %2654 = vmatprep.subr.mxu0 0.0
    %2655 = vmatpush1.msra.mxu0 %v1531
    %2656 = vmatprep.subr.mxu0 0.0
    %2657 = vmatpush1.msra.mxu0 %v1534
    %2658 = vmatprep.subr.mxu0 0.0
    %2659 = vmatpush1.msra.mxu0 %v1537
    %2660 = vmatprep.subr.mxu0 0.0
    %2661 = vmatpush1.msra.mxu0 %v1540
    %2662 = vmatprep.subr.mxu0 0.0
    %2663 = vmatpush1.msra.mxu0 %v1543
    %2664 = vmatprep.subr.mxu0 0.0
    %2665 = vmatpush1.msra.mxu0 %v1546
    %2666 = vmatprep.subr.mxu0 0.0
    %2667 = vmatpush1.msra.mxu0 %v1549
    %2668 = vmatprep.subr.mxu0 0.0
    %2669 = vmatpush1.msra.mxu0 %v1552
    %2670 = vmatprep.subr.mxu0 0.0
    %2671 = vmatpush1.msra.mxu0 %v1555
    %2672 = vmatprep.subr.mxu0 0.0
    %2673 = vmatpush1.msra.mxu0 0.0
    %2674 = vmatprep.subr.mxu0 0.0
    %2675 = vmatpush1.msra.mxu0 0.0
    %2676 = vmatprep.subr.mxu0 0.0
    %2677 = vmatpush1.msra.mxu0 0.0
    %2678 = vmatprep.subr.mxu0 0.0
    %2679 = vmatpush1.msra.mxu0 0.0
    %2680 = vmatprep.subr.mxu0 0.0
    %2681 = vmatpush1.msra.mxu0 0.0
    %2682 = vmatprep.subr.mxu0 0.0
    %2683 = vmatpush1.msra.mxu0 0.0
    %2684 = vmatprep.subr.mxu0 0.0
    %2685 = vmatpush1.msra.mxu0 0.0
    %2686 = vmatprep.subr.mxu0 0.0
    %2687 = vmatpush1.msra.mxu0 0.0
    %2688 = vmatprep.subr.mxu0 0.0
    %2689 = vmatpush1.msra.mxu0 0.0
    %2690 = vmatprep.subr.mxu0 0.0
    %2691 = vmatpush1.msra.mxu0 0.0
    %2692 = vmatprep.subr.mxu0 0.0
    %2693 = vmatpush1.msra.mxu0 0.0
    %2694 = vmatprep.subr.mxu0 0.0
    %2695 = vmatpush1.msra.mxu0 0.0
    %2696 = vmatprep.subr.mxu0 0.0
    %2697 = vmatpush1.msra.mxu0 0.0
    %2698 = vmatprep.subr.mxu0 0.0
    %2699 = vmatpush1.msra.mxu0 0.0
    %2700 = vmatprep.subr.mxu0 0.0
    %2701 = vmatpush1.msra.mxu0 0.0
    %2702 = vmatprep.subr.mxu0 0.0
    %2703 = vmatpush1.msra.mxu0 0.0
    %2704 = vmatprep.mubr.f32.mxu0 0.0
    %2705 = vmatmul.mubr.f32.gmra.mrb[0].mxu0 %v2321
    %v2706 = vpop.f32.mrb[0].mxu0
    %v2707 = vadd.f32 %v1740, %v2706
    %v2708 = vpop.f32.mrb[0].mxu0
    %2709 = vdwg.mxu0
    %v2710 = vadd.f32 %v2495, %v2636
    %v2711 = vadd.f32 %v2497, %v2638
    %v2712 = vxor.u32 %v2710, 2147483648
    %v2713 = vxor.u32 %v2711, 2147483648
    %v2714 = vmul.f32 %v2712, 1.442695
    %v2715 = vpow.pop %v2714
    %v2716 = vmul.f32 %v2713, 1.442695
    %v2717 = vpow.pop %v2716
    %v2718 = vadd.f32 %v2715, 1.0
    %v2719 = vadd.f32 %v2717, 1.0
    %v2720 = vrcp.pop %v2718
    %v2721 = vmul.f32 1.0, %v2720
    %v2722 = vrcp.pop %v2719
    %v2723 = vmul.f32 1.0, %v2722
    %v2724 = vmul.f32 %v2721, %v2707
    %v2725 = vadd.f32 %v2566, %v2724
    %v2726 = vtanh.pop %v2725
    %v2727 = vsub.f32 1.0, %v2723
    %v2728 = vmul.f32 %v2727, %v2726
    %v2729 = vmul.f32 %v2723, %v2321
    %v2730 = vadd.f32 %v2728, %v2729
    %2731 = vmatprep.subr.mxu0 0.0
    %2732 = vmatpush1.msra.mxu0 %v1557
    %2733 = vmatprep.subr.mxu0 0.0
    %2734 = vmatpush1.msra.mxu0 %v1558
    %2735 = vmatprep.subr.mxu0 0.0
    %2736 = vmatpush1.msra.mxu0 %v1559
    %2737 = vmatprep.subr.mxu0 0.0
    %2738 = vmatpush1.msra.mxu0 %v1560
    %2739 = vmatprep.subr.mxu0 0.0
    %2740 = vmatpush1.msra.mxu0 %v1561
    %2741 = vmatprep.subr.mxu0 0.0
    %2742 = vmatpush1.msra.mxu0 %v1562
    %2743 = vmatprep.subr.mxu0 0.0
    %2744 = vmatpush1.msra.mxu0 %v1563
    %2745 = vmatprep.subr.mxu0 0.0
    %2746 = vmatpush1.msra.mxu0 %v1564
    %2747 = vmatprep.subr.mxu0 0.0
    %2748 = vmatpush1.msra.mxu0 %v1565
    %2749 = vmatprep.subr.mxu0 0.0
    %2750 = vmatpush1.msra.mxu0 %v1566
    %2751 = vmatprep.subr.mxu0 0.0
    %2752 = vmatpush1.msra.mxu0 %v1567
    %2753 = vmatprep.subr.mxu0 0.0
    %2754 = vmatpush1.msra.mxu0 %v1568
    %2755 = vmatprep.subr.mxu0 0.0
    %2756 = vmatpush1.msra.mxu0 %v1569
    %2757 = vmatprep.subr.mxu0 0.0
    %2758 = vmatpush1.msra.mxu0 %v1570
    %2759 = vmatprep.subr.mxu0 0.0
    %2760 = vmatpush1.msra.mxu0 %v1571
    %2761 = vmatprep.subr.mxu0 0.0
    %2762 = vmatpush1.msra.mxu0 %v1572
    %2763 = vmatprep.subr.mxu0 0.0
    %2764 = vmatpush1.msra.mxu0 0.0
    %2765 = vmatprep.subr.mxu0 0.0
    %2766 = vmatpush1.msra.mxu0 0.0
    %2767 = vmatprep.subr.mxu0 0.0
    %2768 = vmatpush1.msra.mxu0 0.0
    %2769 = vmatprep.subr.mxu0 0.0
    %2770 = vmatpush1.msra.mxu0 0.0
    %2771 = vmatprep.subr.mxu0 0.0
    %2772 = vmatpush1.msra.mxu0 0.0
    %2773 = vmatprep.subr.mxu0 0.0
    %2774 = vmatpush1.msra.mxu0 0.0
    %2775 = vmatprep.subr.mxu0 0.0
    %2776 = vmatpush1.msra.mxu0 0.0
    %2777 = vmatprep.subr.mxu0 0.0
    %2778 = vmatpush1.msra.mxu0 0.0
    %2779 = vmatprep.subr.mxu0 0.0
    %2780 = vmatpush1.msra.mxu0 0.0
    %2781 = vmatprep.subr.mxu0 0.0
    %2782 = vmatpush1.msra.mxu0 0.0
    %2783 = vmatprep.subr.mxu0 0.0
    %2784 = vmatpush1.msra.mxu0 0.0
    %2785 = vmatprep.subr.mxu0 0.0
    %2786 = vmatpush1.msra.mxu0 0.0
    %2787 = vmatprep.subr.mxu0 0.0
    %2788 = vmatpush1.msra.mxu0 0.0
    %2789 = vmatprep.subr.mxu0 0.0
    %2790 = vmatpush1.msra.mxu0 0.0
    %2791 = vmatprep.subr.mxu0 0.0
    %2792 = vmatpush1.msra.mxu0 0.0
    %2793 = vmatprep.subr.mxu0 0.0
    %2794 = vmatpush1.msra.mxu0 0.0
    %2795 = vmatprep.mubr.f32.mxu0 0.0
    %2796 = vmatmul.mubr.f32.gmra.mrb[0].mxu0 %v2730
    %v2797 = vpop.f32.mrb[0].mxu0
    %v2798 = vadd.f32 %v1910, %v2797
    %v2799 = vpop.f32.mrb[0].mxu0
    %2800 = vdwg.mxu0
    %v2801 = vsel %vm1982, %v2798, -inf
    %2802 = vmax.xlane.f32.xlu0 %v2801
    %v2803 = vpop.xlane.xlu0 %2802
    %v2804 = vsub.f32 %v2798, %v2803
    %v2805 = vmul.f32 %v2804, 1.442695
    %v2806 = vpow.pop %v2805
    %v2807 = vsel %vm1982, %v2806, 0.0
    %2808 = vadd.xlane.f32.xlu0 %v2807
    %v2809 = vpop.xlane.xlu0 %2808
    %v2810 = vlog2.pop %v2809
    %v2811 = vmul.f32 %v2810, 0.6931472
    %v2812 = vadd.f32 %v2811, %v2803
    %v2813 = vsub.f32 %v2798, %v2812
    %vm2814 = vcmp.eq.f32.partialorder %v2798, %v2803
    %v2815 = vsel %vm2814, %v1576, 128
    %v2816 = vsel %vm1982, %v2815, 2147483647
    %v2817 = vand.u32 %v2816, 65535
    %v2818 = vshra.s32 %v2816, 16
    %v2819 = vcvt.s32.f32 %v2817
    %v2820 = vcvt.s32.f32 %v2818
    %2821 = vmin.xlane.f32.xlu0 %v2820
    %v2822 = vpop.xlane.xlu0 %2821
    %vm2823 = vcmp.eq.f32.partialorder %v2820, %v2822
    %v2824 = vsel %vm2823, %v2819, inf
    %2825 = vmin.xlane.f32.xlu0 %v2824
    %v2826 = vpop.xlane.xlu0 %2825
    %v2827 = vcvt.f32.s32 %v2826
    %v2828 = vcvt.f32.s32 %v2822
    %v2829 = vshll.u32 %v2828, 16
    %v2830 = vadd.s32 %v2829, %v2827
    %vm2831 = vcmp.eq.s32.totalorder %v1576, %v2830
    %v2832 = vsel %vm2831, 1, 0
    %v2833 = vcvt.s32.f32 %v2832
    %v2835 = vsel %vm1583, %v2833, 0
    %2837 = vmatprep.subr.mxu0 %v1503
    %2838 = vmatpush1.msra.mxu0 %v1502
    %2839 = vmatprep.subr.mxu0 %v1506
    %2840 = vmatpush1.msra.mxu0 %v1505
    %2841 = vmatprep.subr.mxu0 0.0
    %2842 = vmatpush1.msra.mxu0 0.0
    %2843 = vmatprep.subr.mxu0 0.0
    %2844 = vmatpush1.msra.mxu0 0.0
    %2845 = vmatprep.subr.mxu0 0.0
    %2846 = vmatpush1.msra.mxu0 0.0
    %2847 = vmatprep.subr.mxu0 0.0
    %2848 = vmatpush1.msra.mxu0 0.0
    %2849 = vmatprep.subr.mxu0 0.0
    %2850 = vmatpush1.msra.mxu0 0.0
    %2851 = vmatprep.subr.mxu0 0.0
    %2852 = vmatpush1.msra.mxu0 0.0
    %2853 = vmatprep.subr.mxu0 0.0
    %2854 = vmatpush1.msra.mxu0 0.0
    %2855 = vmatprep.subr.mxu0 0.0
    %2856 = vmatpush1.msra.mxu0 0.0
    %2857 = vmatprep.subr.mxu0 0.0
    %2858 = vmatpush1.msra.mxu0 0.0
    %2859 = vmatprep.subr.mxu0 0.0
    %2860 = vmatpush1.msra.mxu0 0.0
    %2861 = vmatprep.subr.mxu0 0.0
    %2862 = vmatpush1.msra.mxu0 0.0
    %2863 = vmatprep.subr.mxu0 0.0
    %2864 = vmatpush1.msra.mxu0 0.0
    %2865 = vmatprep.subr.mxu0 0.0
    %2866 = vmatpush1.msra.mxu0 0.0
    %2867 = vmatprep.subr.mxu0 0.0
    %2868 = vmatpush1.msra.mxu0 0.0
    %2869 = vmatprep.subr.mxu0 0.0
    %2870 = vmatpush1.msra.mxu0 0.0
    %2871 = vmatprep.subr.mxu0 0.0
    %2872 = vmatpush1.msra.mxu0 0.0
    %2873 = vmatprep.subr.mxu0 0.0
    %2874 = vmatpush1.msra.mxu0 0.0
    %2875 = vmatprep.subr.mxu0 0.0
    %2876 = vmatpush1.msra.mxu0 0.0
    %2877 = vmatprep.subr.mxu0 0.0
    %2878 = vmatpush1.msra.mxu0 0.0
    %2879 = vmatprep.subr.mxu0 0.0
    %2880 = vmatpush1.msra.mxu0 0.0
    %2881 = vmatprep.subr.mxu0 0.0
    %2882 = vmatpush1.msra.mxu0 0.0
    %2883 = vmatprep.subr.mxu0 0.0
    %2884 = vmatpush1.msra.mxu0 0.0
    %2885 = vmatprep.subr.mxu0 0.0
    %2886 = vmatpush1.msra.mxu0 0.0
    %2887 = vmatprep.subr.mxu0 0.0
    %2888 = vmatpush1.msra.mxu0 0.0
    %2889 = vmatprep.subr.mxu0 0.0
    %2890 = vmatpush1.msra.mxu0 0.0
    %2891 = vmatprep.subr.mxu0 0.0
    %2892 = vmatpush1.msra.mxu0 0.0
    %2893 = vmatprep.subr.mxu0 0.0
    %2894 = vmatpush1.msra.mxu0 0.0
    %2895 = vmatprep.subr.mxu0 0.0
    %2896 = vmatpush1.msra.mxu0 0.0
    %2897 = vmatprep.subr.mxu0 0.0
    %2898 = vmatpush1.msra.mxu0 0.0
    %2899 = vmatprep.subr.mxu0 0.0
    %2900 = vmatpush1.msra.mxu0 0.0
    %2901 = vmatprep.mubr.f32.mxu0 0.0
    %2902 = vmatmul.mubr.f32.gmra.mrb[0].mxu0 %v2835
    %v2903 = vpop.f32.mrb[0].mxu0
    %v2904 = vadd.f32 0.0, %v2903
    %v2905 = vpop.f32.mrb[0].mxu0
    %v2906 = vadd.f32 0.0, %v2905
    %2907 = vdwg.mxu0
    %2908 = vmatprep.subr.mxu0 0.0
    %2909 = vmatpush1.msra.mxu0 %v1504
    %2910 = vmatprep.subr.mxu0 0.0
    %2911 = vmatpush1.msra.mxu0 %v1507
    %2912 = vmatprep.subr.mxu0 0.0
    %2913 = vmatpush1.msra.mxu0 0.0
    %2914 = vmatprep.subr.mxu0 0.0
    %2915 = vmatpush1.msra.mxu0 0.0
    %2916 = vmatprep.subr.mxu0 0.0
    %2917 = vmatpush1.msra.mxu0 0.0
    %2918 = vmatprep.subr.mxu0 0.0
    %2919 = vmatpush1.msra.mxu0 0.0
    %2920 = vmatprep.subr.mxu0 0.0
    %2921 = vmatpush1.msra.mxu0 0.0
    %2922 = vmatprep.subr.mxu0 0.0
    %2923 = vmatpush1.msra.mxu0 0.0
    %2924 = vmatprep.subr.mxu0 0.0
    %2925 = vmatpush1.msra.mxu0 0.0
    %2926 = vmatprep.subr.mxu0 0.0
    %2927 = vmatpush1.msra.mxu0 0.0
    %2928 = vmatprep.subr.mxu0 0.0
    %2929 = vmatpush1.msra.mxu0 0.0
    %2930 = vmatprep.subr.mxu0 0.0
    %2931 = vmatpush1.msra.mxu0 0.0
    %2932 = vmatprep.subr.mxu0 0.0
    %2933 = vmatpush1.msra.mxu0 0.0
    %2934 = vmatprep.subr.mxu0 0.0
    %2935 = vmatpush1.msra.mxu0 0.0
    %2936 = vmatprep.subr.mxu0 0.0
    %2937 = vmatpush1.msra.mxu0 0.0
    %2938 = vmatprep.subr.mxu0 0.0
    %2939 = vmatpush1.msra.mxu0 0.0
    %2940 = vmatprep.subr.mxu0 0.0
    %2941 = vmatpush1.msra.mxu0 0.0
    %2942 = vmatprep.subr.mxu0 0.0
    %2943 = vmatpush1.msra.mxu0 0.0
    %2944 = vmatprep.subr.mxu0 0.0
    %2945 = vmatpush1.msra.mxu0 0.0
    %2946 = vmatprep.subr.mxu0 0.0
    %2947 = vmatpush1.msra.mxu0 0.0
    %2948 = vmatprep.subr.mxu0 0.0
    %2949 = vmatpush1.msra.mxu0 0.0
    %2950 = vmatprep.subr.mxu0 0.0
    %2951 = vmatpush1.msra.mxu0 0.0
    %2952 = vmatprep.subr.mxu0 0.0
    %2953 = vmatpush1.msra.mxu0 0.0
    %2954 = vmatprep.subr.mxu0 0.0
    %2955 = vmatpush1.msra.mxu0 0.0
    %2956 = vmatprep.subr.mxu0 0.0
    %2957 = vmatpush1.msra.mxu0 0.0
    %2958 = vmatprep.subr.mxu0 0.0
    %2959 = vmatpush1.msra.mxu0 0.0
    %2960 = vmatprep.subr.mxu0 0.0
    %2961 = vmatpush1.msra.mxu0 0.0
    %2962 = vmatprep.subr.mxu0 0.0
    %2963 = vmatpush1.msra.mxu0 0.0
    %2964 = vmatprep.subr.mxu0 0.0
    %2965 = vmatpush1.msra.mxu0 0.0
    %2966 = vmatprep.subr.mxu0 0.0
    %2967 = vmatpush1.msra.mxu0 0.0
    %2968 = vmatprep.subr.mxu0 0.0
    %2969 = vmatpush1.msra.mxu0 0.0
    %2970 = vmatprep.subr.mxu0 0.0
    %2971 = vmatpush1.msra.mxu0 0.0
    %2972 = vmatprep.mubr.f32.mxu0 0.0
    %2973 = vmatmul.mubr.f32.gmra.mrb[0].mxu0 %v2835
    %v2974 = vpop.f32.mrb[0].mxu0
    %v2975 = vadd.f32 0.0, %v2974
    %v2976 = vpop.f32.mrb[0].mxu0
    %2977 = vdwg.mxu0
    %2978 = vmatprep.subr.mxu0 %v1509
    %2979 = vmatpush1.msra.mxu0 %v1508
    %2980 = vmatprep.subr.mxu0 %v1512
    %2981 = vmatpush1.msra.mxu0 %v1511
    %2982 = vmatprep.subr.mxu0 %v1515
    %2983 = vmatpush1.msra.mxu0 %v1514
    %2984 = vmatprep.subr.mxu0 %v1518
    %2985 = vmatpush1.msra.mxu0 %v1517
    %2986 = vmatprep.subr.mxu0 %v1521
    %2987 = vmatpush1.msra.mxu0 %v1520
    %2988 = vmatprep.subr.mxu0 %v1524
    %2989 = vmatpush1.msra.mxu0 %v1523
    %2990 = vmatprep.subr.mxu0 %v1527
    %2991 = vmatpush1.msra.mxu0 %v1526
    %2992 = vmatprep.subr.mxu0 %v1530
    %2993 = vmatpush1.msra.mxu0 %v1529
    %2994 = vmatprep.subr.mxu0 %v1533
    %2995 = vmatpush1.msra.mxu0 %v1532
    %2996 = vmatprep.subr.mxu0 %v1536
    %2997 = vmatpush1.msra.mxu0 %v1535
    %2998 = vmatprep.subr.mxu0 %v1539
    %2999 = vmatpush1.msra.mxu0 %v1538
    %3000 = vmatprep.subr.mxu0 %v1542
    %3001 = vmatpush1.msra.mxu0 %v1541
    %3002 = vmatprep.subr.mxu0 %v1545
    %3003 = vmatpush1.msra.mxu0 %v1544
    %3004 = vmatprep.subr.mxu0 %v1548
    %3005 = vmatpush1.msra.mxu0 %v1547
    %3006 = vmatprep.subr.mxu0 %v1551
    %3007 = vmatpush1.msra.mxu0 %v1550
    %3008 = vmatprep.subr.mxu0 %v1554
    %3009 = vmatpush1.msra.mxu0 %v1553
    %3010 = vmatprep.subr.mxu0 0.0
    %3011 = vmatpush1.msra.mxu0 0.0
    %3012 = vmatprep.subr.mxu0 0.0
    %3013 = vmatpush1.msra.mxu0 0.0
    %3014 = vmatprep.subr.mxu0 0.0
    %3015 = vmatpush1.msra.mxu0 0.0
    %3016 = vmatprep.subr.mxu0 0.0
    %3017 = vmatpush1.msra.mxu0 0.0
    %3018 = vmatprep.subr.mxu0 0.0
    %3019 = vmatpush1.msra.mxu0 0.0
    %3020 = vmatprep.subr.mxu0 0.0
    %3021 = vmatpush1.msra.mxu0 0.0
    %3022 = vmatprep.subr.mxu0 0.0
    %3023 = vmatpush1.msra.mxu0 0.0
    %3024 = vmatprep.subr.mxu0 0.0
    %3025 = vmatpush1.msra.mxu0 0.0
    %3026 = vmatprep.subr.mxu0 0.0
    %3027 = vmatpush1.msra.mxu0 0.0
    %3028 = vmatprep.subr.mxu0 0.0
    %3029 = vmatpush1.msra.mxu0 0.0
    %3030 = vmatprep.subr.mxu0 0.0
    %3031 = vmatpush1.msra.mxu0 0.0
    %3032 = vmatprep.subr.mxu0 0.0
    %3033 = vmatpush1.msra.mxu0 0.0
    %3034 = vmatprep.subr.mxu0 0.0
    %3035 = vmatpush1.msra.mxu0 0.0
    %3036 = vmatprep.subr.mxu0 0.0
    %3037 = vmatpush1.msra.mxu0 0.0
    %3038 = vmatprep.subr.mxu0 0.0
    %3039 = vmatpush1.msra.mxu0 0.0
    %3040 = vmatprep.subr.mxu0 0.0
    %3041 = vmatpush1.msra.mxu0 0.0
    %3042 = vmatprep.mubr.f32.mxu0 0.0
    %3043 = vmatmul.mubr.f32.gmra.mrb[0].mxu0 %v2730
    %v3044 = vpop.f32.mrb[0].mxu0
    %v3045 = vadd.f32 %v1732, %v3044
    %v3046 = vpop.f32.mrb[0].mxu0
    %v3047 = vadd.f32 %v1736, %v3046
    %3048 = vdwg.mxu0
    %3049 = vmatprep.subr.mxu0 0.0
    %3050 = vmatpush1.msra.mxu0 %v1510
    %3051 = vmatprep.subr.mxu0 0.0
    %3052 = vmatpush1.msra.mxu0 %v1513
    %3053 = vmatprep.subr.mxu0 0.0
    %3054 = vmatpush1.msra.mxu0 %v1516
    %3055 = vmatprep.subr.mxu0 0.0
    %3056 = vmatpush1.msra.mxu0 %v1519
    %3057 = vmatprep.subr.mxu0 0.0
    %3058 = vmatpush1.msra.mxu0 %v1522
    %3059 = vmatprep.subr.mxu0 0.0
    %3060 = vmatpush1.msra.mxu0 %v1525
    %3061 = vmatprep.subr.mxu0 0.0
    %3062 = vmatpush1.msra.mxu0 %v1528
    %3063 = vmatprep.subr.mxu0 0.0
    %3064 = vmatpush1.msra.mxu0 %v1531
    %3065 = vmatprep.subr.mxu0 0.0
    %3066 = vmatpush1.msra.mxu0 %v1534
    %3067 = vmatprep.subr.mxu0 0.0
    %3068 = vmatpush1.msra.mxu0 %v1537
    %3069 = vmatprep.subr.mxu0 0.0
    %3070 = vmatpush1.msra.mxu0 %v1540
    %3071 = vmatprep.subr.mxu0 0.0
    %3072 = vmatpush1.msra.mxu0 %v1543
    %3073 = vmatprep.subr.mxu0 0.0
    %3074 = vmatpush1.msra.mxu0 %v1546
    %3075 = vmatprep.subr.mxu0 0.0
    %3076 = vmatpush1.msra.mxu0 %v1549
    %3077 = vmatprep.subr.mxu0 0.0
    %3078 = vmatpush1.msra.mxu0 %v1552
    %3079 = vmatprep.subr.mxu0 0.0
    %3080 = vmatpush1.msra.mxu0 %v1555
    %3081 = vmatprep.subr.mxu0 0.0
    %3082 = vmatpush1.msra.mxu0 0.0
    %3083 = vmatprep.subr.mxu0 0.0
    %3084 = vmatpush1.msra.mxu0 0.0
    %3085 = vmatprep.subr.mxu0 0.0
    %3086 = vmatpush1.msra.mxu0 0.0
    %3087 = vmatprep.subr.mxu0 0.0
    %3088 = vmatpush1.msra.mxu0 0.0
    %3089 = vmatprep.subr.mxu0 0.0
    %3090 = vmatpush1.msra.mxu0 0.0
    %3091 = vmatprep.subr.mxu0 0.0
    %3092 = vmatpush1.msra.mxu0 0.0
    %3093 = vmatprep.subr.mxu0 0.0
    %3094 = vmatpush1.msra.mxu0 0.0
    %3095 = vmatprep.subr.mxu0 0.0
    %3096 = vmatpush1.msra.mxu0 0.0
    %3097 = vmatprep.subr.mxu0 0.0
    %3098 = vmatpush1.msra.mxu0 0.0
    %3099 = vmatprep.subr.mxu0 0.0
    %3100 = vmatpush1.msra.mxu0 0.0
    %3101 = vmatprep.subr.mxu0 0.0
    %3102 = vmatpush1.msra.mxu0 0.0
    %3103 = vmatprep.subr.mxu0 0.0
    %3104 = vmatpush1.msra.mxu0 0.0
    %3105 = vmatprep.subr.mxu0 0.0
    %3106 = vmatpush1.msra.mxu0 0.0
    %3107 = vmatprep.subr.mxu0 0.0
    %3108 = vmatpush1.msra.mxu0 0.0
    %3109 = vmatprep.subr.mxu0 0.0
    %3110 = vmatpush1.msra.mxu0 0.0
    %3111 = vmatprep.subr.mxu0 0.0
    %3112 = vmatpush1.msra.mxu0 0.0
    %3113 = vmatprep.mubr.f32.mxu0 0.0
    %3114 = vmatmul.mubr.f32.gmra.mrb[0].mxu0 %v2730
    %v3115 = vpop.f32.mrb[0].mxu0
    %v3116 = vadd.f32 %v1740, %v3115
    %v3117 = vpop.f32.mrb[0].mxu0
    %3118 = vdwg.mxu0
    %v3119 = vadd.f32 %v2904, %v3045
    %v3120 = vadd.f32 %v2906, %v3047
    %v3121 = vxor.u32 %v3119, 2147483648
    %v3122 = vxor.u32 %v3120, 2147483648
    %v3123 = vmul.f32 %v3121, 1.442695
    %v3124 = vpow.pop %v3123
    %v3125 = vmul.f32 %v3122, 1.442695
    %v3126 = vpow.pop %v3125
    %v3127 = vadd.f32 %v3124, 1.0
    %v3128 = vadd.f32 %v3126, 1.0
    %v3129 = vrcp.pop %v3127
    %v3130 = vmul.f32 1.0, %v3129
    %v3131 = vrcp.pop %v3128
    %v3132 = vmul.f32 1.0, %v3131
    %v3133 = vmul.f32 %v3130, %v3116
    %v3134 = vadd.f32 %v2975, %v3133
    %v3135 = vtanh.pop %v3134
    %v3136 = vsub.f32 1.0, %v3132
    %v3137 = vmul.f32 %v3136, %v3135
    %v3138 = vmul.f32 %v3132, %v2730
    %v3139 = vadd.f32 %v3137, %v3138
    %3140 = vmatprep.subr.mxu0 0.0
    %3141 = vmatpush1.msra.mxu0 %v1557
    %3142 = vmatprep.subr.mxu0 0.0
    %3143 = vmatpush1.msra.mxu0 %v1558
    %3144 = vmatprep.subr.mxu0 0.0
    %3145 = vmatpush1.msra.mxu0 %v1559
    %3146 = vmatprep.subr.mxu0 0.0
    %3147 = vmatpush1.msra.mxu0 %v1560
    %3148 = vmatprep.subr.mxu0 0.0
    %3149 = vmatpush1.msra.mxu0 %v1561
    %3150 = vmatprep.subr.mxu0 0.0
    %3151 = vmatpush1.msra.mxu0 %v1562
    %3152 = vmatprep.subr.mxu0 0.0
    %3153 = vmatpush1.msra.mxu0 %v1563
    %3154 = vmatprep.subr.mxu0 0.0
    %3155 = vmatpush1.msra.mxu0 %v1564
    %3156 = vmatprep.subr.mxu0 0.0
    %3157 = vmatpush1.msra.mxu0 %v1565
    %3158 = vmatprep.subr.mxu0 0.0
    %3159 = vmatpush1.msra.mxu0 %v1566
    %3160 = vmatprep.subr.mxu0 0.0
    %3161 = vmatpush1.msra.mxu0 %v1567
    %3162 = vmatprep.subr.mxu0 0.0
    %3163 = vmatpush1.msra.mxu0 %v1568
    %3164 = vmatprep.subr.mxu0 0.0
    %3165 = vmatpush1.msra.mxu0 %v1569
    %3166 = vmatprep.subr.mxu0 0.0
    %3167 = vmatpush1.msra.mxu0 %v1570
    %3168 = vmatprep.subr.mxu0 0.0
    %3169 = vmatpush1.msra.mxu0 %v1571
    %3170 = vmatprep.subr.mxu0 0.0
    %3171 = vmatpush1.msra.mxu0 %v1572
    %3172 = vmatprep.subr.mxu0 0.0
    %3173 = vmatpush1.msra.mxu0 0.0
    %3174 = vmatprep.subr.mxu0 0.0
    %3175 = vmatpush1.msra.mxu0 0.0
    %3176 = vmatprep.subr.mxu0 0.0
    %3177 = vmatpush1.msra.mxu0 0.0
    %3178 = vmatprep.subr.mxu0 0.0
    %3179 = vmatpush1.msra.mxu0 0.0
    %3180 = vmatprep.subr.mxu0 0.0
    %3181 = vmatpush1.msra.mxu0 0.0
    %3182 = vmatprep.subr.mxu0 0.0
    %3183 = vmatpush1.msra.mxu0 0.0
    %3184 = vmatprep.subr.mxu0 0.0
    %3185 = vmatpush1.msra.mxu0 0.0
    %3186 = vmatprep.subr.mxu0 0.0
    %3187 = vmatpush1.msra.mxu0 0.0
    %3188 = vmatprep.subr.mxu0 0.0
    %3189 = vmatpush1.msra.mxu0 0.0
    %3190 = vmatprep.subr.mxu0 0.0
    %3191 = vmatpush1.msra.mxu0 0.0
    %3192 = vmatprep.subr.mxu0 0.0
    %3193 = vmatpush1.msra.mxu0 0.0
    %3194 = vmatprep.subr.mxu0 0.0
    %3195 = vmatpush1.msra.mxu0 0.0
    %3196 = vmatprep.subr.mxu0 0.0
    %3197 = vmatpush1.msra.mxu0 0.0
    %3198 = vmatprep.subr.mxu0 0.0
    %3199 = vmatpush1.msra.mxu0 0.0
    %3200 = vmatprep.subr.mxu0 0.0
    %3201 = vmatpush1.msra.mxu0 0.0
    %3202 = vmatprep.subr.mxu0 0.0
    %3203 = vmatpush1.msra.mxu0 0.0
    %3204 = vmatprep.mubr.f32.mxu0 0.0
    %3205 = vmatmul.mubr.f32.gmra.mrb[0].mxu0 %v3139
    %v3206 = vpop.f32.mrb[0].mxu0
    %v3207 = vadd.f32 %v1910, %v3206
    %v3208 = vpop.f32.mrb[0].mxu0
    %3209 = vdwg.mxu0
    %v3210 = vsel %vm1982, %v3207, -inf
    %3211 = vmax.xlane.f32.xlu0 %v3210
    %v3212 = vpop.xlane.xlu0 %3211
    %v3213 = vsub.f32 %v3207, %v3212
    %v3214 = vmul.f32 %v3213, 1.442695
    %v3215 = vpow.pop %v3214
    %v3216 = vsel %vm1982, %v3215, 0.0
    %3217 = vadd.xlane.f32.xlu0 %v3216
    %v3218 = vpop.xlane.xlu0 %3217
    %v3219 = vlog2.pop %v3218
    %v3220 = vmul.f32 %v3219, 0.6931472
    %v3221 = vadd.f32 %v3220, %v3212
    %v3222 = vsub.f32 %v3207, %v3221
    %vm3223 = vcmp.eq.f32.partialorder %v3207, %v3212
    %v3224 = vsel %vm3223, %v1576, 128
    %v3225 = vsel %vm1982, %v3224, 2147483647
    %v3226 = vand.u32 %v3225, 65535
    %v3227 = vshra.s32 %v3225, 16
    %v3228 = vcvt.s32.f32 %v3226
    %v3229 = vcvt.s32.f32 %v3227
    %3230 = vmin.xlane.f32.xlu0 %v3229
    %v3231 = vpop.xlane.xlu0 %3230
    %vm3232 = vcmp.eq.f32.partialorder %v3229, %v3231
    %v3233 = vsel %vm3232, %v3228, inf
    %3234 = vmin.xlane.f32.xlu0 %v3233
    %v3235 = vpop.xlane.xlu0 %3234
    %v3236 = vcvt.f32.s32 %v3235
    %v3237 = vcvt.f32.s32 %v3231
    %v3238 = vshll.u32 %v3237, 16
    %v3239 = vadd.s32 %v3238, %v3236
    %vm3240 = vcmp.eq.s32.totalorder %v1576, %v3239
    %v3241 = vsel %vm3240, 1, 0
    %v3242 = vcvt.s32.f32 %v3241
    %v3244 = vsel %vm1583, %v3242, 0
    %3246 = vmatprep.subr.mxu0 %v1503
    %3247 = vmatpush1.msra.mxu0 %v1502
    %3248 = vmatprep.subr.mxu0 %v1506
    %3249 = vmatpush1.msra.mxu0 %v1505
    %3250 = vmatprep.subr.mxu0 0.0
    %3251 = vmatpush1.msra.mxu0 0.0
    %3252 = vmatprep.subr.mxu0 0.0
    %3253 = vmatpush1.msra.mxu0 0.0
    %3254 = vmatprep.subr.mxu0 0.0
    %3255 = vmatpush1.msra.mxu0 0.0
    %3256 = vmatprep.subr.mxu0 0.0
    %3257 = vmatpush1.msra.mxu0 0.0
    %3258 = vmatprep.subr.mxu0 0.0
    %3259 = vmatpush1.msra.mxu0 0.0
    %3260 = vmatprep.subr.mxu0 0.0
    %3261 = vmatpush1.msra.mxu0 0.0
    %3262 = vmatprep.subr.mxu0 0.0
    %3263 = vmatpush1.msra.mxu0 0.0
    %3264 = vmatprep.subr.mxu0 0.0
    %3265 = vmatpush1.msra.mxu0 0.0
    %3266 = vmatprep.subr.mxu0 0.0
    %3267 = vmatpush1.msra.mxu0 0.0
    %3268 = vmatprep.subr.mxu0 0.0
    %3269 = vmatpush1.msra.mxu0 0.0
    %3270 = vmatprep.subr.mxu0 0.0
    %3271 = vmatpush1.msra.mxu0 0.0
    %3272 = vmatprep.subr.mxu0 0.0
    %3273 = vmatpush1.msra.mxu0 0.0
    %3274 = vmatprep.subr.mxu0 0.0
    %3275 = vmatpush1.msra.mxu0 0.0
    %3276 = vmatprep.subr.mxu0 0.0
    %3277 = vmatpush1.msra.mxu0 0.0
    %3278 = vmatprep.subr.mxu0 0.0
    %3279 = vmatpush1.msra.mxu0 0.0
    %3280 = vmatprep.subr.mxu0 0.0
    %3281 = vmatpush1.msra.mxu0 0.0
    %3282 = vmatprep.subr.mxu0 0.0
    %3283 = vmatpush1.msra.mxu0 0.0
    %3284 = vmatprep.subr.mxu0 0.0
    %3285 = vmatpush1.msra.mxu0 0.0
    %3286 = vmatprep.subr.mxu0 0.0
    %3287 = vmatpush1.msra.mxu0 0.0
    %3288 = vmatprep.subr.mxu0 0.0
    %3289 = vmatpush1.msra.mxu0 0.0
    %3290 = vmatprep.subr.mxu0 0.0
    %3291 = vmatpush1.msra.mxu0 0.0
    %3292 = vmatprep.subr.mxu0 0.0
    %3293 = vmatpush1.msra.mxu0 0.0
    %3294 = vmatprep.subr.mxu0 0.0
    %3295 = vmatpush1.msra.mxu0 0.0
    %3296 = vmatprep.subr.mxu0 0.0
    %3297 = vmatpush1.msra.mxu0 0.0
    %3298 = vmatprep.subr.mxu0 0.0
    %3299 = vmatpush1.msra.mxu0 0.0
    %3300 = vmatprep.subr.mxu0 0.0
    %3301 = vmatpush1.msra.mxu0 0.0
    %3302 = vmatprep.subr.mxu0 0.0
    %3303 = vmatpush1.msra.mxu0 0.0
    %3304 = vmatprep.subr.mxu0 0.0
    %3305 = vmatpush1.msra.mxu0 0.0
    %3306 = vmatprep.subr.mxu0 0.0
    %3307 = vmatpush1.msra.mxu0 0.0
    %3308 = vmatprep.subr.mxu0 0.0
    %3309 = vmatpush1.msra.mxu0 0.0
    %3310 = vmatprep.mubr.f32.mxu0 0.0
    %3311 = vmatmul.mubr.f32.gmra.mrb[0].mxu0 %v3244
    %v3312 = vpop.f32.mrb[0].mxu0
    %v3313 = vadd.f32 0.0, %v3312
    %v3314 = vpop.f32.mrb[0].mxu0
    %v3315 = vadd.f32 0.0, %v3314
    %3316 = vdwg.mxu0
    %3317 = vmatprep.subr.mxu0 0.0
    %3318 = vmatpush1.msra.mxu0 %v1504
    %3319 = vmatprep.subr.mxu0 0.0
    %3320 = vmatpush1.msra.mxu0 %v1507
    %3321 = vmatprep.subr.mxu0 0.0
    %3322 = vmatpush1.msra.mxu0 0.0
    %3323 = vmatprep.subr.mxu0 0.0
    %3324 = vmatpush1.msra.mxu0 0.0
    %3325 = vmatprep.subr.mxu0 0.0
    %3326 = vmatpush1.msra.mxu0 0.0
    %3327 = vmatprep.subr.mxu0 0.0
    %3328 = vmatpush1.msra.mxu0 0.0
    %3329 = vmatprep.subr.mxu0 0.0
    %3330 = vmatpush1.msra.mxu0 0.0
    %3331 = vmatprep.subr.mxu0 0.0
    %3332 = vmatpush1.msra.mxu0 0.0
    %3333 = vmatprep.subr.mxu0 0.0
    %3334 = vmatpush1.msra.mxu0 0.0
    %3335 = vmatprep.subr.mxu0 0.0
    %3336 = vmatpush1.msra.mxu0 0.0
    %3337 = vmatprep.subr.mxu0 0.0
    %3338 = vmatpush1.msra.mxu0 0.0
    %3339 = vmatprep.subr.mxu0 0.0
    %3340 = vmatpush1.msra.mxu0 0.0
    %3341 = vmatprep.subr.mxu0 0.0
    %3342 = vmatpush1.msra.mxu0 0.0
    %3343 = vmatprep.subr.mxu0 0.0
    %3344 = vmatpush1.msra.mxu0 0.0
    %3345 = vmatprep.subr.mxu0 0.0
    %3346 = vmatpush1.msra.mxu0 0.0
    %3347 = vmatprep.subr.mxu0 0.0
    %3348 = vmatpush1.msra.mxu0 0.0
    %3349 = vmatprep.subr.mxu0 0.0
    %3350 = vmatpush1.msra.mxu0 0.0
    %3351 = vmatprep.subr.mxu0 0.0
    %3352 = vmatpush1.msra.mxu0 0.0
    %3353 = vmatprep.subr.mxu0 0.0
    %3354 = vmatpush1.msra.mxu0 0.0
    %3355 = vmatprep.subr.mxu0 0.0
    %3356 = vmatpush1.msra.mxu0 0.0
    %3357 = vmatprep.subr.mxu0 0.0
    %3358 = vmatpush1.msra.mxu0 0.0
    %3359 = vmatprep.subr.mxu0 0.0
    %3360 = vmatpush1.msra.mxu0 0.0
    %3361 = vmatprep.subr.mxu0 0.0
    %3362 = vmatpush1.msra.mxu0 0.0
    %3363 = vmatprep.subr.mxu0 0.0
    %3364 = vmatpush1.msra.mxu0 0.0
    %3365 = vmatprep.subr.mxu0 0.0
    %3366 = vmatpush1.msra.mxu0 0.0
    %3367 = vmatprep.subr.mxu0 0.0
    %3368 = vmatpush1.msra.mxu0 0.0
    %3369 = vmatprep.subr.mxu0 0.0
    %3370 = vmatpush1.msra.mxu0 0.0
    %3371 = vmatprep.subr.mxu0 0.0
    %3372 = vmatpush1.msra.mxu0 0.0
    %3373 = vmatprep.subr.mxu0 0.0
    %3374 = vmatpush1.msra.mxu0 0.0
    %3375 = vmatprep.subr.mxu0 0.0
    %3376 = vmatpush1.msra.mxu0 0.0
    %3377 = vmatprep.subr.mxu0 0.0
    %3378 = vmatpush1.msra.mxu0 0.0
    %3379 = vmatprep.subr.mxu0 0.0
    %3380 = vmatpush1.msra.mxu0 0.0
    %3381 = vmatprep.mubr.f32.mxu0 0.0
    %3382 = vmatmul.mubr.f32.gmra.mrb[0].mxu0 %v3244
    %v3383 = vpop.f32.mrb[0].mxu0
    %v3384 = vadd.f32 0.0, %v3383
    %v3385 = vpop.f32.mrb[0].mxu0
    %3386 = vdwg.mxu0
    %3387 = vmatprep.subr.mxu0 %v1509
    %3388 = vmatpush1.msra.mxu0 %v1508
    %3389 = vmatprep.subr.mxu0 %v1512
    %3390 = vmatpush1.msra.mxu0 %v1511
    %3391 = vmatprep.subr.mxu0 %v1515
    %3392 = vmatpush1.msra.mxu0 %v1514
    %3393 = vmatprep.subr.mxu0 %v1518
    %3394 = vmatpush1.msra.mxu0 %v1517
    %3395 = vmatprep.subr.mxu0 %v1521
    %3396 = vmatpush1.msra.mxu0 %v1520
    %3397 = vmatprep.subr.mxu0 %v1524
    %3398 = vmatpush1.msra.mxu0 %v1523
    %3399 = vmatprep.subr.mxu0 %v1527
    %3400 = vmatpush1.msra.mxu0 %v1526
    %3401 = vmatprep.subr.mxu0 %v1530
    %3402 = vmatpush1.msra.mxu0 %v1529
    %3403 = vmatprep.subr.mxu0 %v1533
    %3404 = vmatpush1.msra.mxu0 %v1532
    %3405 = vmatprep.subr.mxu0 %v1536
    %3406 = vmatpush1.msra.mxu0 %v1535
    %3407 = vmatprep.subr.mxu0 %v1539
    %3408 = vmatpush1.msra.mxu0 %v1538
    %3409 = vmatprep.subr.mxu0 %v1542
    %3410 = vmatpush1.msra.mxu0 %v1541
    %3411 = vmatprep.subr.mxu0 %v1545
    %3412 = vmatpush1.msra.mxu0 %v1544
    %3413 = vmatprep.subr.mxu0 %v1548
    %3414 = vmatpush1.msra.mxu0 %v1547
    %3415 = vmatprep.subr.mxu0 %v1551
    %3416 = vmatpush1.msra.mxu0 %v1550
    %3417 = vmatprep.subr.mxu0 %v1554
    %3418 = vmatpush1.msra.mxu0 %v1553
    %3419 = vmatprep.subr.mxu0 0.0
    %3420 = vmatpush1.msra.mxu0 0.0
    %3421 = vmatprep.subr.mxu0 0.0
    %3422 = vmatpush1.msra.mxu0 0.0
    %3423 = vmatprep.subr.mxu0 0.0
    %3424 = vmatpush1.msra.mxu0 0.0
    %3425 = vmatprep.subr.mxu0 0.0
    %3426 = vmatpush1.msra.mxu0 0.0
    %3427 = vmatprep.subr.mxu0 0.0
    %3428 = vmatpush1.msra.mxu0 0.0
    %3429 = vmatprep.subr.mxu0 0.0
    %3430 = vmatpush1.msra.mxu0 0.0
    %3431 = vmatprep.subr.mxu0 0.0
    %3432 = vmatpush1.msra.mxu0 0.0
    %3433 = vmatprep.subr.mxu0 0.0
    %3434 = vmatpush1.msra.mxu0 0.0
    %3435 = vmatprep.subr.mxu0 0.0
    %3436 = vmatpush1.msra.mxu0 0.0
    %3437 = vmatprep.subr.mxu0 0.0
    %3438 = vmatpush1.msra.mxu0 0.0
    %3439 = vmatprep.subr.mxu0 0.0
    %3440 = vmatpush1.msra.mxu0 0.0
    %3441 = vmatprep.subr.mxu0 0.0
    %3442 = vmatpush1.msra.mxu0 0.0
    %3443 = vmatprep.subr.mxu0 0.0
    %3444 = vmatpush1.msra.mxu0 0.0
    %3445 = vmatprep.subr.mxu0 0.0
    %3446 = vmatpush1.msra.mxu0 0.0
    %3447 = vmatprep.subr.mxu0 0.0
    %3448 = vmatpush1.msra.mxu0 0.0
    %3449 = vmatprep.subr.mxu0 0.0
    %3450 = vmatpush1.msra.mxu0 0.0
    %3451 = vmatprep.mubr.f32.mxu0 0.0
    %3452 = vmatmul.mubr.f32.gmra.mrb[0].mxu0 %v3139
    %v3453 = vpop.f32.mrb[0].mxu0
    %v3454 = vadd.f32 %v1732, %v3453
    %v3455 = vpop.f32.mrb[0].mxu0
    %v3456 = vadd.f32 %v1736, %v3455
    %3457 = vdwg.mxu0
    %3458 = vmatprep.subr.mxu0 0.0
    %3459 = vmatpush1.msra.mxu0 %v1510
    %3460 = vmatprep.subr.mxu0 0.0
    %3461 = vmatpush1.msra.mxu0 %v1513
    %3462 = vmatprep.subr.mxu0 0.0
    %3463 = vmatpush1.msra.mxu0 %v1516
    %3464 = vmatprep.subr.mxu0 0.0
    %3465 = vmatpush1.msra.mxu0 %v1519
    %3466 = vmatprep.subr.mxu0 0.0
    %3467 = vmatpush1.msra.mxu0 %v1522
    %3468 = vmatprep.subr.mxu0 0.0
    %3469 = vmatpush1.msra.mxu0 %v1525
    %3470 = vmatprep.subr.mxu0 0.0
    %3471 = vmatpush1.msra.mxu0 %v1528
    %3472 = vmatprep.subr.mxu0 0.0
    %3473 = vmatpush1.msra.mxu0 %v1531
    %3474 = vmatprep.subr.mxu0 0.0
    %3475 = vmatpush1.msra.mxu0 %v1534
    %3476 = vmatprep.subr.mxu0 0.0
    %3477 = vmatpush1.msra.mxu0 %v1537
    %3478 = vmatprep.subr.mxu0 0.0
    %3479 = vmatpush1.msra.mxu0 %v1540
    %3480 = vmatprep.subr.mxu0 0.0
    %3481 = vmatpush1.msra.mxu0 %v1543
    %3482 = vmatprep.subr.mxu0 0.0
    %3483 = vmatpush1.msra.mxu0 %v1546
    %3484 = vmatprep.subr.mxu0 0.0
    %3485 = vmatpush1.msra.mxu0 %v1549
    %3486 = vmatprep.subr.mxu0 0.0
    %3487 = vmatpush1.msra.mxu0 %v1552
    %3488 = vmatprep.subr.mxu0 0.0
    %3489 = vmatpush1.msra.mxu0 %v1555
    %3490 = vmatprep.subr.mxu0 0.0
    %3491 = vmatpush1.msra.mxu0 0.0
    %3492 = vmatprep.subr.mxu0 0.0
    %3493 = vmatpush1.msra.mxu0 0.0
    %3494 = vmatprep.subr.mxu0 0.0
    %3495 = vmatpush1.msra.mxu0 0.0
    %3496 = vmatprep.subr.mxu0 0.0
    %3497 = vmatpush1.msra.mxu0 0.0
    %3498 = vmatprep.subr.mxu0 0.0
    %3499 = vmatpush1.msra.mxu0 0.0
    %3500 = vmatprep.subr.mxu0 0.0
    %3501 = vmatpush1.msra.mxu0 0.0
    %3502 = vmatprep.subr.mxu0 0.0
    %3503 = vmatpush1.msra.mxu0 0.0
    %3504 = vmatprep.subr.mxu0 0.0
    %3505 = vmatpush1.msra.mxu0 0.0
    %3506 = vmatprep.subr.mxu0 0.0
    %3507 = vmatpush1.msra.mxu0 0.0
    %3508 = vmatprep.subr.mxu0 0.0
    %3509 = vmatpush1.msra.mxu0 0.0
    %3510 = vmatprep.subr.mxu0 0.0
    %3511 = vmatpush1.msra.mxu0 0.0
    %3512 = vmatprep.subr.mxu0 0.0
    %3513 = vmatpush1.msra.mxu0 0.0
    %3514 = vmatprep.subr.mxu0 0.0
    %3515 = vmatpush1.msra.mxu0 0.0
    %3516 = vmatprep.subr.mxu0 0.0
    %3517 = vmatpush1.msra.mxu0 0.0
    %3518 = vmatprep.subr.mxu0 0.0
    %3519 = vmatpush1.msra.mxu0 0.0
    %3520 = vmatprep.subr.mxu0 0.0
    %3521 = vmatpush1.msra.mxu0 0.0
    %3522 = vmatprep.mubr.f32.mxu0 0.0
    %3523 = vmatmul.mubr.f32.gmra.mrb[0].mxu0 %v3139
    %v3524 = vpop.f32.mrb[0].mxu0
    %v3525 = vadd.f32 %v1740, %v3524
    %v3526 = vpop.f32.mrb[0].mxu0
    %3527 = vdwg.mxu0
    %v3528 = vadd.f32 %v3313, %v3454
    %v3529 = vadd.f32 %v3315, %v3456
    %v3530 = vxor.u32 %v3528, 2147483648
    %v3531 = vxor.u32 %v3529, 2147483648
    %v3532 = vmul.f32 %v3530, 1.442695
    %v3533 = vpow.pop %v3532
    %v3534 = vmul.f32 %v3531, 1.442695
    %v3535 = vpow.pop %v3534
    %v3536 = vadd.f32 %v3533, 1.0
    %v3537 = vadd.f32 %v3535, 1.0
    %v3538 = vrcp.pop %v3536
    %v3539 = vmul.f32 1.0, %v3538
    %v3540 = vrcp.pop %v3537
    %v3541 = vmul.f32 1.0, %v3540
    %v3542 = vmul.f32 %v3539, %v3525
    %v3543 = vadd.f32 %v3384, %v3542
    %v3544 = vtanh.pop %v3543
    %v3545 = vsub.f32 1.0, %v3541
    %v3546 = vmul.f32 %v3545, %v3544
    %v3547 = vmul.f32 %v3541, %v3139
    %v3548 = vadd.f32 %v3546, %v3547
    %3549 = vmatprep.subr.mxu0 0.0
    %3550 = vmatpush1.msra.mxu0 %v1557
    %3551 = vmatprep.subr.mxu0 0.0
    %3552 = vmatpush1.msra.mxu0 %v1558
    %3553 = vmatprep.subr.mxu0 0.0
    %3554 = vmatpush1.msra.mxu0 %v1559
    %3555 = vmatprep.subr.mxu0 0.0
    %3556 = vmatpush1.msra.mxu0 %v1560
    %3557 = vmatprep.subr.mxu0 0.0
    %3558 = vmatpush1.msra.mxu0 %v1561
    %3559 = vmatprep.subr.mxu0 0.0
    %3560 = vmatpush1.msra.mxu0 %v1562
    %3561 = vmatprep.subr.mxu0 0.0
    %3562 = vmatpush1.msra.mxu0 %v1563
    %3563 = vmatprep.subr.mxu0 0.0
    %3564 = vmatpush1.msra.mxu0 %v1564
    %3565 = vmatprep.subr.mxu0 0.0
    %3566 = vmatpush1.msra.mxu0 %v1565
    %3567 = vmatprep.subr.mxu0 0.0
    %3568 = vmatpush1.msra.mxu0 %v1566
    %3569 = vmatprep.subr.mxu0 0.0
    %3570 = vmatpush1.msra.mxu0 %v1567
    %3571 = vmatprep.subr.mxu0 0.0
    %3572 = vmatpush1.msra.mxu0 %v1568
    %3573 = vmatprep.subr.mxu0 0.0
    %3574 = vmatpush1.msra.mxu0 %v1569
    %3575 = vmatprep.subr.mxu0 0.0
    %3576 = vmatpush1.msra.mxu0 %v1570
    %3577 = vmatprep.subr.mxu0 0.0
    %3578 = vmatpush1.msra.mxu0 %v1571
    %3579 = vmatprep.subr.mxu0 0.0
    %3580 = vmatpush1.msra.mxu0 %v1572
    %3581 = vmatprep.subr.mxu0 0.0
    %3582 = vmatpush1.msra.mxu0 0.0
    %3583 = vmatprep.subr.mxu0 0.0
    %3584 = vmatpush1.msra.mxu0 0.0
    %3585 = vmatprep.subr.mxu0 0.0
    %3586 = vmatpush1.msra.mxu0 0.0
    %3587 = vmatprep.subr.mxu0 0.0
    %3588 = vmatpush1.msra.mxu0 0.0
    %3589 = vmatprep.subr.mxu0 0.0
    %3590 = vmatpush1.msra.mxu0 0.0
    %3591 = vmatprep.subr.mxu0 0.0
    %3592 = vmatpush1.msra.mxu0 0.0
    %3593 = vmatprep.subr.mxu0 0.0
    %3594 = vmatpush1.msra.mxu0 0.0
    %3595 = vmatprep.subr.mxu0 0.0
    %3596 = vmatpush1.msra.mxu0 0.0
    %3597 = vmatprep.subr.mxu0 0.0
    %3598 = vmatpush1.msra.mxu0 0.0
    %3599 = vmatprep.subr.mxu0 0.0
    %3600 = vmatpush1.msra.mxu0 0.0
    %3601 = vmatprep.subr.mxu0 0.0
    %3602 = vmatpush1.msra.mxu0 0.0
    %3603 = vmatprep.subr.mxu0 0.0
    %3604 = vmatpush1.msra.mxu0 0.0
    %3605 = vmatprep.subr.mxu0 0.0
    %3606 = vmatpush1.msra.mxu0 0.0
    %3607 = vmatprep.subr.mxu0 0.0
    %3608 = vmatpush1.msra.mxu0 0.0
    %3609 = vmatprep.subr.mxu0 0.0
    %3610 = vmatpush1.msra.mxu0 0.0
    %3611 = vmatprep.subr.mxu0 0.0
    %3612 = vmatpush1.msra.mxu0 0.0
    %3613 = vmatprep.mubr.f32.mxu0 0.0
    %3614 = vmatmul.mubr.f32.gmra.mrb[0].mxu0 %v3548
    %v3615 = vpop.f32.mrb[0].mxu0
    %v3616 = vadd.f32 %v1910, %v3615
    %v3617 = vpop.f32.mrb[0].mxu0
    %3618 = vdwg.mxu0
    %v3619 = vsel %vm1982, %v3616, -inf
    %3620 = vmax.xlane.f32.xlu0 %v3619
    %v3621 = vpop.xlane.xlu0 %3620
    %v3622 = vsub.f32 %v3616, %v3621
    %v3623 = vmul.f32 %v3622, 1.442695
    %v3624 = vpow.pop %v3623
    %v3625 = vsel %vm1982, %v3624, 0.0
    %3626 = vadd.xlane.f32.xlu0 %v3625
    %v3627 = vpop.xlane.xlu0 %3626
    %v3628 = vlog2.pop %v3627
    %v3629 = vmul.f32 %v3628, 0.6931472
    %v3630 = vadd.f32 %v3629, %v3621
    %v3631 = vsub.f32 %v3616, %v3630
    %vm3632 = vcmp.eq.f32.partialorder %v3616, %v3621
    %v3633 = vsel %vm3632, %v1576, 128
    %v3634 = vsel %vm1982, %v3633, 2147483647
    %v3635 = vand.u32 %v3634, 65535
    %v3636 = vshra.s32 %v3634, 16
    %v3637 = vcvt.s32.f32 %v3635
    %v3638 = vcvt.s32.f32 %v3636
    %3639 = vmin.xlane.f32.xlu0 %v3638
    %v3640 = vpop.xlane.xlu0 %3639
    %vm3641 = vcmp.eq.f32.partialorder %v3638, %v3640
    %v3642 = vsel %vm3641, %v3637, inf
    %3643 = vmin.xlane.f32.xlu0 %v3642
    %v3644 = vpop.xlane.xlu0 %3643
    %v3645 = vcvt.f32.s32 %v3644
    %v3646 = vcvt.f32.s32 %v3640
    %v3647 = vshll.u32 %v3646, 16
    %v3648 = vadd.s32 %v3647, %v3645
    %vm3649 = vcmp.eq.s32.totalorder %v1576, %v3648
    %v3650 = vsel %vm3649, 1, 0
    %v3651 = vcvt.s32.f32 %v3650
    %v3653 = vsel %vm1583, %v3651, 0
    %3655 = vmatprep.subr.mxu0 %v1503
    %3656 = vmatpush1.msra.mxu0 %v1502
    %3657 = vmatprep.subr.mxu0 %v1506
    %3658 = vmatpush1.msra.mxu0 %v1505
    %3659 = vmatprep.subr.mxu0 0.0
    %3660 = vmatpush1.msra.mxu0 0.0
    %3661 = vmatprep.subr.mxu0 0.0
    %3662 = vmatpush1.msra.mxu0 0.0
    %3663 = vmatprep.subr.mxu0 0.0
    %3664 = vmatpush1.msra.mxu0 0.0
    %3665 = vmatprep.subr.mxu0 0.0
    %3666 = vmatpush1.msra.mxu0 0.0
    %3667 = vmatprep.subr.mxu0 0.0
    %3668 = vmatpush1.msra.mxu0 0.0
    %3669 = vmatprep.subr.mxu0 0.0
    %3670 = vmatpush1.msra.mxu0 0.0
    %3671 = vmatprep.subr.mxu0 0.0
    %3672 = vmatpush1.msra.mxu0 0.0
    %3673 = vmatprep.subr.mxu0 0.0
    %3674 = vmatpush1.msra.mxu0 0.0
    %3675 = vmatprep.subr.mxu0 0.0
    %3676 = vmatpush1.msra.mxu0 0.0
    %3677 = vmatprep.subr.mxu0 0.0
    %3678 = vmatpush1.msra.mxu0 0.0
    %3679 = vmatprep.subr.mxu0 0.0
    %3680 = vmatpush1.msra.mxu0 0.0
    %3681 = vmatprep.subr.mxu0 0.0
    %3682 = vmatpush1.msra.mxu0 0.0
    %3683 = vmatprep.subr.mxu0 0.0
    %3684 = vmatpush1.msra.mxu0 0.0
    %3685 = vmatprep.subr.mxu0 0.0
    %3686 = vmatpush1.msra.mxu0 0.0
    %3687 = vmatprep.subr.mxu0 0.0
    %3688 = vmatpush1.msra.mxu0 0.0
    %3689 = vmatprep.subr.mxu0 0.0
    %3690 = vmatpush1.msra.mxu0 0.0
    %3691 = vmatprep.subr.mxu0 0.0
    %3692 = vmatpush1.msra.mxu0 0.0
    %3693 = vmatprep.subr.mxu0 0.0
    %3694 = vmatpush1.msra.mxu0 0.0
    %3695 = vmatprep.subr.mxu0 0.0
    %3696 = vmatpush1.msra.mxu0 0.0
    %3697 = vmatprep.subr.mxu0 0.0
    %3698 = vmatpush1.msra.mxu0 0.0
    %3699 = vmatprep.subr.mxu0 0.0
    %3700 = vmatpush1.msra.mxu0 0.0
    %3701 = vmatprep.subr.mxu0 0.0
    %3702 = vmatpush1.msra.mxu0 0.0
    %3703 = vmatprep.subr.mxu0 0.0
    %3704 = vmatpush1.msra.mxu0 0.0
    %3705 = vmatprep.subr.mxu0 0.0
    %3706 = vmatpush1.msra.mxu0 0.0
    %3707 = vmatprep.subr.mxu0 0.0
    %3708 = vmatpush1.msra.mxu0 0.0
    %3709 = vmatprep.subr.mxu0 0.0
    %3710 = vmatpush1.msra.mxu0 0.0
    %3711 = vmatprep.subr.mxu0 0.0
    %3712 = vmatpush1.msra.mxu0 0.0
    %3713 = vmatprep.subr.mxu0 0.0
    %3714 = vmatpush1.msra.mxu0 0.0
    %3715 = vmatprep.subr.mxu0 0.0
    %3716 = vmatpush1.msra.mxu0 0.0
    %3717 = vmatprep.subr.mxu0 0.0
    %3718 = vmatpush1.msra.mxu0 0.0
    %3719 = vmatprep.mubr.f32.mxu0 0.0
    %3720 = vmatmul.mubr.f32.gmra.mrb[0].mxu0 %v3653
    %v3721 = vpop.f32.mrb[0].mxu0
    %v3722 = vadd.f32 0.0, %v3721
    %v3723 = vpop.f32.mrb[0].mxu0
    %v3724 = vadd.f32 0.0, %v3723
    %3725 = vdwg.mxu0
    %3726 = vmatprep.subr.mxu0 0.0
    %3727 = vmatpush1.msra.mxu0 %v1504
    %3728 = vmatprep.subr.mxu0 0.0
    %3729 = vmatpush1.msra.mxu0 %v1507
    %3730 = vmatprep.subr.mxu0 0.0
    %3731 = vmatpush1.msra.mxu0 0.0
    %3732 = vmatprep.subr.mxu0 0.0
    %3733 = vmatpush1.msra.mxu0 0.0
    %3734 = vmatprep.subr.mxu0 0.0
    %3735 = vmatpush1.msra.mxu0 0.0
    %3736 = vmatprep.subr.mxu0 0.0
    %3737 = vmatpush1.msra.mxu0 0.0
    %3738 = vmatprep.subr.mxu0 0.0
    %3739 = vmatpush1.msra.mxu0 0.0
    %3740 = vmatprep.subr.mxu0 0.0
    %3741 = vmatpush1.msra.mxu0 0.0
    %3742 = vmatprep.subr.mxu0 0.0
    %3743 = vmatpush1.msra.mxu0 0.0
    %3744 = vmatprep.subr.mxu0 0.0
    %3745 = vmatpush1.msra.mxu0 0.0
    %3746 = vmatprep.subr.mxu0 0.0
    %3747 = vmatpush1.msra.mxu0 0.0
    %3748 = vmatprep.subr.mxu0 0.0
    %3749 = vmatpush1.msra.mxu0 0.0
    %3750 = vmatprep.subr.mxu0 0.0
    %3751 = vmatpush1.msra.mxu0 0.0
    %3752 = vmatprep.subr.mxu0 0.0
    %3753 = vmatpush1.msra.mxu0 0.0
    %3754 = vmatprep.subr.mxu0 0.0
    %3755 = vmatpush1.msra.mxu0 0.0
    %3756 = vmatprep.subr.mxu0 0.0
    %3757 = vmatpush1.msra.mxu0 0.0
    %3758 = vmatprep.subr.mxu0 0.0
    %3759 = vmatpush1.msra.mxu0 0.0
    %3760 = vmatprep.subr.mxu0 0.0
    %3761 = vmatpush1.msra.mxu0 0.0
    %3762 = vmatprep.subr.mxu0 0.0
    %3763 = vmatpush1.msra.mxu0 0.0
    %3764 = vmatprep.subr.mxu0 0.0
    %3765 = vmatpush1.msra.mxu0 0.0
    %3766 = vmatprep.subr.mxu0 0.0
    %3767 = vmatpush1.msra.mxu0 0.0
    %3768 = vmatprep.subr.mxu0 0.0
    %3769 = vmatpush1.msra.mxu0 0.0
    %3770 = vmatprep.subr.mxu0 0.0
    %3771 = vmatpush1.msra.mxu0 0.0
    %3772 = vmatprep.subr.mxu0 0.0
    %3773 = vmatpush1.msra.mxu0 0.0
    %3774 = vmatprep.subr.mxu0 0.0
    %3775 = vmatpush1.msra.mxu0 0.0
    %3776 = vmatprep.subr.mxu0 0.0
    %3777 = vmatpush1.msra.mxu0 0.0
    %3778 = vmatprep.subr.mxu0 0.0
    %3779 = vmatpush1.msra.mxu0 0.0
    %3780 = vmatprep.subr.mxu0 0.0
    %3781 = vmatpush1.msra.mxu0 0.0
    %3782 = vmatprep.subr.mxu0 0.0
    %3783 = vmatpush1.msra.mxu0 0.0
    %3784 = vmatprep.subr.mxu0 0.0
    %3785 = vmatpush1.msra.mxu0 0.0
    %3786 = vmatprep.subr.mxu0 0.0
    %3787 = vmatpush1.msra.mxu0 0.0
    %3788 = vmatprep.subr.mxu0 0.0
    %3789 = vmatpush1.msra.mxu0 0.0
    %3790 = vmatprep.mubr.f32.mxu0 0.0
    %3791 = vmatmul.mubr.f32.gmra.mrb[0].mxu0 %v3653
    %v3792 = vpop.f32.mrb[0].mxu0
    %v3793 = vadd.f32 0.0, %v3792
    %v3794 = vpop.f32.mrb[0].mxu0
    %3795 = vdwg.mxu0
    %3796 = vmatprep.subr.mxu0 %v1509
    %3797 = vmatpush1.msra.mxu0 %v1508
    %3798 = vmatprep.subr.mxu0 %v1512
    %3799 = vmatpush1.msra.mxu0 %v1511
    %3800 = vmatprep.subr.mxu0 %v1515
    %3801 = vmatpush1.msra.mxu0 %v1514
    %3802 = vmatprep.subr.mxu0 %v1518
    %3803 = vmatpush1.msra.mxu0 %v1517
    %3804 = vmatprep.subr.mxu0 %v1521
    %3805 = vmatpush1.msra.mxu0 %v1520
    %3806 = vmatprep.subr.mxu0 %v1524
    %3807 = vmatpush1.msra.mxu0 %v1523
    %3808 = vmatprep.subr.mxu0 %v1527
    %3809 = vmatpush1.msra.mxu0 %v1526
    %3810 = vmatprep.subr.mxu0 %v1530
    %3811 = vmatpush1.msra.mxu0 %v1529
    %3812 = vmatprep.subr.mxu0 %v1533
    %3813 = vmatpush1.msra.mxu0 %v1532
    %3814 = vmatprep.subr.mxu0 %v1536
    %3815 = vmatpush1.msra.mxu0 %v1535
    %3816 = vmatprep.subr.mxu0 %v1539
    %3817 = vmatpush1.msra.mxu0 %v1538
    %3818 = vmatprep.subr.mxu0 %v1542
    %3819 = vmatpush1.msra.mxu0 %v1541
    %3820 = vmatprep.subr.mxu0 %v1545
    %3821 = vmatpush1.msra.mxu0 %v1544
    %3822 = vmatprep.subr.mxu0 %v1548
    %3823 = vmatpush1.msra.mxu0 %v1547
    %3824 = vmatprep.subr.mxu0 %v1551
    %3825 = vmatpush1.msra.mxu0 %v1550
    %3826 = vmatprep.subr.mxu0 %v1554
    %3827 = vmatpush1.msra.mxu0 %v1553
    %3828 = vmatprep.subr.mxu0 0.0
    %3829 = vmatpush1.msra.mxu0 0.0
    %3830 = vmatprep.subr.mxu0 0.0
    %3831 = vmatpush1.msra.mxu0 0.0
    %3832 = vmatprep.subr.mxu0 0.0
    %3833 = vmatpush1.msra.mxu0 0.0
    %3834 = vmatprep.subr.mxu0 0.0
    %3835 = vmatpush1.msra.mxu0 0.0
    %3836 = vmatprep.subr.mxu0 0.0
    %3837 = vmatpush1.msra.mxu0 0.0
    %3838 = vmatprep.subr.mxu0 0.0
    %3839 = vmatpush1.msra.mxu0 0.0
    %3840 = vmatprep.subr.mxu0 0.0
    %3841 = vmatpush1.msra.mxu0 0.0
    %3842 = vmatprep.subr.mxu0 0.0
    %3843 = vmatpush1.msra.mxu0 0.0
    %3844 = vmatprep.subr.mxu0 0.0
    %3845 = vmatpush1.msra.mxu0 0.0
    %3846 = vmatprep.subr.mxu0 0.0
    %3847 = vmatpush1.msra.mxu0 0.0
    %3848 = vmatprep.subr.mxu0 0.0
    %3849 = vmatpush1.msra.mxu0 0.0
    %3850 = vmatprep.subr.mxu0 0.0
    %3851 = vmatpush1.msra.mxu0 0.0
    %3852 = vmatprep.subr.mxu0 0.0
    %3853 = vmatpush1.msra.mxu0 0.0
    %3854 = vmatprep.subr.mxu0 0.0
    %3855 = vmatpush1.msra.mxu0 0.0
    %3856 = vmatprep.subr.mxu0 0.0
    %3857 = vmatpush1.msra.mxu0 0.0
    %3858 = vmatprep.subr.mxu0 0.0
    %3859 = vmatpush1.msra.mxu0 0.0
    %3860 = vmatprep.mubr.f32.mxu0 0.0
    %3861 = vmatmul.mubr.f32.gmra.mrb[0].mxu0 %v3548
    %v3862 = vpop.f32.mrb[0].mxu0
    %v3863 = vadd.f32 %v1732, %v3862
    %v3864 = vpop.f32.mrb[0].mxu0
    %v3865 = vadd.f32 %v1736, %v3864
    %3866 = vdwg.mxu0
    %3867 = vmatprep.subr.mxu0 0.0
    %3868 = vmatpush1.msra.mxu0 %v1510
    %3869 = vmatprep.subr.mxu0 0.0
    %3870 = vmatpush1.msra.mxu0 %v1513
    %3871 = vmatprep.subr.mxu0 0.0
    %3872 = vmatpush1.msra.mxu0 %v1516
    %3873 = vmatprep.subr.mxu0 0.0
    %3874 = vmatpush1.msra.mxu0 %v1519
    %3875 = vmatprep.subr.mxu0 0.0
    %3876 = vmatpush1.msra.mxu0 %v1522
    %3877 = vmatprep.subr.mxu0 0.0
    %3878 = vmatpush1.msra.mxu0 %v1525
    %3879 = vmatprep.subr.mxu0 0.0
    %3880 = vmatpush1.msra.mxu0 %v1528
    %3881 = vmatprep.subr.mxu0 0.0
    %3882 = vmatpush1.msra.mxu0 %v1531
    %3883 = vmatprep.subr.mxu0 0.0
    %3884 = vmatpush1.msra.mxu0 %v1534
    %3885 = vmatprep.subr.mxu0 0.0
    %3886 = vmatpush1.msra.mxu0 %v1537
    %3887 = vmatprep.subr.mxu0 0.0
    %3888 = vmatpush1.msra.mxu0 %v1540
    %3889 = vmatprep.subr.mxu0 0.0
    %3890 = vmatpush1.msra.mxu0 %v1543
    %3891 = vmatprep.subr.mxu0 0.0
    %3892 = vmatpush1.msra.mxu0 %v1546
    %3893 = vmatprep.subr.mxu0 0.0
    %3894 = vmatpush1.msra.mxu0 %v1549
    %3895 = vmatprep.subr.mxu0 0.0
    %3896 = vmatpush1.msra.mxu0 %v1552
    %3897 = vmatprep.subr.mxu0 0.0
    %3898 = vmatpush1.msra.mxu0 %v1555
    %3899 = vmatprep.subr.mxu0 0.0
    %3900 = vmatpush1.msra.mxu0 0.0
    %3901 = vmatprep.subr.mxu0 0.0
    %3902 = vmatpush1.msra.mxu0 0.0
    %3903 = vmatprep.subr.mxu0 0.0
    %3904 = vmatpush1.msra.mxu0 0.0
    %3905 = vmatprep.subr.mxu0 0.0
    %3906 = vmatpush1.msra.mxu0 0.0
    %3907 = vmatprep.subr.mxu0 0.0
    %3908 = vmatpush1.msra.mxu0 0.0
    %3909 = vmatprep.subr.mxu0 0.0
    %3910 = vmatpush1.msra.mxu0 0.0
    %3911 = vmatprep.subr.mxu0 0.0
    %3912 = vmatpush1.msra.mxu0 0.0
    %3913 = vmatprep.subr.mxu0 0.0
    %3914 = vmatpush1.msra.mxu0 0.0
    %3915 = vmatprep.subr.mxu0 0.0
    %3916 = vmatpush1.msra.mxu0 0.0
    %3917 = vmatprep.subr.mxu0 0.0
    %3918 = vmatpush1.msra.mxu0 0.0
    %3919 = vmatprep.subr.mxu0 0.0
    %3920 = vmatpush1.msra.mxu0 0.0
    %3921 = vmatprep.subr.mxu0 0.0
    %3922 = vmatpush1.msra.mxu0 0.0
    %3923 = vmatprep.subr.mxu0 0.0
    %3924 = vmatpush1.msra.mxu0 0.0
    %3925 = vmatprep.subr.mxu0 0.0
    %3926 = vmatpush1.msra.mxu0 0.0
    %3927 = vmatprep.subr.mxu0 0.0
    %3928 = vmatpush1.msra.mxu0 0.0
    %3929 = vmatprep.subr.mxu0 0.0
    %3930 = vmatpush1.msra.mxu0 0.0
    %3931 = vmatprep.mubr.f32.mxu0 0.0
    %3932 = vmatmul.mubr.f32.gmra.mrb[0].mxu0 %v3548
    %v3933 = vpop.f32.mrb[0].mxu0
    %v3934 = vadd.f32 %v1740, %v3933
    %v3935 = vpop.f32.mrb[0].mxu0
    %3936 = vdwg.mxu0
    %v3937 = vadd.f32 %v3722, %v3863
    %v3938 = vadd.f32 %v3724, %v3865
    %v3939 = vxor.u32 %v3937, 2147483648
    %v3940 = vxor.u32 %v3938, 2147483648
    %v3941 = vmul.f32 %v3939, 1.442695
    %v3942 = vpow.pop %v3941
    %v3943 = vmul.f32 %v3940, 1.442695
    %v3944 = vpow.pop %v3943
    %v3945 = vadd.f32 %v3942, 1.0
    %v3946 = vadd.f32 %v3944, 1.0
    %v3947 = vrcp.pop %v3945
    %v3948 = vmul.f32 1.0, %v3947
    %v3949 = vrcp.pop %v3946
    %v3950 = vmul.f32 1.0, %v3949
    %v3951 = vmul.f32 %v3948, %v3934
    %v3952 = vadd.f32 %v3793, %v3951
    %v3953 = vtanh.pop %v3952
    %v3954 = vsub.f32 1.0, %v3950
    %v3955 = vmul.f32 %v3954, %v3953
    %v3956 = vmul.f32 %v3950, %v3548
    %v3957 = vadd.f32 %v3955, %v3956
    %3958 = vmatprep.subr.mxu0 0.0
    %3959 = vmatpush1.msra.mxu0 %v1557
    %3960 = vmatprep.subr.mxu0 0.0
    %3961 = vmatpush1.msra.mxu0 %v1558
    %3962 = vmatprep.subr.mxu0 0.0
    %3963 = vmatpush1.msra.mxu0 %v1559
    %3964 = vmatprep.subr.mxu0 0.0
    %3965 = vmatpush1.msra.mxu0 %v1560
    %3966 = vmatprep.subr.mxu0 0.0
    %3967 = vmatpush1.msra.mxu0 %v1561
    %3968 = vmatprep.subr.mxu0 0.0
    %3969 = vmatpush1.msra.mxu0 %v1562
    %3970 = vmatprep.subr.mxu0 0.0
    %3971 = vmatpush1.msra.mxu0 %v1563
    %3972 = vmatprep.subr.mxu0 0.0
    %3973 = vmatpush1.msra.mxu0 %v1564
    %3974 = vmatprep.subr.mxu0 0.0
    %3975 = vmatpush1.msra.mxu0 %v1565
    %3976 = vmatprep.subr.mxu0 0.0
    %3977 = vmatpush1.msra.mxu0 %v1566
    %3978 = vmatprep.subr.mxu0 0.0
    %3979 = vmatpush1.msra.mxu0 %v1567
    %3980 = vmatprep.subr.mxu0 0.0
    %3981 = vmatpush1.msra.mxu0 %v1568
    %3982 = vmatprep.subr.mxu0 0.0
    %3983 = vmatpush1.msra.mxu0 %v1569
    %3984 = vmatprep.subr.mxu0 0.0
    %3985 = vmatpush1.msra.mxu0 %v1570
    %3986 = vmatprep.subr.mxu0 0.0
    %3987 = vmatpush1.msra.mxu0 %v1571
    %3988 = vmatprep.subr.mxu0 0.0
    %3989 = vmatpush1.msra.mxu0 %v1572
    %3990 = vmatprep.subr.mxu0 0.0
    %3991 = vmatpush1.msra.mxu0 0.0
    %3992 = vmatprep.subr.mxu0 0.0
    %3993 = vmatpush1.msra.mxu0 0.0
    %3994 = vmatprep.subr.mxu0 0.0
    %3995 = vmatpush1.msra.mxu0 0.0
    %3996 = vmatprep.subr.mxu0 0.0
    %3997 = vmatpush1.msra.mxu0 0.0
    %3998 = vmatprep.subr.mxu0 0.0
    %3999 = vmatpush1.msra.mxu0 0.0
    %4000 = vmatprep.subr.mxu0 0.0
    %4001 = vmatpush1.msra.mxu0 0.0
    %4002 = vmatprep.subr.mxu0 0.0
    %4003 = vmatpush1.msra.mxu0 0.0
    %4004 = vmatprep.subr.mxu0 0.0
    %4005 = vmatpush1.msra.mxu0 0.0
    %4006 = vmatprep.subr.mxu0 0.0
    %4007 = vmatpush1.msra.mxu0 0.0
    %4008 = vmatprep.subr.mxu0 0.0
    %4009 = vmatpush1.msra.mxu0 0.0
    %4010 = vmatprep.subr.mxu0 0.0
    %4011 = vmatpush1.msra.mxu0 0.0
    %4012 = vmatprep.subr.mxu0 0.0
    %4013 = vmatpush1.msra.mxu0 0.0
    %4014 = vmatprep.subr.mxu0 0.0
    %4015 = vmatpush1.msra.mxu0 0.0
    %4016 = vmatprep.subr.mxu0 0.0
    %4017 = vmatpush1.msra.mxu0 0.0
    %4018 = vmatprep.subr.mxu0 0.0
    %4019 = vmatpush1.msra.mxu0 0.0
    %4020 = vmatprep.subr.mxu0 0.0
    %4021 = vmatpush1.msra.mxu0 0.0
    %4022 = vmatprep.mubr.f32.mxu0 0.0
    %4023 = vmatmul.mubr.f32.gmra.mrb[0].mxu0 %v3957
    %v4024 = vpop.f32.mrb[0].mxu0
    %v4025 = vadd.f32 %v1910, %v4024
    %v4026 = vpop.f32.mrb[0].mxu0
    %4027 = vdwg.mxu0
    %v4028 = vsel %vm1982, %v4025, -inf
    %4029 = vmax.xlane.f32.xlu0 %v4028
    %v4030 = vpop.xlane.xlu0 %4029
    %v4031 = vsub.f32 %v4025, %v4030
    %v4032 = vmul.f32 %v4031, 1.442695
    %v4033 = vpow.pop %v4032
    %v4034 = vsel %vm1982, %v4033, 0.0
    %4035 = vadd.xlane.f32.xlu0 %v4034
    %v4036 = vpop.xlane.xlu0 %4035
    %v4037 = vlog2.pop %v4036
    %v4038 = vmul.f32 %v4037, 0.6931472
    %v4039 = vadd.f32 %v4038, %v4030
    %v4040 = vsub.f32 %v4025, %v4039
    %vm4041 = vcmp.eq.f32.partialorder %v4025, %v4030
    %v4042 = vsel %vm4041, %v1576, 128
    %v4043 = vsel %vm1982, %v4042, 2147483647
    %v4044 = vand.u32 %v4043, 65535
    %v4045 = vshra.s32 %v4043, 16
    %v4046 = vcvt.s32.f32 %v4044
    %v4047 = vcvt.s32.f32 %v4045
    %4048 = vmin.xlane.f32.xlu0 %v4047
    %v4049 = vpop.xlane.xlu0 %4048
    %vm4050 = vcmp.eq.f32.partialorder %v4047, %v4049
    %v4051 = vsel %vm4050, %v4046, inf
    %4052 = vmin.xlane.f32.xlu0 %v4051
    %v4053 = vpop.xlane.xlu0 %4052
    %v4054 = vcvt.f32.s32 %v4053
    %v4055 = vcvt.f32.s32 %v4049
    %v4056 = vshll.u32 %v4055, 16
    %v4057 = vadd.s32 %v4056, %v4054
    %vm4058 = vcmp.eq.s32.totalorder %v1576, %v4057
    %v4059 = vsel %vm4058, 1, 0
    %v4060 = vcvt.s32.f32 %v4059
    %v4062 = vsel %vm1583, %v4060, 0
    %4064 = vmatprep.subr.mxu0 %v1503
    %4065 = vmatpush1.msra.mxu0 %v1502
    %4066 = vmatprep.subr.mxu0 %v1506
    %4067 = vmatpush1.msra.mxu0 %v1505
    %4068 = vmatprep.subr.mxu0 0.0
    %4069 = vmatpush1.msra.mxu0 0.0
    %4070 = vmatprep.subr.mxu0 0.0
    %4071 = vmatpush1.msra.mxu0 0.0
    %4072 = vmatprep.subr.mxu0 0.0
    %4073 = vmatpush1.msra.mxu0 0.0
    %4074 = vmatprep.subr.mxu0 0.0
    %4075 = vmatpush1.msra.mxu0 0.0
    %4076 = vmatprep.subr.mxu0 0.0
    %4077 = vmatpush1.msra.mxu0 0.0
    %4078 = vmatprep.subr.mxu0 0.0
    %4079 = vmatpush1.msra.mxu0 0.0
    %4080 = vmatprep.subr.mxu0 0.0
    %4081 = vmatpush1.msra.mxu0 0.0
    %4082 = vmatprep.subr.mxu0 0.0
    %4083 = vmatpush1.msra.mxu0 0.0
    %4084 = vmatprep.subr.mxu0 0.0
    %4085 = vmatpush1.msra.mxu0 0.0
    %4086 = vmatprep.subr.mxu0 0.0
    %4087 = vmatpush1.msra.mxu0 0.0
    %4088 = vmatprep.subr.mxu0 0.0
    %4089 = vmatpush1.msra.mxu0 0.0
    %4090 = vmatprep.subr.mxu0 0.0
    %4091 = vmatpush1.msra.mxu0 0.0
    %4092 = vmatprep.subr.mxu0 0.0
    %4093 = vmatpush1.msra.mxu0 0.0
    %4094 = vmatprep.subr.mxu0 0.0
    %4095 = vmatpush1.msra.mxu0 0.0
    %4096 = vmatprep.subr.mxu0 0.0
    %4097 = vmatpush1.msra.mxu0 0.0
    %4098 = vmatprep.subr.mxu0 0.0
    %4099 = vmatpush1.msra.mxu0 0.0
    %4100 = vmatprep.subr.mxu0 0.0
    %4101 = vmatpush1.msra.mxu0 0.0
    %4102 = vmatprep.subr.mxu0 0.0
    %4103 = vmatpush1.msra.mxu0 0.0
    %4104 = vmatprep.subr.mxu0 0.0
    %4105 = vmatpush1.msra.mxu0 0.0
    %4106 = vmatprep.subr.mxu0 0.0
    %4107 = vmatpush1.msra.mxu0 0.0
    %4108 = vmatprep.subr.mxu0 0.0
    %4109 = vmatpush1.msra.mxu0 0.0
    %4110 = vmatprep.subr.mxu0 0.0
    %4111 = vmatpush1.msra.mxu0 0.0
    %4112 = vmatprep.subr.mxu0 0.0
    %4113 = vmatpush1.msra.mxu0 0.0
    %4114 = vmatprep.subr.mxu0 0.0
    %4115 = vmatpush1.msra.mxu0 0.0
    %4116 = vmatprep.subr.mxu0 0.0
    %4117 = vmatpush1.msra.mxu0 0.0
    %4118 = vmatprep.subr.mxu0 0.0
    %4119 = vmatpush1.msra.mxu0 0.0
    %4120 = vmatprep.subr.mxu0 0.0
    %4121 = vmatpush1.msra.mxu0 0.0
    %4122 = vmatprep.subr.mxu0 0.0
    %4123 = vmatpush1.msra.mxu0 0.0
    %4124 = vmatprep.subr.mxu0 0.0
    %4125 = vmatpush1.msra.mxu0 0.0
    %4126 = vmatprep.subr.mxu0 0.0
    %4127 = vmatpush1.msra.mxu0 0.0
    %4128 = vmatprep.mubr.f32.mxu0 0.0
    %4129 = vmatmul.mubr.f32.gmra.mrb[0].mxu0 %v4062
    %v4130 = vpop.f32.mrb[0].mxu0
    %v4131 = vadd.f32 0.0, %v4130
    %v4132 = vpop.f32.mrb[0].mxu0
    %v4133 = vadd.f32 0.0, %v4132
    %4134 = vdwg.mxu0
    %4135 = vmatprep.subr.mxu0 0.0
    %4136 = vmatpush1.msra.mxu0 %v1504
    %4137 = vmatprep.subr.mxu0 0.0
    %4138 = vmatpush1.msra.mxu0 %v1507
    %4139 = vmatprep.subr.mxu0 0.0
    %4140 = vmatpush1.msra.mxu0 0.0
    %4141 = vmatprep.subr.mxu0 0.0
    %4142 = vmatpush1.msra.mxu0 0.0
    %4143 = vmatprep.subr.mxu0 0.0
    %4144 = vmatpush1.msra.mxu0 0.0
    %4145 = vmatprep.subr.mxu0 0.0
    %4146 = vmatpush1.msra.mxu0 0.0
    %4147 = vmatprep.subr.mxu0 0.0
    %4148 = vmatpush1.msra.mxu0 0.0
    %4149 = vmatprep.subr.mxu0 0.0
    %4150 = vmatpush1.msra.mxu0 0.0
    %4151 = vmatprep.subr.mxu0 0.0
    %4152 = vmatpush1.msra.mxu0 0.0
    %4153 = vmatprep.subr.mxu0 0.0
    %4154 = vmatpush1.msra.mxu0 0.0
    %4155 = vmatprep.subr.mxu0 0.0
    %4156 = vmatpush1.msra.mxu0 0.0
    %4157 = vmatprep.subr.mxu0 0.0
    %4158 = vmatpush1.msra.mxu0 0.0
    %4159 = vmatprep.subr.mxu0 0.0
    %4160 = vmatpush1.msra.mxu0 0.0
    %4161 = vmatprep.subr.mxu0 0.0
    %4162 = vmatpush1.msra.mxu0 0.0
    %4163 = vmatprep.subr.mxu0 0.0
    %4164 = vmatpush1.msra.mxu0 0.0
    %4165 = vmatprep.subr.mxu0 0.0
    %4166 = vmatpush1.msra.mxu0 0.0
    %4167 = vmatprep.subr.mxu0 0.0
    %4168 = vmatpush1.msra.mxu0 0.0
    %4169 = vmatprep.subr.mxu0 0.0
    %4170 = vmatpush1.msra.mxu0 0.0
    %4171 = vmatprep.subr.mxu0 0.0
    %4172 = vmatpush1.msra.mxu0 0.0
    %4173 = vmatprep.subr.mxu0 0.0
    %4174 = vmatpush1.msra.mxu0 0.0
    %4175 = vmatprep.subr.mxu0 0.0
    %4176 = vmatpush1.msra.mxu0 0.0
    %4177 = vmatprep.subr.mxu0 0.0
    %4178 = vmatpush1.msra.mxu0 0.0
    %4179 = vmatprep.subr.mxu0 0.0
    %4180 = vmatpush1.msra.mxu0 0.0
    %4181 = vmatprep.subr.mxu0 0.0
    %4182 = vmatpush1.msra.mxu0 0.0
    %4183 = vmatprep.subr.mxu0 0.0
    %4184 = vmatpush1.msra.mxu0 0.0
    %4185 = vmatprep.subr.mxu0 0.0
    %4186 = vmatpush1.msra.mxu0 0.0
    %4187 = vmatprep.subr.mxu0 0.0
    %4188 = vmatpush1.msra.mxu0 0.0
    %4189 = vmatprep.subr.mxu0 0.0
    %4190 = vmatpush1.msra.mxu0 0.0
    %4191 = vmatprep.subr.mxu0 0.0
    %4192 = vmatpush1.msra.mxu0 0.0
    %4193 = vmatprep.subr.mxu0 0.0
    %4194 = vmatpush1.msra.mxu0 0.0
    %4195 = vmatprep.subr.mxu0 0.0
    %4196 = vmatpush1.msra.mxu0 0.0
    %4197 = vmatprep.subr.mxu0 0.0
    %4198 = vmatpush1.msra.mxu0 0.0
    %4199 = vmatprep.mubr.f32.mxu0 0.0
    %4200 = vmatmul.mubr.f32.gmra.mrb[0].mxu0 %v4062
    %v4201 = vpop.f32.mrb[0].mxu0
    %v4202 = vadd.f32 0.0, %v4201
    %v4203 = vpop.f32.mrb[0].mxu0
    %4204 = vdwg.mxu0
    %4205 = vmatprep.subr.mxu0 %v1509
    %4206 = vmatpush1.msra.mxu0 %v1508
    %4207 = vmatprep.subr.mxu0 %v1512
    %4208 = vmatpush1.msra.mxu0 %v1511
    %4209 = vmatprep.subr.mxu0 %v1515
    %4210 = vmatpush1.msra.mxu0 %v1514
    %4211 = vmatprep.subr.mxu0 %v1518
    %4212 = vmatpush1.msra.mxu0 %v1517
    %4213 = vmatprep.subr.mxu0 %v1521
    %4214 = vmatpush1.msra.mxu0 %v1520
    %4215 = vmatprep.subr.mxu0 %v1524
    %4216 = vmatpush1.msra.mxu0 %v1523
    %4217 = vmatprep.subr.mxu0 %v1527
    %4218 = vmatpush1.msra.mxu0 %v1526
    %4219 = vmatprep.subr.mxu0 %v1530
    %4220 = vmatpush1.msra.mxu0 %v1529
    %4221 = vmatprep.subr.mxu0 %v1533
    %4222 = vmatpush1.msra.mxu0 %v1532
    %4223 = vmatprep.subr.mxu0 %v1536
    %4224 = vmatpush1.msra.mxu0 %v1535
    %4225 = vmatprep.subr.mxu0 %v1539
    %4226 = vmatpush1.msra.mxu0 %v1538
    %4227 = vmatprep.subr.mxu0 %v1542
    %4228 = vmatpush1.msra.mxu0 %v1541
    %4229 = vmatprep.subr.mxu0 %v1545
    %4230 = vmatpush1.msra.mxu0 %v1544
    %4231 = vmatprep.subr.mxu0 %v1548
    %4232 = vmatpush1.msra.mxu0 %v1547
    %4233 = vmatprep.subr.mxu0 %v1551
    %4234 = vmatpush1.msra.mxu0 %v1550
    %4235 = vmatprep.subr.mxu0 %v1554
    %4236 = vmatpush1.msra.mxu0 %v1553
    %4237 = vmatprep.subr.mxu0 0.0
    %4238 = vmatpush1.msra.mxu0 0.0
    %4239 = vmatprep.subr.mxu0 0.0
    %4240 = vmatpush1.msra.mxu0 0.0
    %4241 = vmatprep.subr.mxu0 0.0
    %4242 = vmatpush1.msra.mxu0 0.0
    %4243 = vmatprep.subr.mxu0 0.0
    %4244 = vmatpush1.msra.mxu0 0.0
    %4245 = vmatprep.subr.mxu0 0.0
    %4246 = vmatpush1.msra.mxu0 0.0
    %4247 = vmatprep.subr.mxu0 0.0
    %4248 = vmatpush1.msra.mxu0 0.0
    %4249 = vmatprep.subr.mxu0 0.0
    %4250 = vmatpush1.msra.mxu0 0.0
    %4251 = vmatprep.subr.mxu0 0.0
    %4252 = vmatpush1.msra.mxu0 0.0
    %4253 = vmatprep.subr.mxu0 0.0
    %4254 = vmatpush1.msra.mxu0 0.0
    %4255 = vmatprep.subr.mxu0 0.0
    %4256 = vmatpush1.msra.mxu0 0.0
    %4257 = vmatprep.subr.mxu0 0.0
    %4258 = vmatpush1.msra.mxu0 0.0
    %4259 = vmatprep.subr.mxu0 0.0
    %4260 = vmatpush1.msra.mxu0 0.0
    %4261 = vmatprep.subr.mxu0 0.0
    %4262 = vmatpush1.msra.mxu0 0.0
    %4263 = vmatprep.subr.mxu0 0.0
    %4264 = vmatpush1.msra.mxu0 0.0
    %4265 = vmatprep.subr.mxu0 0.0
    %4266 = vmatpush1.msra.mxu0 0.0
    %4267 = vmatprep.subr.mxu0 0.0
    %4268 = vmatpush1.msra.mxu0 0.0
    %4269 = vmatprep.mubr.f32.mxu0 0.0
    %4270 = vmatmul.mubr.f32.gmra.mrb[0].mxu0 %v3957
    %v4271 = vpop.f32.mrb[0].mxu0
    %v4272 = vadd.f32 %v1732, %v4271
    %v4273 = vpop.f32.mrb[0].mxu0
    %v4274 = vadd.f32 %v1736, %v4273
    %4275 = vdwg.mxu0
    %4276 = vmatprep.subr.mxu0 0.0
    %4277 = vmatpush1.msra.mxu0 %v1510
    %4278 = vmatprep.subr.mxu0 0.0
    %4279 = vmatpush1.msra.mxu0 %v1513
    %4280 = vmatprep.subr.mxu0 0.0
    %4281 = vmatpush1.msra.mxu0 %v1516
    %4282 = vmatprep.subr.mxu0 0.0
    %4283 = vmatpush1.msra.mxu0 %v1519
    %4284 = vmatprep.subr.mxu0 0.0
    %4285 = vmatpush1.msra.mxu0 %v1522
    %4286 = vmatprep.subr.mxu0 0.0
    %4287 = vmatpush1.msra.mxu0 %v1525
    %4288 = vmatprep.subr.mxu0 0.0
    %4289 = vmatpush1.msra.mxu0 %v1528
    %4290 = vmatprep.subr.mxu0 0.0
    %4291 = vmatpush1.msra.mxu0 %v1531
    %4292 = vmatprep.subr.mxu0 0.0
    %4293 = vmatpush1.msra.mxu0 %v1534
    %4294 = vmatprep.subr.mxu0 0.0
    %4295 = vmatpush1.msra.mxu0 %v1537
    %4296 = vmatprep.subr.mxu0 0.0
    %4297 = vmatpush1.msra.mxu0 %v1540
    %4298 = vmatprep.subr.mxu0 0.0
    %4299 = vmatpush1.msra.mxu0 %v1543
    %4300 = vmatprep.subr.mxu0 0.0
    %4301 = vmatpush1.msra.mxu0 %v1546
    %4302 = vmatprep.subr.mxu0 0.0
    %4303 = vmatpush1.msra.mxu0 %v1549
    %4304 = vmatprep.subr.mxu0 0.0
    %4305 = vmatpush1.msra.mxu0 %v1552
    %4306 = vmatprep.subr.mxu0 0.0
    %4307 = vmatpush1.msra.mxu0 %v1555
    %4308 = vmatprep.subr.mxu0 0.0
    %4309 = vmatpush1.msra.mxu0 0.0
    %4310 = vmatprep.subr.mxu0 0.0
    %4311 = vmatpush1.msra.mxu0 0.0
    %4312 = vmatprep.subr.mxu0 0.0
    %4313 = vmatpush1.msra.mxu0 0.0
    %4314 = vmatprep.subr.mxu0 0.0
    %4315 = vmatpush1.msra.mxu0 0.0
    %4316 = vmatprep.subr.mxu0 0.0
    %4317 = vmatpush1.msra.mxu0 0.0
    %4318 = vmatprep.subr.mxu0 0.0
    %4319 = vmatpush1.msra.mxu0 0.0
    %4320 = vmatprep.subr.mxu0 0.0
    %4321 = vmatpush1.msra.mxu0 0.0
    %4322 = vmatprep.subr.mxu0 0.0
    %4323 = vmatpush1.msra.mxu0 0.0
    %4324 = vmatprep.subr.mxu0 0.0
    %4325 = vmatpush1.msra.mxu0 0.0
    %4326 = vmatprep.subr.mxu0 0.0
    %4327 = vmatpush1.msra.mxu0 0.0
    %4328 = vmatprep.subr.mxu0 0.0
    %4329 = vmatpush1.msra.mxu0 0.0
    %4330 = vmatprep.subr.mxu0 0.0
    %4331 = vmatpush1.msra.mxu0 0.0
    %4332 = vmatprep.subr.mxu0 0.0
    %4333 = vmatpush1.msra.mxu0 0.0
    %4334 = vmatprep.subr.mxu0 0.0
    %4335 = vmatpush1.msra.mxu0 0.0
    %4336 = vmatprep.subr.mxu0 0.0
    %4337 = vmatpush1.msra.mxu0 0.0
    %4338 = vmatprep.subr.mxu0 0.0
    %4339 = vmatpush1.msra.mxu0 0.0
    %4340 = vmatprep.mubr.f32.mxu0 0.0
    %4341 = vmatmul.mubr.f32.gmra.mrb[0].mxu0 %v3957
    %v4342 = vpop.f32.mrb[0].mxu0
    %v4343 = vadd.f32 %v1740, %v4342
    %v4344 = vpop.f32.mrb[0].mxu0
    %4345 = vdwg.mxu0
    %v4346 = vadd.f32 %v4131, %v4272
    %v4347 = vadd.f32 %v4133, %v4274
    %v4348 = vxor.u32 %v4346, 2147483648
    %v4349 = vxor.u32 %v4347, 2147483648
    %v4350 = vmul.f32 %v4348, 1.442695
    %v4351 = vpow.pop %v4350
    %v4352 = vmul.f32 %v4349, 1.442695
    %v4353 = vpow.pop %v4352
    %v4354 = vadd.f32 %v4351, 1.0
    %v4355 = vadd.f32 %v4353, 1.0
    %v4356 = vrcp.pop %v4354
    %v4357 = vmul.f32 1.0, %v4356
    %v4358 = vrcp.pop %v4355
    %v4359 = vmul.f32 1.0, %v4358
    %v4360 = vmul.f32 %v4357, %v4343
    %v4361 = vadd.f32 %v4202, %v4360
    %v4362 = vtanh.pop %v4361
    %v4363 = vsub.f32 1.0, %v4359
    %v4364 = vmul.f32 %v4363, %v4362
    %v4365 = vmul.f32 %v4359, %v3957
    %v4366 = vadd.f32 %v4364, %v4365
    %4367 = vmatprep.subr.mxu0 0.0
    %4368 = vmatpush1.msra.mxu0 %v1557
    %4369 = vmatprep.subr.mxu0 0.0
    %4370 = vmatpush1.msra.mxu0 %v1558
    %4371 = vmatprep.subr.mxu0 0.0
    %4372 = vmatpush1.msra.mxu0 %v1559
    %4373 = vmatprep.subr.mxu0 0.0
    %4374 = vmatpush1.msra.mxu0 %v1560
    %4375 = vmatprep.subr.mxu0 0.0
    %4376 = vmatpush1.msra.mxu0 %v1561
    %4377 = vmatprep.subr.mxu0 0.0
    %4378 = vmatpush1.msra.mxu0 %v1562
    %4379 = vmatprep.subr.mxu0 0.0
    %4380 = vmatpush1.msra.mxu0 %v1563
    %4381 = vmatprep.subr.mxu0 0.0
    %4382 = vmatpush1.msra.mxu0 %v1564
    %4383 = vmatprep.subr.mxu0 0.0
    %4384 = vmatpush1.msra.mxu0 %v1565
    %4385 = vmatprep.subr.mxu0 0.0
    %4386 = vmatpush1.msra.mxu0 %v1566
    %4387 = vmatprep.subr.mxu0 0.0
    %4388 = vmatpush1.msra.mxu0 %v1567
    %4389 = vmatprep.subr.mxu0 0.0
    %4390 = vmatpush1.msra.mxu0 %v1568
    %4391 = vmatprep.subr.mxu0 0.0
    %4392 = vmatpush1.msra.mxu0 %v1569
    %4393 = vmatprep.subr.mxu0 0.0
    %4394 = vmatpush1.msra.mxu0 %v1570
    %4395 = vmatprep.subr.mxu0 0.0
    %4396 = vmatpush1.msra.mxu0 %v1571
    %4397 = vmatprep.subr.mxu0 0.0
    %4398 = vmatpush1.msra.mxu0 %v1572
    %4399 = vmatprep.subr.mxu0 0.0
    %4400 = vmatpush1.msra.mxu0 0.0
    %4401 = vmatprep.subr.mxu0 0.0
    %4402 = vmatpush1.msra.mxu0 0.0
    %4403 = vmatprep.subr.mxu0 0.0
    %4404 = vmatpush1.msra.mxu0 0.0
    %4405 = vmatprep.subr.mxu0 0.0
    %4406 = vmatpush1.msra.mxu0 0.0
    %4407 = vmatprep.subr.mxu0 0.0
    %4408 = vmatpush1.msra.mxu0 0.0
    %4409 = vmatprep.subr.mxu0 0.0
    %4410 = vmatpush1.msra.mxu0 0.0
    %4411 = vmatprep.subr.mxu0 0.0
    %4412 = vmatpush1.msra.mxu0 0.0
    %4413 = vmatprep.subr.mxu0 0.0
    %4414 = vmatpush1.msra.mxu0 0.0
    %4415 = vmatprep.subr.mxu0 0.0
    %4416 = vmatpush1.msra.mxu0 0.0
    %4417 = vmatprep.subr.mxu0 0.0
    %4418 = vmatpush1.msra.mxu0 0.0
    %4419 = vmatprep.subr.mxu0 0.0
    %4420 = vmatpush1.msra.mxu0 0.0
    %4421 = vmatprep.subr.mxu0 0.0
    %4422 = vmatpush1.msra.mxu0 0.0
    %4423 = vmatprep.subr.mxu0 0.0
    %4424 = vmatpush1.msra.mxu0 0.0
    %4425 = vmatprep.subr.mxu0 0.0
    %4426 = vmatpush1.msra.mxu0 0.0
    %4427 = vmatprep.subr.mxu0 0.0
    %4428 = vmatpush1.msra.mxu0 0.0
    %4429 = vmatprep.subr.mxu0 0.0
    %4430 = vmatpush1.msra.mxu0 0.0
    %4431 = vmatprep.mubr.f32.mxu0 0.0
    %4432 = vmatmul.mubr.f32.gmra.mrb[0].mxu0 %v4366
    %v4433 = vpop.f32.mrb[0].mxu0
    %v4434 = vadd.f32 %v1910, %v4433
    %v4435 = vpop.f32.mrb[0].mxu0
    %4436 = vdwg.mxu0
    %v4437 = vsel %vm1982, %v4434, -inf
    %4438 = vmax.xlane.f32.xlu0 %v4437
    %v4439 = vpop.xlane.xlu0 %4438
    %v4440 = vsub.f32 %v4434, %v4439
    %v4441 = vmul.f32 %v4440, 1.442695
    %v4442 = vpow.pop %v4441
    %v4443 = vsel %vm1982, %v4442, 0.0
    %4444 = vadd.xlane.f32.xlu0 %v4443
    %v4445 = vpop.xlane.xlu0 %4444
    %v4446 = vlog2.pop %v4445
    %v4447 = vmul.f32 %v4446, 0.6931472
    %v4448 = vadd.f32 %v4447, %v4439
    %v4449 = vsub.f32 %v4434, %v4448
    %vm4450 = vcmp.eq.f32.partialorder %v4434, %v4439
    %v4451 = vsel %vm4450, %v1576, 128
    %v4452 = vsel %vm1982, %v4451, 2147483647
    %v4453 = vand.u32 %v4452, 65535
    %v4454 = vshra.s32 %v4452, 16
    %v4455 = vcvt.s32.f32 %v4453
    %v4456 = vcvt.s32.f32 %v4454
    %4457 = vmin.xlane.f32.xlu0 %v4456
    %v4458 = vpop.xlane.xlu0 %4457
    %vm4459 = vcmp.eq.f32.partialorder %v4456, %v4458
    %v4460 = vsel %vm4459, %v4455, inf
    %4461 = vmin.xlane.f32.xlu0 %v4460
    %v4462 = vpop.xlane.xlu0 %4461
    %v4463 = vcvt.f32.s32 %v4462
    %v4464 = vcvt.f32.s32 %v4458
    %v4465 = vshll.u32 %v4464, 16
    %v4466 = vadd.s32 %v4465, %v4463
    %vm4467 = vcmp.eq.s32.totalorder %v1576, %v4466
    %v4468 = vsel %vm4467, 1, 0
    %v4469 = vcvt.s32.f32 %v4468
    %v4471 = vsel %vm1583, %v4469, 0
    %4473 = vmatprep.subr.mxu0 %v1503
    %4474 = vmatpush1.msra.mxu0 %v1502
    %4475 = vmatprep.subr.mxu0 %v1506
    %4476 = vmatpush1.msra.mxu0 %v1505
    %4477 = vmatprep.subr.mxu0 0.0
    %4478 = vmatpush1.msra.mxu0 0.0
    %4479 = vmatprep.subr.mxu0 0.0
    %4480 = vmatpush1.msra.mxu0 0.0
    %4481 = vmatprep.subr.mxu0 0.0
    %4482 = vmatpush1.msra.mxu0 0.0
    %4483 = vmatprep.subr.mxu0 0.0
    %4484 = vmatpush1.msra.mxu0 0.0
    %4485 = vmatprep.subr.mxu0 0.0
    %4486 = vmatpush1.msra.mxu0 0.0
    %4487 = vmatprep.subr.mxu0 0.0
    %4488 = vmatpush1.msra.mxu0 0.0
    %4489 = vmatprep.subr.mxu0 0.0
    %4490 = vmatpush1.msra.mxu0 0.0
    %4491 = vmatprep.subr.mxu0 0.0
    %4492 = vmatpush1.msra.mxu0 0.0
    %4493 = vmatprep.subr.mxu0 0.0
    %4494 = vmatpush1.msra.mxu0 0.0
    %4495 = vmatprep.subr.mxu0 0.0
    %4496 = vmatpush1.msra.mxu0 0.0
    %4497 = vmatprep.subr.mxu0 0.0
    %4498 = vmatpush1.msra.mxu0 0.0
    %4499 = vmatprep.subr.mxu0 0.0
    %4500 = vmatpush1.msra.mxu0 0.0
    %4501 = vmatprep.subr.mxu0 0.0
    %4502 = vmatpush1.msra.mxu0 0.0
    %4503 = vmatprep.subr.mxu0 0.0
    %4504 = vmatpush1.msra.mxu0 0.0
    %4505 = vmatprep.subr.mxu0 0.0
    %4506 = vmatpush1.msra.mxu0 0.0
    %4507 = vmatprep.subr.mxu0 0.0
    %4508 = vmatpush1.msra.mxu0 0.0
    %4509 = vmatprep.subr.mxu0 0.0
    %4510 = vmatpush1.msra.mxu0 0.0
    %4511 = vmatprep.subr.mxu0 0.0
    %4512 = vmatpush1.msra.mxu0 0.0
    %4513 = vmatprep.subr.mxu0 0.0
    %4514 = vmatpush1.msra.mxu0 0.0
    %4515 = vmatprep.subr.mxu0 0.0
    %4516 = vmatpush1.msra.mxu0 0.0
    %4517 = vmatprep.subr.mxu0 0.0
    %4518 = vmatpush1.msra.mxu0 0.0
    %4519 = vmatprep.subr.mxu0 0.0
    %4520 = vmatpush1.msra.mxu0 0.0
    %4521 = vmatprep.subr.mxu0 0.0
    %4522 = vmatpush1.msra.mxu0 0.0
    %4523 = vmatprep.subr.mxu0 0.0
    %4524 = vmatpush1.msra.mxu0 0.0
    %4525 = vmatprep.subr.mxu0 0.0
    %4526 = vmatpush1.msra.mxu0 0.0
    %4527 = vmatprep.subr.mxu0 0.0
    %4528 = vmatpush1.msra.mxu0 0.0
    %4529 = vmatprep.subr.mxu0 0.0
    %4530 = vmatpush1.msra.mxu0 0.0
    %4531 = vmatprep.subr.mxu0 0.0
    %4532 = vmatpush1.msra.mxu0 0.0
    %4533 = vmatprep.subr.mxu0 0.0
    %4534 = vmatpush1.msra.mxu0 0.0
    %4535 = vmatprep.subr.mxu0 0.0
    %4536 = vmatpush1.msra.mxu0 0.0
    %4537 = vmatprep.mubr.f32.mxu0 0.0
    %4538 = vmatmul.mubr.f32.gmra.mrb[0].mxu0 %v4471
    %v4539 = vpop.f32.mrb[0].mxu0
    %v4540 = vadd.f32 0.0, %v4539
    %v4541 = vpop.f32.mrb[0].mxu0
    %v4542 = vadd.f32 0.0, %v4541
    %4543 = vdwg.mxu0
    %4544 = vmatprep.subr.mxu0 0.0
    %4545 = vmatpush1.msra.mxu0 %v1504
    %4546 = vmatprep.subr.mxu0 0.0
    %4547 = vmatpush1.msra.mxu0 %v1507
    %4548 = vmatprep.subr.mxu0 0.0
    %4549 = vmatpush1.msra.mxu0 0.0
    %4550 = vmatprep.subr.mxu0 0.0
    %4551 = vmatpush1.msra.mxu0 0.0
    %4552 = vmatprep.subr.mxu0 0.0
    %4553 = vmatpush1.msra.mxu0 0.0
    %4554 = vmatprep.subr.mxu0 0.0
    %4555 = vmatpush1.msra.mxu0 0.0
    %4556 = vmatprep.subr.mxu0 0.0
    %4557 = vmatpush1.msra.mxu0 0.0
    %4558 = vmatprep.subr.mxu0 0.0
    %4559 = vmatpush1.msra.mxu0 0.0
    %4560 = vmatprep.subr.mxu0 0.0
    %4561 = vmatpush1.msra.mxu0 0.0
    %4562 = vmatprep.subr.mxu0 0.0
    %4563 = vmatpush1.msra.mxu0 0.0
    %4564 = vmatprep.subr.mxu0 0.0
    %4565 = vmatpush1.msra.mxu0 0.0
    %4566 = vmatprep.subr.mxu0 0.0
    %4567 = vmatpush1.msra.mxu0 0.0
    %4568 = vmatprep.subr.mxu0 0.0
    %4569 = vmatpush1.msra.mxu0 0.0
    %4570 = vmatprep.subr.mxu0 0.0
    %4571 = vmatpush1.msra.mxu0 0.0
    %4572 = vmatprep.subr.mxu0 0.0
    %4573 = vmatpush1.msra.mxu0 0.0
    %4574 = vmatprep.subr.mxu0 0.0
    %4575 = vmatpush1.msra.mxu0 0.0
    %4576 = vmatprep.subr.mxu0 0.0
    %4577 = vmatpush1.msra.mxu0 0.0
    %4578 = vmatprep.subr.mxu0 0.0
    %4579 = vmatpush1.msra.mxu0 0.0
    %4580 = vmatprep.subr.mxu0 0.0
    %4581 = vmatpush1.msra.mxu0 0.0
    %4582 = vmatprep.subr.mxu0 0.0
    %4583 = vmatpush1.msra.mxu0 0.0
    %4584 = vmatprep.subr.mxu0 0.0
    %4585 = vmatpush1.msra.mxu0 0.0
    %4586 = vmatprep.subr.mxu0 0.0
    %4587 = vmatpush1.msra.mxu0 0.0
    %4588 = vmatprep.subr.mxu0 0.0
    %4589 = vmatpush1.msra.mxu0 0.0
    %4590 = vmatprep.subr.mxu0 0.0
    %4591 = vmatpush1.msra.mxu0 0.0
    %4592 = vmatprep.subr.mxu0 0.0
    %4593 = vmatpush1.msra.mxu0 0.0
    %4594 = vmatprep.subr.mxu0 0.0
    %4595 = vmatpush1.msra.mxu0 0.0
    %4596 = vmatprep.subr.mxu0 0.0
    %4597 = vmatpush1.msra.mxu0 0.0
    %4598 = vmatprep.subr.mxu0 0.0
    %4599 = vmatpush1.msra.mxu0 0.0
    %4600 = vmatprep.subr.mxu0 0.0
    %4601 = vmatpush1.msra.mxu0 0.0
    %4602 = vmatprep.subr.mxu0 0.0
    %4603 = vmatpush1.msra.mxu0 0.0
    %4604 = vmatprep.subr.mxu0 0.0
    %4605 = vmatpush1.msra.mxu0 0.0
    %4606 = vmatprep.subr.mxu0 0.0
    %4607 = vmatpush1.msra.mxu0 0.0
    %4608 = vmatprep.mubr.f32.mxu0 0.0
    %4609 = vmatmul.mubr.f32.gmra.mrb[0].mxu0 %v4471
    %v4610 = vpop.f32.mrb[0].mxu0
    %v4611 = vadd.f32 0.0, %v4610
    %v4612 = vpop.f32.mrb[0].mxu0
    %4613 = vdwg.mxu0
    %4614 = vmatprep.subr.mxu0 %v1509
    %4615 = vmatpush1.msra.mxu0 %v1508
    %4616 = vmatprep.subr.mxu0 %v1512
    %4617 = vmatpush1.msra.mxu0 %v1511
    %4618 = vmatprep.subr.mxu0 %v1515
    %4619 = vmatpush1.msra.mxu0 %v1514
    %4620 = vmatprep.subr.mxu0 %v1518
    %4621 = vmatpush1.msra.mxu0 %v1517
    %4622 = vmatprep.subr.mxu0 %v1521
    %4623 = vmatpush1.msra.mxu0 %v1520
    %4624 = vmatprep.subr.mxu0 %v1524
    %4625 = vmatpush1.msra.mxu0 %v1523
    %4626 = vmatprep.subr.mxu0 %v1527
    %4627 = vmatpush1.msra.mxu0 %v1526
    %4628 = vmatprep.subr.mxu0 %v1530
    %4629 = vmatpush1.msra.mxu0 %v1529
    %4630 = vmatprep.subr.mxu0 %v1533
    %4631 = vmatpush1.msra.mxu0 %v1532
    %4632 = vmatprep.subr.mxu0 %v1536
    %4633 = vmatpush1.msra.mxu0 %v1535
    %4634 = vmatprep.subr.mxu0 %v1539
    %4635 = vmatpush1.msra.mxu0 %v1538
    %4636 = vmatprep.subr.mxu0 %v1542
    %4637 = vmatpush1.msra.mxu0 %v1541
    %4638 = vmatprep.subr.mxu0 %v1545
    %4639 = vmatpush1.msra.mxu0 %v1544
    %4640 = vmatprep.subr.mxu0 %v1548
    %4641 = vmatpush1.msra.mxu0 %v1547
    %4642 = vmatprep.subr.mxu0 %v1551
    %4643 = vmatpush1.msra.mxu0 %v1550
    %4644 = vmatprep.subr.mxu0 %v1554
    %4645 = vmatpush1.msra.mxu0 %v1553
    %4646 = vmatprep.subr.mxu0 0.0
    %4647 = vmatpush1.msra.mxu0 0.0
    %4648 = vmatprep.subr.mxu0 0.0
    %4649 = vmatpush1.msra.mxu0 0.0
    %4650 = vmatprep.subr.mxu0 0.0
    %4651 = vmatpush1.msra.mxu0 0.0
    %4652 = vmatprep.subr.mxu0 0.0
    %4653 = vmatpush1.msra.mxu0 0.0
    %4654 = vmatprep.subr.mxu0 0.0
    %4655 = vmatpush1.msra.mxu0 0.0
    %4656 = vmatprep.subr.mxu0 0.0
    %4657 = vmatpush1.msra.mxu0 0.0
    %4658 = vmatprep.subr.mxu0 0.0
    %4659 = vmatpush1.msra.mxu0 0.0
    %4660 = vmatprep.subr.mxu0 0.0
    %4661 = vmatpush1.msra.mxu0 0.0
    %4662 = vmatprep.subr.mxu0 0.0
    %4663 = vmatpush1.msra.mxu0 0.0
    %4664 = vmatprep.subr.mxu0 0.0
    %4665 = vmatpush1.msra.mxu0 0.0
    %4666 = vmatprep.subr.mxu0 0.0
    %4667 = vmatpush1.msra.mxu0 0.0
    %4668 = vmatprep.subr.mxu0 0.0
    %4669 = vmatpush1.msra.mxu0 0.0
    %4670 = vmatprep.subr.mxu0 0.0
    %4671 = vmatpush1.msra.mxu0 0.0
    %4672 = vmatprep.subr.mxu0 0.0
    %4673 = vmatpush1.msra.mxu0 0.0
    %4674 = vmatprep.subr.mxu0 0.0
    %4675 = vmatpush1.msra.mxu0 0.0
    %4676 = vmatprep.subr.mxu0 0.0
    %4677 = vmatpush1.msra.mxu0 0.0
    %4678 = vmatprep.mubr.f32.mxu0 0.0
    %4679 = vmatmul.mubr.f32.gmra.mrb[0].mxu0 %v4366
    %v4680 = vpop.f32.mrb[0].mxu0
    %v4681 = vadd.f32 %v1732, %v4680
    %v4682 = vpop.f32.mrb[0].mxu0
    %v4683 = vadd.f32 %v1736, %v4682
    %4684 = vdwg.mxu0
    %4685 = vmatprep.subr.mxu0 0.0
    %4686 = vmatpush1.msra.mxu0 %v1510
    %4687 = vmatprep.subr.mxu0 0.0
    %4688 = vmatpush1.msra.mxu0 %v1513
    %4689 = vmatprep.subr.mxu0 0.0
    %4690 = vmatpush1.msra.mxu0 %v1516
    %4691 = vmatprep.subr.mxu0 0.0
    %4692 = vmatpush1.msra.mxu0 %v1519
    %4693 = vmatprep.subr.mxu0 0.0
    %4694 = vmatpush1.msra.mxu0 %v1522
    %4695 = vmatprep.subr.mxu0 0.0
    %4696 = vmatpush1.msra.mxu0 %v1525
    %4697 = vmatprep.subr.mxu0 0.0
    %4698 = vmatpush1.msra.mxu0 %v1528
    %4699 = vmatprep.subr.mxu0 0.0
    %4700 = vmatpush1.msra.mxu0 %v1531
    %4701 = vmatprep.subr.mxu0 0.0
    %4702 = vmatpush1.msra.mxu0 %v1534
    %4703 = vmatprep.subr.mxu0 0.0
    %4704 = vmatpush1.msra.mxu0 %v1537
    %4705 = vmatprep.subr.mxu0 0.0
    %4706 = vmatpush1.msra.mxu0 %v1540
    %4707 = vmatprep.subr.mxu0 0.0
    %4708 = vmatpush1.msra.mxu0 %v1543
    %4709 = vmatprep.subr.mxu0 0.0
    %4710 = vmatpush1.msra.mxu0 %v1546
    %4711 = vmatprep.subr.mxu0 0.0
    %4712 = vmatpush1.msra.mxu0 %v1549
    %4713 = vmatprep.subr.mxu0 0.0
    %4714 = vmatpush1.msra.mxu0 %v1552
    %4715 = vmatprep.subr.mxu0 0.0
    %4716 = vmatpush1.msra.mxu0 %v1555
    %4717 = vmatprep.subr.mxu0 0.0
    %4718 = vmatpush1.msra.mxu0 0.0
    %4719 = vmatprep.subr.mxu0 0.0
    %4720 = vmatpush1.msra.mxu0 0.0
    %4721 = vmatprep.subr.mxu0 0.0
    %4722 = vmatpush1.msra.mxu0 0.0
    %4723 = vmatprep.subr.mxu0 0.0
    %4724 = vmatpush1.msra.mxu0 0.0
    %4725 = vmatprep.subr.mxu0 0.0
    %4726 = vmatpush1.msra.mxu0 0.0
    %4727 = vmatprep.subr.mxu0 0.0
    %4728 = vmatpush1.msra.mxu0 0.0
    %4729 = vmatprep.subr.mxu0 0.0
    %4730 = vmatpush1.msra.mxu0 0.0
    %4731 = vmatprep.subr.mxu0 0.0
    %4732 = vmatpush1.msra.mxu0 0.0
    %4733 = vmatprep.subr.mxu0 0.0
    %4734 = vmatpush1.msra.mxu0 0.0
    %4735 = vmatprep.subr.mxu0 0.0
    %4736 = vmatpush1.msra.mxu0 0.0
    %4737 = vmatprep.subr.mxu0 0.0
    %4738 = vmatpush1.msra.mxu0 0.0
    %4739 = vmatprep.subr.mxu0 0.0
    %4740 = vmatpush1.msra.mxu0 0.0
    %4741 = vmatprep.subr.mxu0 0.0
    %4742 = vmatpush1.msra.mxu0 0.0
    %4743 = vmatprep.subr.mxu0 0.0
    %4744 = vmatpush1.msra.mxu0 0.0
    %4745 = vmatprep.subr.mxu0 0.0
    %4746 = vmatpush1.msra.mxu0 0.0
    %4747 = vmatprep.subr.mxu0 0.0
    %4748 = vmatpush1.msra.mxu0 0.0
    %4749 = vmatprep.mubr.f32.mxu0 0.0
    %4750 = vmatmul.mubr.f32.gmra.mrb[0].mxu0 %v4366
    %v4751 = vpop.f32.mrb[0].mxu0
    %v4752 = vadd.f32 %v1740, %v4751
    %v4753 = vpop.f32.mrb[0].mxu0
    %4754 = vdwg.mxu0
    %v4755 = vadd.f32 %v4540, %v4681
    %v4756 = vadd.f32 %v4542, %v4683
    %v4757 = vxor.u32 %v4755, 2147483648
    %v4758 = vxor.u32 %v4756, 2147483648
    %v4759 = vmul.f32 %v4757, 1.442695
    %v4760 = vpow.pop %v4759
    %v4761 = vmul.f32 %v4758, 1.442695
    %v4762 = vpow.pop %v4761
    %v4763 = vadd.f32 %v4760, 1.0
    %v4764 = vadd.f32 %v4762, 1.0
    %v4765 = vrcp.pop %v4763
    %v4766 = vmul.f32 1.0, %v4765
    %v4767 = vrcp.pop %v4764
    %v4768 = vmul.f32 1.0, %v4767
    %v4769 = vmul.f32 %v4766, %v4752
    %v4770 = vadd.f32 %v4611, %v4769
    %v4771 = vtanh.pop %v4770
    %v4772 = vsub.f32 1.0, %v4768
    %v4773 = vmul.f32 %v4772, %v4771
    %v4774 = vmul.f32 %v4768, %v4366
    %v4775 = vadd.f32 %v4773, %v4774
    %4776 = vmatprep.subr.mxu0 0.0
    %4777 = vmatpush1.msra.mxu0 %v1557
    %4778 = vmatprep.subr.mxu0 0.0
    %4779 = vmatpush1.msra.mxu0 %v1558
    %4780 = vmatprep.subr.mxu0 0.0
    %4781 = vmatpush1.msra.mxu0 %v1559
    %4782 = vmatprep.subr.mxu0 0.0
    %4783 = vmatpush1.msra.mxu0 %v1560
    %4784 = vmatprep.subr.mxu0 0.0
    %4785 = vmatpush1.msra.mxu0 %v1561
    %4786 = vmatprep.subr.mxu0 0.0
    %4787 = vmatpush1.msra.mxu0 %v1562
    %4788 = vmatprep.subr.mxu0 0.0
    %4789 = vmatpush1.msra.mxu0 %v1563
    %4790 = vmatprep.subr.mxu0 0.0
    %4791 = vmatpush1.msra.mxu0 %v1564
    %4792 = vmatprep.subr.mxu0 0.0
    %4793 = vmatpush1.msra.mxu0 %v1565
    %4794 = vmatprep.subr.mxu0 0.0
    %4795 = vmatpush1.msra.mxu0 %v1566
    %4796 = vmatprep.subr.mxu0 0.0
    %4797 = vmatpush1.msra.mxu0 %v1567
    %4798 = vmatprep.subr.mxu0 0.0
    %4799 = vmatpush1.msra.mxu0 %v1568
    %4800 = vmatprep.subr.mxu0 0.0
    %4801 = vmatpush1.msra.mxu0 %v1569
    %4802 = vmatprep.subr.mxu0 0.0
    %4803 = vmatpush1.msra.mxu0 %v1570
    %4804 = vmatprep.subr.mxu0 0.0
    %4805 = vmatpush1.msra.mxu0 %v1571
    %4806 = vmatprep.subr.mxu0 0.0
    %4807 = vmatpush1.msra.mxu0 %v1572
    %4808 = vmatprep.subr.mxu0 0.0
    %4809 = vmatpush1.msra.mxu0 0.0
    %4810 = vmatprep.subr.mxu0 0.0
    %4811 = vmatpush1.msra.mxu0 0.0
    %4812 = vmatprep.subr.mxu0 0.0
    %4813 = vmatpush1.msra.mxu0 0.0
    %4814 = vmatprep.subr.mxu0 0.0
    %4815 = vmatpush1.msra.mxu0 0.0
    %4816 = vmatprep.subr.mxu0 0.0
    %4817 = vmatpush1.msra.mxu0 0.0
    %4818 = vmatprep.subr.mxu0 0.0
    %4819 = vmatpush1.msra.mxu0 0.0
    %4820 = vmatprep.subr.mxu0 0.0
    %4821 = vmatpush1.msra.mxu0 0.0
    %4822 = vmatprep.subr.mxu0 0.0
    %4823 = vmatpush1.msra.mxu0 0.0
    %4824 = vmatprep.subr.mxu0 0.0
    %4825 = vmatpush1.msra.mxu0 0.0
    %4826 = vmatprep.subr.mxu0 0.0
    %4827 = vmatpush1.msra.mxu0 0.0
    %4828 = vmatprep.subr.mxu0 0.0
    %4829 = vmatpush1.msra.mxu0 0.0
    %4830 = vmatprep.subr.mxu0 0.0
    %4831 = vmatpush1.msra.mxu0 0.0
    %4832 = vmatprep.subr.mxu0 0.0
    %4833 = vmatpush1.msra.mxu0 0.0
    %4834 = vmatprep.subr.mxu0 0.0
    %4835 = vmatpush1.msra.mxu0 0.0
    %4836 = vmatprep.subr.mxu0 0.0
    %4837 = vmatpush1.msra.mxu0 0.0
    %4838 = vmatprep.subr.mxu0 0.0
    %4839 = vmatpush1.msra.mxu0 0.0
    %4840 = vmatprep.mubr.f32.mxu0 0.0
    %4841 = vmatmul.mubr.f32.gmra.mrb[0].mxu0 %v4775
    %v4842 = vpop.f32.mrb[0].mxu0
    %v4843 = vadd.f32 %v1910, %v4842
    %v4844 = vpop.f32.mrb[0].mxu0
    %4845 = vdwg.mxu0
    %v4846 = vsel %vm1982, %v4843, -inf
    %4847 = vmax.xlane.f32.xlu0 %v4846
    %v4848 = vpop.xlane.xlu0 %4847
    %v4849 = vsub.f32 %v4843, %v4848
    %v4850 = vmul.f32 %v4849, 1.442695
    %v4851 = vpow.pop %v4850
    %v4852 = vsel %vm1982, %v4851, 0.0
    %4853 = vadd.xlane.f32.xlu0 %v4852
    %v4854 = vpop.xlane.xlu0 %4853
    %v4855 = vlog2.pop %v4854
    %v4856 = vmul.f32 %v4855, 0.6931472
    %v4857 = vadd.f32 %v4856, %v4848
    %v4858 = vsub.f32 %v4843, %v4857
    %v4867 = vcombine.low %v1995, %v2404
    %v4868 = vcombine.low %v2813, %v3222
    %v4870 = vunpack.c.l.s4 1983009808
    %v4871 = vunpack.c.0.s8 %v4870
    %v4872 = vlaneseq
    %v4873 = vshrl.u32 %v4872, 7
    %v4874 = vsub.s32 %v4871, %v4873
    %v4875 = vrot.slane %v4867, %v4874
    %v4877 = vunpack.c.l.s4 1983009808
    %v4878 = vunpack.c.0.s8 %v4877
    %v4879 = vlaneseq
    %v4880 = vshrl.u32 %v4879, 7
    %v4881 = vsub.s32 %v4878, %v4880
    %v4882 = vrot.slane %v4868, %v4881
    %v4883 = vcombine.low %v4875, %v4882
    %v4884 = vcombine.low %v3631, %v4040
    %v4885 = vcombine.low %v4449, %v4858
    %v4887 = vunpack.c.l.s4 1983009808
    %v4888 = vunpack.c.0.s8 %v4887
    %v4889 = vlaneseq
    %v4890 = vshrl.u32 %v4889, 7
    %v4891 = vsub.s32 %v4888, %v4890
    %v4892 = vrot.slane %v4884, %v4891
    %v4894 = vunpack.c.l.s4 1983009808
    %v4895 = vunpack.c.0.s8 %v4894
    %v4896 = vlaneseq
    %v4897 = vshrl.u32 %v4896, 7
    %v4898 = vsub.s32 %v4895, %v4897
    %v4899 = vrot.slane %v4885, %v4898
    %v4900 = vcombine.low %v4892, %v4899
    %4903 = vst [vmem:[%s9] sm:$0xff] %v4883
    %4904 = vst [vmem:[%s9 + $0x8] sm:$0xff] %v4900
    // Predicated region
    $region42: #{seq2seq_forward.1} parent=1 // pred_check
      _
    $region43: #{seq2seq_forward.1} parent=1 // pred_check_branch
      %4906 = sbr.rel (0) target = $region45
    $region44: #{seq2seq_forward.1} parent=1 // pred_region
      _
    $region45: #{seq2seq_forward.1} parent=1 // pred_fallthru
      _
    // Predicated region
    $region46: #{seq2seq_forward.1} parent=1 // pred_check
      _
    $region47: #{seq2seq_forward.1} parent=1 // pred_check_branch
      %4908 = sbr.rel (0) target = $region49
    $region48: #{seq2seq_forward.1} parent=1 // pred_region
      _
    $region49: #{seq2seq_forward.1} parent=1 // pred_fallthru
      _
    %4909 = vsyncpa [#allocation3], 1

</llo_original>
